<compile_context>
chip_gen: v7x
topology: tpu7x:2x2x1
jax: 0.10.0
libtpu: 0.0.40
codegen_flags: <defaults>
</compile_context>

<pallas_src>
import functools
import numpy as np
import jax
import jax.numpy as jnp
from jax.experimental import pallas as pl
from jax.experimental.pallas import tpu as pltpu

CONFIG = dict(num_mods=6, num_preds=30, cls_th=2.0, cls_ignore=0.2,
              mgn=0.2, cls_coef=1.0, reg_coef=1.0)

_LANES = 128
_MAX_BLOCK_ROWS = 2048   # 2048x128xf32 = 1 MiB/buffer; x2 inputs x2 (dbl buf) = 4 MiB


def _softplus(x):
    # PyTorch BCEWithLogits stable form: max(x,0) + log1p(exp(-|x|))
    return jnp.maximum(x, 0.0) + jnp.log1p(jnp.exp(-jnp.abs(x)))


# ----------------------------------------------------------------------------
# Fused kernel: all 12 loss reduction sums in one pass.
#   grid axis 0 streams the lane-dense mu/var slabs (KL term); everything else
#   is resident and computed once at step 0.
# ----------------------------------------------------------------------------
def _fused_loss_kernel(mu_ref, var_ref, small_ref, mode_ref, regf_ref,
                       out_ref, kl_acc_ref, *,
                       t2, hdim, nmods, tail_rows,
                       cls_th, cls_ignore, mgn_cfg, cls_coef):
    f32 = jnp.float32
    step = pl.program_id(0)
    block_rows = mu_ref.shape[0]

    # ------------------- step 0: init + all "small" terms -------------------
    @pl.when(step == 0)
    def _():
        kl_acc_ref[...] = jnp.zeros_like(kl_acc_ref)

        # packed per-row tensor: tg | gtf | hasf | lg | cls | labels
        small = small_ref[...].astype(f32)
        o = 0
        tg = small[:, o:o + t2]; o += t2            # [B, T2] gt trajectory
        gtf = small[:, o:o + t2]; o += t2           # [B, T2] PredLoss gt
        hasf = small[:, o:o + t2]; o += t2          # [B, T2] per-(t,coord) mask
        lg = small[:, o:o + hdim]; o += hdim        # [B, H]  gt hidden layer
        cls = small[:, o:o + nmods]; o += nmods     # [B, M]  mode scores
        lab = small[:, o:o + 3]                     # [B, 3]  (gt, pred, sample) logits

        # packed per-mode tensor: traj_pred | layer_pred
        md = mode_ref[...].astype(f32)              # [B, 6, T2+H]
        tp = md[:, :, 0:t2]                         # [B, 6, T2]
        lp = md[:, :, t2:t2 + hdim]                 # [B, 6, H]

        # reconstruction: gt broadcast over the 6 modes
        recon = 0.5 * jnp.sum((tg[:, None, :] - tp) ** 2)
        # MAE on hidden layer
        mae = jnp.sum(jnp.abs(lg[:, None, :] - lp))

        # 5x BCE-with-logits (static lane slices of the packed labels)
        l_gt = lab[:, 0:1]
        l_pr = lab[:, 1:2]
        l_sm = lab[:, 2:3]
        bce_dis_gt = jnp.sum(_softplus(-l_gt))       # target 1
        bce_dis_pred = jnp.sum(_softplus(l_pr))      # target 0
        bce_dis_sample = jnp.sum(_softplus(l_sm))    # target 0
        bce_gen_pred = jnp.sum(_softplus(-l_pr))     # target 1
        bce_gen_sample = jnp.sum(_softplus(-l_sm))   # target 1

        # ------------- PredLoss: mode argmin, margin cls, SmoothL1 ----------
        regf = regf_ref[...].astype(f32)             # [B, M, T*2] interleaved (x,y)

        # endpoint (t=29) via static lane slices (lanes 58:60)
        r29 = regf[:, :, 58:60]                      # [B, M, 2]
        g29 = gtf[:, None, 58:60]                    # [B, 1, 2]
        d29 = r29 - g29
        dist = jnp.sqrt(jnp.sum(d29 * d29, axis=2))  # [B, M]

        min_dist = jnp.min(dist, axis=1, keepdims=True)         # [B, 1]
        miota = jax.lax.broadcasted_iota(jnp.int32, dist.shape, 1)
        cand = jnp.where(dist == min_dist, miota, nmods)
        min_idcs = jnp.min(cand, axis=1, keepdims=True)          # first argmin
        onehot = (miota == min_idcs).astype(f32)                 # [B, M]

        cls_min = jnp.sum(cls * onehot, axis=1, keepdims=True)
        mgn = cls_min - cls
        mask0 = min_dist < cls_th
        mask1 = (dist - min_dist) > cls_ignore
        inner = jnp.logical_and(jnp.logical_and(mask0, mask1), mgn < mgn_cfg)
        num_cls = jnp.sum(inner.astype(f32))
        cls_loss = cls_coef * (mgn_cfg * num_cls - jnp.sum(jnp.where(inner, mgn, 0.0)))

        # SmoothL1 on the min-distance mode (one-hot gather over modes)
        reg_sel = jnp.sum(regf * onehot[:, :, None], axis=1)     # [B, T*2]
        d = reg_sel - gtf
        ad = jnp.abs(d)
        sl1 = jnp.where(ad < 1.0, 0.5 * d * d, ad - 0.5)

        out_ref[0] = recon
        out_ref[2] = mae
        out_ref[3] = bce_dis_gt
        out_ref[4] = bce_dis_pred
        out_ref[5] = bce_dis_sample
        out_ref[6] = bce_gen_pred
        out_ref[7] = bce_gen_sample
        out_ref[8] = cls_loss
        out_ref[9] = num_cls
        out_ref[10] = jnp.sum(sl1 * hasf)
        out_ref[11] = jnp.sum(hasf)                  # = 2 * num_reg

    # -------- every step: KL partial on this [block_rows, 128] slab ---------
    mu = mu_ref[...].astype(f32)
    va = var_ref[...].astype(f32)

    if tail_rows != block_rows:   # static: only emitted when the last tile is ragged
        is_last = step == pl.num_programs(0) - 1
        limit = jnp.where(is_last, tail_rows, block_rows)
        rowi = jax.lax.broadcasted_iota(jnp.int32, mu.shape, 0)
        valid = rowi < limit
        mu = jnp.where(valid, mu, 0.0)               # KL(0,0) == 0, so exact
        va = jnp.where(valid, va, 0.0)

    kl_elem = 0.5 * (jnp.exp(va) + mu * mu - va - 1.0)

    if block_rows % 8 == 0:
        # tile-aligned regroup -> pure VALU vreg adds, no per-step XLU reduce
        kl_acc_ref[...] += kl_elem.reshape(block_rows // 8, 8, _LANES).sum(axis=0)
    else:
        # single-step odd-row case: one-off sublane reduce is fine
        kl_acc_ref[0:1, :] += jnp.sum(kl_elem, axis=0, keepdims=True)

    @pl.when(step == pl.num_programs(0) - 1)
    def _():
        out_ref[1] = jnp.sum(kl_acc_ref[...])


# ----------------------------------------------------------------------------
# pallas_call wrapper
# ----------------------------------------------------------------------------
def _resident_spec(shape):
    nd = len(shape)
    return pl.BlockSpec(tuple(shape), lambda i, _nd=nd: (0,) * _nd)


def _make_slab(x):
    """Lane-dense [rows, 128] view of x without a full padded staging copy.

    When x.size % 128 == 0 (usual case: 6*latent_dim is a multiple of 128)
    this is a pure reshape.  Otherwise only the <128-element lane remainder
    is padded (rare fallback)."""
    flat = x.reshape(-1)
    rem = flat.size % _LANES
    if rem:
        flat = jnp.pad(flat, (0, _LANES - rem))
    rows = flat.size // _LANES
    return flat.reshape(rows, _LANES), rows


def _choose_block_rows(rows):
    if rows >= _MAX_BLOCK_ROWS:
        return _MAX_BLOCK_ROWS        # multiple of 16 (bf16-pack friendly)
    return rows                       # single step: block equals full extent


@jax.jit
def _loss_core(traj_gt, traj_pred, layer_gt, layer_pred, labels,
               mus, variances, cls, reg, gt, has):
    B, T = traj_gt.shape[0], traj_gt.shape[1]
    T2 = 2 * T
    H = layer_gt.shape[1]
    Nl, Dl = mus.shape[1], mus.shape[3]
    M = cls.shape[1]
    f32 = jnp.float32

    # glue reshapes + packing of the tiny resident tensors (few KiB total)
    tg = traj_gt.reshape(B, T2).astype(f32)
    tp = traj_pred.reshape(B, 6, T2).astype(f32)
    lp = layer_pred.reshape(B, 6, H).astype(f32)
    gtf = gt.reshape(B, T2).astype(f32)
    hasf = jnp.repeat(has.astype(f32), 2, axis=1)          # [B, T*2] (t, coord) mask
    regf = reg.reshape(B, M, T2).astype(f32)

    small = jnp.concatenate(
        [tg, gtf, hasf, layer_gt.astype(f32), cls.astype(f32), labels.astype(f32)],
        axis=1)                                            # [B, 3*T2 + H + M + 3]
    mode = jnp.concatenate([tp, lp], axis=2)               # [B, 6, T2 + H]

    # streamed slabs stay in the producer dtype (bf16 halves HBM bytes; the
    # kernel upcasts on load and accumulates in f32)
    mu_slab, rows = _make_slab(mus)
    var_slab, _ = _make_slab(variances)
    block_rows = _choose_block_rows(rows)
    grid_n = -(-rows // block_rows)
    tail_rows = rows - (grid_n - 1) * block_rows

    kernel = functools.partial(
        _fused_loss_kernel,
        t2=T2, hdim=H, nmods=M, tail_rows=tail_rows,
        cls_th=float(CONFIG['cls_th']), cls_ignore=float(CONFIG['cls_ignore']),
        mgn_cfg=float(CONFIG['mgn']), cls_coef=float(CONFIG['cls_coef']))

    slab_spec = pl.BlockSpec((block_rows, _LANES), lambda i: (i, 0))
    in_specs = [slab_spec, slab_spec,
                _resident_spec(small.shape),
                _resident_spec(mode.shape),
                _resident_spec(regf.shape)]

    # derived VMEM budget: double-buffered slabs + f32 upcast temporaries
    # + resident tiles + headroom (portable to v7x's 64 MiB VMEM)
    slab_itemsize = jnp.dtype(mus.dtype).itemsize
    slab_bytes = 2 * 2 * block_rows * _LANES * slab_itemsize
    upcast_bytes = 2 * block_rows * _LANES * 4
    resident_bytes = 2 * 4 * (small.size + mode.size + regf.size)
    vmem_limit = int(slab_bytes + upcast_bytes + resident_bytes + (2 << 20))
    vmem_limit = min(max(vmem_limit, 8 << 20), 64 << 20)

    # TODO(synk): on v7x the slab axis could be sharded across the 2 TensorCores
    # (per-core KL partials + wrapper combine); kept "arbitrary" (single TC) here.
    sums = pl.pallas_call(
        kernel,
        out_shape=jax.ShapeDtypeStruct((12,), jnp.float32),
        grid=(grid_n,),
        in_specs=in_specs,
        out_specs=pl.BlockSpec(memory_space=pltpu.MemorySpace.SMEM),
        scratch_shapes=[pltpu.VMEM((8, _LANES), jnp.float32)],
        compiler_params=pltpu.CompilerParams(
            dimension_semantics=("arbitrary",),
            vmem_limit_bytes=vmem_limit),
    )(mu_slab, var_slab, small, mode, regf)

    reconstruction_loss = sums[0] / (6 * B * T2)
    kl_loss = sums[1] / (6 * B * Nl * Dl)
    mae_hidden_loss = sums[2] / (6 * B * H)
    bce_dis_gt = sums[3] / B
    bce_dis_pred = sums[4] / B
    bce_dis_sample = sums[5] / B
    bce_gen_pred = sums[6] / B
    bce_gen_sample = sums[7] / B

    cls_loss = sums[8]
    num_cls = sums[9]
    sl1_sum = sums[10]
    has_sum2 = sums[11]                         # = 2 * num_reg
    num_reg = has_sum2 * 0.5
    reg_loss = CONFIG['reg_coef'] * sl1_sum / has_sum2   # mean SmoothL1 over selected elems
    loss = cls_loss / (num_cls + 1e-10) + reg_loss / (num_reg + 1e-10)

    return {
        'cls_loss': cls_loss, 'num_cls': num_cls,
        'reg_loss': reg_loss, 'num_reg': num_reg,
        'loss': loss,
        'reconstruction_loss': reconstruction_loss,
        'kl_loss': kl_loss,
        'mae_hidden_loss': mae_hidden_loss,
        'bce_gen_sample': bce_gen_sample,
        'bce_gen_pred': bce_gen_pred,
        'bce_dis_sample': bce_dis_sample,
        'bce_dis_pred': bce_dis_pred,
        'bce_dis_gt': bce_dis_gt,
    }


# ----------------------------------------------------------------------------
# Loss.forward equivalent
# ----------------------------------------------------------------------------
def loss_forward(traj_gt, traj_pred, layer_gt, layer_pred, label_gt, label_pred,
                 label_sample, mus, variances, data, output, config=CONFIG):
    traj_gt = jnp.concatenate(traj_gt, axis=0)        # [B, T, 2]
    traj_pred = jnp.concatenate(traj_pred, axis=0)    # [B, 6, T, 2]
    layer_gt = jnp.concatenate(layer_gt, axis=0)      # [B, H]
    layer_pred = jnp.concatenate(layer_pred, axis=0)  # [6B, H]
    label_gt = jnp.concatenate(label_gt, axis=0)      # [B, 1]
    label_pred = jnp.concatenate(label_pred, axis=0)
    label_sample = jnp.concatenate(label_sample, axis=0)
    mus = jnp.concatenate(mus, axis=0)                # [B, Nl, 6, D]
    variances = jnp.concatenate(variances, axis=0)
    labels = jnp.concatenate([label_gt, label_pred, label_sample], axis=1)  # [B, 3]

    # ----------------- PredLoss inputs -----------------
    gt_preds = [data['gt_preds'][i][0][1:2, :, :] for i in range(len(data['gt_preds']))]
    has_preds = [data['has_preds'][i][0][1:2, :] for i in range(len(data['has_preds']))]
    cls_list, reg_list = output[0]['cls'], output[0]['reg']
    cls = jnp.concatenate([cls_list[i][1:2, :] for i in range(len(cls_list))], 0)  # [B, M]
    reg = jnp.concatenate(list(reg_list), 0)                                       # [B, M, T, 2]
    gt = jnp.concatenate(gt_preds, 0)                                              # [B, T, 2]
    has = jnp.concatenate(has_preds, 0)                                            # [B, T]

    # NOTE: the reference PredLoss indexes with arange(batch_num) *after* the
    # `max_last > 1.0` row mask, so it is only well-defined when every row
    # survives; inputs here are built to satisfy that.
    # TODO(synk): dynamic-shape boolean row filtering has no clean Pallas equivalent.

    return _loss_core(traj_gt, traj_pred, layer_gt, layer_pred, labels,
                      mus, variances, cls, reg, gt, has)


# ----------------------------------------------------------------------------
# Pure-JAX reference (for the correctness check in __main__)
# ----------------------------------------------------------------------------
def _reference(traj_gt, traj_pred, layer_gt, layer_pred, label_gt, label_pred,
               label_sample, mus, variances, data, output, config=CONFIG):
    B = len(traj_gt)
    tg = jnp.concatenate(traj_gt, 0); tp = jnp.concatenate(traj_pred, 0)
    lg = jnp.concatenate(layer_gt, 0); lp = jnp.concatenate(layer_pred, 0)
    lbg = jnp.concatenate(label_gt, 0); lbp = jnp.concatenate(label_pred, 0)
    lbs = jnp.concatenate(label_sample, 0)
    mu = jnp.concatenate(mus, 0); var = jnp.concatenate(variances, 0)
    T, H = tg.shape[1], lg.shape[1]
    Nl, Dl = mu.shape[1], mu.shape[3]

    recon = 0.5 * jnp.sum((tg[:, None] - tp) ** 2) / (6 * B * T * 2)
    kl = jnp.sum(-0.5 * (-jnp.exp(var) - mu ** 2 + var + 1)) / (6 * B * Nl * Dl)
    mae = jnp.sum(jnp.abs(lg[:, None, :] - lp.reshape(B, 6, H))) / (6 * B * H)
    sp = lambda x: jnp.maximum(x, 0.0) + jnp.log1p(jnp.exp(-jnp.abs(x)))
    bce_dis_gt = jnp.mean(sp(-lbg)); bce_dis_pred = jnp.mean(sp(lbp))
    bce_dis_sample = jnp.mean(sp(lbs)); bce_gen_pred = jnp.mean(sp(-lbp))
    bce_gen_sample = jnp.mean(sp(-lbs))

    cls = jnp.concatenate([output[0]['cls'][i][1:2] for i in range(B)], 0)
    reg = jnp.concatenate(list(output[0]['reg']), 0)
    gt = jnp.concatenate([data['gt_preds'][i][0][1:2] for i in range(B)], 0)
    has = jnp.concatenate([data['has_preds'][i][0][1:2] for i in range(B)], 0)

    d = reg[:, :, 29, :] - gt[:, None, 29, :]
    dist = jnp.sqrt((d ** 2).sum(-1))
    min_idcs = jnp.argmin(dist, axis=1)
    row = jnp.arange(B)
    min_dist = dist[row, min_idcs]
    mgn = cls[row, min_idcs][:, None] - cls
    sel = (min_dist < config['cls_th'])[:, None] & (dist - min_dist[:, None] > config['cls_ignore'])
    m = sel & (mgn < config['mgn'])
    cls_loss = config['cls_coef'] * (config['mgn'] * m.sum() - jnp.where(m, mgn, 0.0).sum())
    num_cls = m.sum()
    reg_sel = reg[row, min_idcs]
    dd = reg_sel - gt; ad = jnp.abs(dd)
    sl1 = jnp.where(ad < 1.0, 0.5 * dd * dd, ad - 0.5)
    hasb = has.astype(bool)
    num_reg = hasb.sum()
    reg_loss = config['reg_coef'] * (sl1 * hasb[:, :, None]).sum() / (num_reg * 2)
    loss = cls_loss / (num_cls + 1e-10) + reg_loss / (num_reg + 1e-10)
    return dict(cls_loss=cls_loss, num_cls=num_cls, reg_loss=reg_loss,
                num_reg=num_reg, loss=loss, reconstruction_loss=recon,
                kl_loss=kl, mae_hidden_loss=mae, bce_gen_sample=bce_gen_sample,
                bce_gen_pred=bce_gen_pred, bce_dis_sample=bce_dis_sample,
                bce_dis_pred=bce_dis_pred, bce_dis_gt=bce_dis_gt)


if __name__ == "__main__":
    key = jax.random.PRNGKey(0)
    # Nl chosen so the mu/var slab needs >1 grid step with a ragged last tile
    # (exercises the streamed-KL accumulation + in-kernel tail masking).
    B, T, H, Nl, Dl, M = 2, 30, 32, 400, 64, 6
    ks = jax.random.split(key, 13)

    traj_gt_full = jax.random.normal(ks[0], (B, T, 2), jnp.float32)
    traj_pred_full = jax.random.normal(ks[1], (B, M, T, 2), jnp.float32)
    layer_gt_full = jax.random.normal(ks[2], (B, H), jnp.float32)
    layer_pred_full = jax.random.normal(ks[3], (B * M, H), jnp.float32)
    label_gt_full = jax.random.normal(ks[4], (B, 1), jnp.float32)
    label_pred_full = jax.random.normal(ks[5], (B, 1), jnp.float32)
    label_sample_full = jax.random.normal(ks[6], (B, 1), jnp.float32)
    mus_full = 0.5 * jax.random.normal(ks[7], (B, Nl, M, Dl), jnp.float32)
    var_full = 0.5 * jax.random.normal(ks[8], (B, Nl, M, Dl), jnp.float32)

    traj_gt = [traj_gt_full[i:i + 1] for i in range(B)]
    traj_pred = [traj_pred_full[i:i + 1] for i in range(B)]
    layer_gt = [layer_gt_full[i:i + 1] for i in range(B)]
    layer_pred = [layer_pred_full[i * M:(i + 1) * M] for i in range(B)]
    label_gt = [label_gt_full[i:i + 1] for i in range(B)]
    label_pred = [label_pred_full[i:i + 1] for i in range(B)]
    label_sample = [label_sample_full[i:i + 1] for i in range(B)]
    mus = [mus_full[i:i + 1] for i in range(B)]
    variances = [var_full[i:i + 1] for i in range(B)]

    gt_preds_full = jax.random.normal(ks[9], (B, 2, T, 2), jnp.float32)
    has_preds_full = jax.random.bernoulli(ks[12], 0.75, (B, 2, T)).at[:, :, 29].set(True)
    data = {'gt_preds': [[gt_preds_full[i]] for i in range(B)],
            'has_preds': [[has_preds_full[i]] for i in range(B)]}
    cls_full = jax.random.normal(ks[10], (B, 2, M), jnp.float32)
    reg_full = 2.0 * jax.random.normal(ks[11], (B, 1, M, T, 2), jnp.float32)
    output = [{'cls': [cls_full[i] for i in range(B)],
               'reg': [reg_full[i] for i in range(B)]}]

    out = loss_forward(traj_gt, traj_pred, layer_gt, layer_pred, label_gt,
                       label_pred, label_sample, mus, variances, data, output)
    out = jax.tree_util.tree_map(jax.block_until_ready, out)

    ref = _reference(traj_gt, traj_pred, layer_gt, layer_pred, label_gt,
                     label_pred, label_sample, mus, variances, data, output)
    for k in ref:
        np.testing.assert_allclose(np.asarray(out[k], dtype=np.float64),
                                   np.asarray(ref[k], dtype=np.float64),
                                   rtol=2e-4, atol=2e-4)
    print("KERNEL_OK")
</pallas_src>

<mosaic_0001>
module attributes {stable_mosaic.version = 11 : i64} {
  func.func @_fused_loss_kernel(%arg0: i32, %arg1: memref<2048x128xf32, #tpu.memory_space<vmem>>, %arg2: memref<2048x128xf32, #tpu.memory_space<vmem>>, %arg3: memref<2x221xf32, #tpu.memory_space<vmem>>, %arg4: memref<2x6x92xf32, #tpu.memory_space<vmem>>, %arg5: memref<2x6x60xf32, #tpu.memory_space<vmem>>, %arg6: memref<12xf32, #tpu.memory_space<smem>>, %arg7: memref<8x128xf32, #tpu.memory_space<vmem>>) attributes {dimension_semantics = [#tpu.dimension_semantics<arbitrary>], iteration_bounds = array<i64: 2>, scalar_prefetch = 0 : i64, scratch_operands = 1 : i64, tpu.core_type = #tpu.core_type<tc>, window_params = [{transform_indices = @transform_0, window_bounds = array<i64: 2048, 128>}, {transform_indices = @transform_1, window_bounds = array<i64: 2048, 128>}, {pipeline_mode = #tpu.pipeline_mode<synchronous>, transform_indices = @transform_2, window_bounds = array<i64: 2, 221>}, {pipeline_mode = #tpu.pipeline_mode<synchronous>, transform_indices = @transform_3, window_bounds = array<i64: 2, 6, 92>}, {pipeline_mode = #tpu.pipeline_mode<synchronous>, transform_indices = @transform_4, window_bounds = array<i64: 2, 6, 60>}, {transform_indices = @transform_5, window_bounds = array<i64: 12>}]} {
    %c0_i32 = arith.constant 0 : i32
    %0 = arith.cmpi eq, %arg0, %c0_i32 : i32
    %1 = arith.extui %0 : i1 to i32
    %c0_i32_0 = arith.constant 0 : i32
    %2 = arith.cmpi ne, %1, %c0_i32_0 : i32
    scf.if %2 {
      %cst_14 = arith.constant 0.000000e+00 : f32
      %30 = vector.broadcast %cst_14 : f32 to vector<8x128xf32>
      %c0_15 = arith.constant 0 : index
      %c0_16 = arith.constant 0 : index
      %31 = vector.load %arg7[%c0_15, %c0_16] : memref<8x128xf32, #tpu.memory_space<vmem>>, vector<8x128xf32>
      tpu.vector_store %arg7[%c0_15, %c0_16], %30 {strides = array<i32>} : memref<8x128xf32, #tpu.memory_space<vmem>>, vector<8x128xf32>,
      %c0_17 = arith.constant 0 : index
      %c0_18 = arith.constant 0 : index
      %32 = vector.load %arg3[%c0_17, %c0_18] : memref<2x221xf32, #tpu.memory_space<vmem>>, vector<2x221xf32>
      %33 = vector.extract_strided_slice %32 {offsets = [0, 0], sizes = [2, 60], strides = [1, 1]} : vector<2x221xf32> to vector<2x60xf32>
      %34 = vector.extract_strided_slice %32 {offsets = [0, 60], sizes = [2, 60], strides = [1, 1]} : vector<2x221xf32> to vector<2x60xf32>
      %35 = vector.extract_strided_slice %32 {offsets = [0, 120], sizes = [2, 60], strides = [1, 1]} : vector<2x221xf32> to vector<2x60xf32>
      %36 = vector.extract_strided_slice %32 {offsets = [0, 180], sizes = [2, 32], strides = [1, 1]} : vector<2x221xf32> to vector<2x32xf32>
      %37 = vector.extract_strided_slice %32 {offsets = [0, 212], sizes = [2, 6], strides = [1, 1]} : vector<2x221xf32> to vector<2x6xf32>
      %38 = vector.extract_strided_slice %32 {offsets = [0, 218], sizes = [2, 3], strides = [1, 1]} : vector<2x221xf32> to vector<2x3xf32>
      %c0_19 = arith.constant 0 : index
      %c0_20 = arith.constant 0 : index
      %c0_21 = arith.constant 0 : index
      %39 = vector.load %arg4[%c0_19, %c0_20, %c0_21] : memref<2x6x92xf32, #tpu.memory_space<vmem>>, vector<2x6x92xf32>
      %40 = vector.extract_strided_slice %39 {offsets = [0, 0, 0], sizes = [2, 6, 60], strides = [1, 1, 1]} : vector<2x6x92xf32> to vector<2x6x60xf32>
      %41 = vector.extract_strided_slice %39 {offsets = [0, 0, 60], sizes = [2, 6, 32], strides = [1, 1, 1]} : vector<2x6x92xf32> to vector<2x6x32xf32>
      %42 = vector.shape_cast %33 : vector<2x60xf32> to vector<2x1x60xf32>
      %43 = vector.broadcast %42 : vector<2x1x60xf32> to vector<2x6x60xf32>
      %44 = arith.subf %43, %40 : vector<2x6x60xf32>
      %45 = arith.mulf %44, %44 : vector<2x6x60xf32>
      %46 = vector.shape_cast %45 : vector<2x6x60xf32> to vector<1x2x6x60xf32>
      %cst_22 = arith.constant dense<0.000000e+00> : vector<1xf32>
      %47 = vector.multi_reduction <add>, %46, %cst_22 [1, 2, 3] : vector<1x2x6x60xf32> to vector<1xf32>
      %48 = vector.shape_cast %47 : vector<1xf32> to vector<1x1x1x1xf32>
      %49 = vector.extract %48[0, 0, 0, 0] : f32 from vector<1x1x1x1xf32>
      %cst_23 = arith.constant 5.000000e-01 : f32
      %50 = arith.mulf %cst_23, %49 : f32
      %51 = vector.shape_cast %36 : vector<2x32xf32> to vector<2x1x32xf32>
      %52 = vector.broadcast %51 : vector<2x1x32xf32> to vector<2x6x32xf32>
      %53 = arith.subf %52, %41 : vector<2x6x32xf32>
      %54 = math.absf %53 : vector<2x6x32xf32>
      %55 = vector.shape_cast %54 : vector<2x6x32xf32> to vector<1x2x6x32xf32>
      %cst_24 = arith.constant dense<0.000000e+00> : vector<1xf32>
      %56 = vector.multi_reduction <add>, %55, %cst_24 [1, 2, 3] : vector<1x2x6x32xf32> to vector<1xf32>
      %57 = vector.shape_cast %56 : vector<1xf32> to vector<1x1x1x1xf32>
      %58 = vector.extract %57[0, 0, 0, 0] : f32 from vector<1x1x1x1xf32>
      %59 = vector.extract_strided_slice %38 {offsets = [0, 0], sizes = [2, 1], strides = [1, 1]} : vector<2x3xf32> to vector<2x1xf32>
      %60 = vector.extract_strided_slice %38 {offsets = [0, 1], sizes = [2, 1], strides = [1, 1]} : vector<2x3xf32> to vector<2x1xf32>
      %61 = vector.extract_strided_slice %38 {offsets = [0, 2], sizes = [2, 1], strides = [1, 1]} : vector<2x3xf32> to vector<2x1xf32>
      %cst_25 = arith.constant 0.000000e+00 : f32
      %62 = vector.broadcast %cst_25 : f32 to vector<2x1xf32>
      %63 = arith.subf %62, %59 : vector<2x1xf32>
      %cst_26 = arith.constant 0.000000e+00 : f32
      %64 = vector.broadcast %cst_26 : f32 to vector<2x1xf32>
      %65 = arith.maximumf %63, %64 : vector<2x1xf32>
      %66 = math.absf %63 : vector<2x1xf32>
      %cst_27 = arith.constant 0.000000e+00 : f32
      %67 = vector.broadcast %cst_27 : f32 to vector<2x1xf32>
      %68 = arith.subf %67, %66 : vector<2x1xf32>
      %69 = math.exp %68 : vector<2x1xf32>
      %70 = math.log1p %69 : vector<2x1xf32>
      %71 = arith.addf %65, %70 : vector<2x1xf32>
      %72 = vector.shape_cast %71 : vector<2x1xf32> to vector<1x2x1xf32>
      %cst_28 = arith.constant dense<0.000000e+00> : vector<1xf32>
      %73 = vector.multi_reduction <add>, %72, %cst_28 [1, 2] : vector<1x2x1xf32> to vector<1xf32>
      %74 = vector.shape_cast %73 : vector<1xf32> to vector<1x1x1xf32>
      %75 = vector.extract %74[0, 0, 0] : f32 from vector<1x1x1xf32>
      %cst_29 = arith.constant 0.000000e+00 : f32
      %76 = vector.broadcast %cst_29 : f32 to vector<2x1xf32>
      %77 = arith.maximumf %60, %76 : vector<2x1xf32>
      %78 = math.absf %60 : vector<2x1xf32>
      %cst_30 = arith.constant 0.000000e+00 : f32
      %79 = vector.broadcast %cst_30 : f32 to vector<2x1xf32>
      %80 = arith.subf %79, %78 : vector<2x1xf32>
      %81 = math.exp %80 : vector<2x1xf32>
      %82 = math.log1p %81 : vector<2x1xf32>
      %83 = arith.addf %77, %82 : vector<2x1xf32>
      %84 = vector.shape_cast %83 : vector<2x1xf32> to vector<1x2x1xf32>
      %cst_31 = arith.constant dense<0.000000e+00> : vector<1xf32>
      %85 = vector.multi_reduction <add>, %84, %cst_31 [1, 2] : vector<1x2x1xf32> to vector<1xf32>
      %86 = vector.shape_cast %85 : vector<1xf32> to vector<1x1x1xf32>
      %87 = vector.extract %86[0, 0, 0] : f32 from vector<1x1x1xf32>
      %cst_32 = arith.constant 0.000000e+00 : f32
      %88 = vector.broadcast %cst_32 : f32 to vector<2x1xf32>
      %89 = arith.maximumf %61, %88 : vector<2x1xf32>
      %90 = math.absf %61 : vector<2x1xf32>
      %cst_33 = arith.constant 0.000000e+00 : f32
      %91 = vector.broadcast %cst_33 : f32 to vector<2x1xf32>
      %92 = arith.subf %91, %90 : vector<2x1xf32>
      %93 = math.exp %92 : vector<2x1xf32>
      %94 = math.log1p %93 : vector<2x1xf32>
      %95 = arith.addf %89, %94 : vector<2x1xf32>
      %96 = vector.shape_cast %95 : vector<2x1xf32> to vector<1x2x1xf32>
      %cst_34 = arith.constant dense<0.000000e+00> : vector<1xf32>
      %97 = vector.multi_reduction <add>, %96, %cst_34 [1, 2] : vector<1x2x1xf32> to vector<1xf32>
      %98 = vector.shape_cast %97 : vector<1xf32> to vector<1x1x1xf32>
      %99 = vector.extract %98[0, 0, 0] : f32 from vector<1x1x1xf32>
      %cst_35 = arith.constant 0.000000e+00 : f32
      %100 = vector.broadcast %cst_35 : f32 to vector<2x1xf32>
      %101 = arith.subf %100, %60 : vector<2x1xf32>
      %cst_36 = arith.constant 0.000000e+00 : f32
      %102 = vector.broadcast %cst_36 : f32 to vector<2x1xf32>
      %103 = arith.maximumf %101, %102 : vector<2x1xf32>
      %104 = math.absf %101 : vector<2x1xf32>
      %cst_37 = arith.constant 0.000000e+00 : f32
      %105 = vector.broadcast %cst_37 : f32 to vector<2x1xf32>
      %106 = arith.subf %105, %104 : vector<2x1xf32>
      %107 = math.exp %106 : vector<2x1xf32>
      %108 = math.log1p %107 : vector<2x1xf32>
      %109 = arith.addf %103, %108 : vector<2x1xf32>
      %110 = vector.shape_cast %109 : vector<2x1xf32> to vector<1x2x1xf32>
      %cst_38 = arith.constant dense<0.000000e+00> : vector<1xf32>
      %111 = vector.multi_reduction <add>, %110, %cst_38 [1, 2] : vector<1x2x1xf32> to vector<1xf32>
      %112 = vector.shape_cast %111 : vector<1xf32> to vector<1x1x1xf32>
      %113 = vector.extract %112[0, 0, 0] : f32 from vector<1x1x1xf32>
      %cst_39 = arith.constant 0.000000e+00 : f32
      %114 = vector.broadcast %cst_39 : f32 to vector<2x1xf32>
      %115 = arith.subf %114, %61 : vector<2x1xf32>
      %cst_40 = arith.constant 0.000000e+00 : f32
      %116 = vector.broadcast %cst_40 : f32 to vector<2x1xf32>
      %117 = arith.maximumf %115, %116 : vector<2x1xf32>
      %118 = math.absf %115 : vector<2x1xf32>
      %cst_41 = arith.constant 0.000000e+00 : f32
      %119 = vector.broadcast %cst_41 : f32 to vector<2x1xf32>
      %120 = arith.subf %119, %118 : vector<2x1xf32>
      %121 = math.exp %120 : vector<2x1xf32>
      %122 = math.log1p %121 : vector<2x1xf32>
      %123 = arith.addf %117, %122 : vector<2x1xf32>
      %124 = vector.shape_cast %123 : vector<2x1xf32> to vector<1x2x1xf32>
      %cst_42 = arith.constant dense<0.000000e+00> : vector<1xf32>
      %125 = vector.multi_reduction <add>, %124, %cst_42 [1, 2] : vector<1x2x1xf32> to vector<1xf32>
      %126 = vector.shape_cast %125 : vector<1xf32> to vector<1x1x1xf32>
      %127 = vector.extract %126[0, 0, 0] : f32 from vector<1x1x1xf32>
      %c0_43 = arith.constant 0 : index
      %c0_44 = arith.constant 0 : index
      %c0_45 = arith.constant 0 : index
      %128 = vector.load %arg5[%c0_43, %c0_44, %c0_45] : memref<2x6x60xf32, #tpu.memory_space<vmem>>, vector<2x6x60xf32>
      %129 = vector.extract_strided_slice %128 {offsets = [0, 0, 58], sizes = [2, 6, 2], strides = [1, 1, 1]} : vector<2x6x60xf32> to vector<2x6x2xf32>
      %130 = vector.extract_strided_slice %34 {offsets = [0, 58], sizes = [2, 2], strides = [1, 1]} : vector<2x60xf32> to vector<2x2xf32>
      %131 = vector.shape_cast %130 : vector<2x2xf32> to vector<2x1x2xf32>
      %132 = vector.broadcast %131 : vector<2x1x2xf32> to vector<2x6x2xf32>
      %133 = arith.subf %129, %132 : vector<2x6x2xf32>
      %134 = arith.mulf %133, %133 : vector<2x6x2xf32>
      %cst_46 = arith.constant dense<0.000000e+00> : vector<2x6xf32>
      %135 = vector.multi_reduction <add>, %134, %cst_46 [2] : vector<2x6x2xf32> to vector<2x6xf32>
      %136 = math.sqrt %135 : vector<2x6xf32>
      %cst_47 = arith.constant dense<0x7F800000> : vector<2xf32>
      %137 = vector.multi_reduction <minimumf>, %136, %cst_47 [1] : vector<2x6xf32> to vector<2xf32>
      %138 = vector.shape_cast %137 : vector<2xf32> to vector<2x1xf32>
      %139 = tpu.iota {dimensions = array<i32: 1>} : vector<2x6xi32>
      %140 = vector.broadcast %138 : vector<2x1xf32> to vector<2x6xf32>
      %141 = arith.cmpf oeq, %136, %140 : vector<2x6xf32>
      %c6_i32 = arith.constant 6 : i32
      %142 = vector.broadcast %c6_i32 : i32 to vector<2x6xi32>
      %143 = arith.select %141, %139, %142 : vector<2x6xi1>, vector<2x6xi32>
      %cst_48 = arith.constant dense<2147483647> : vector<2xi32>
      %144 = vector.multi_reduction <minsi>, %143, %cst_48 [1] : vector<2x6xi32> to vector<2xi32>
      %145 = vector.shape_cast %144 : vector<2xi32> to vector<2x1xi32>
      %146 = vector.broadcast %145 : vector<2x1xi32> to vector<2x6xi32>
      %147 = arith.cmpi eq, %139, %146 : vector<2x6xi32>
      %148 = arith.extui %147 : vector<2x6xi1> to vector<2x6xi32>
      %149 = arith.sitofp %148 : vector<2x6xi32> to vector<2x6xf32>
      %150 = arith.mulf %37, %149 : vector<2x6xf32>
      %cst_49 = arith.constant dense<0.000000e+00> : vector<2xf32>
      %151 = vector.multi_reduction <add>, %150, %cst_49 [1] : vector<2x6xf32> to vector<2xf32>
      %152 = vector.shape_cast %151 : vector<2xf32> to vector<2x1xf32>
      %153 = vector.broadcast %152 : vector<2x1xf32> to vector<2x6xf32>
      %154 = arith.subf %153, %37 : vector<2x6xf32>
      %cst_50 = arith.constant 2.000000e+00 : f32
      %155 = vector.broadcast %cst_50 : f32 to vector<2x1xf32>
      %156 = arith.cmpf olt, %138, %155 : vector<2x1xf32>
      %157 = vector.broadcast %138 : vector<2x1xf32> to vector<2x6xf32>
      %158 = arith.subf %136, %157 : vector<2x6xf32>
      %cst_51 = arith.constant 2.000000e-01 : f32
      %159 = vector.broadcast %cst_51 : f32 to vector<2x6xf32>
      %160 = arith.cmpf ogt, %158, %159 : vector<2x6xf32>
      %161 = vector.broadcast %156 : vector<2x1xi1> to vector<2x6xi1>
      %162 = arith.andi %161, %160 : vector<2x6xi1>
      %cst_52 = arith.constant 2.000000e-01 : f32
      %163 = vector.broadcast %cst_52 : f32 to vector<2x6xf32>
      %164 = arith.cmpf olt, %154, %163 : vector<2x6xf32>
      %165 = arith.andi %162, %164 : vector<2x6xi1>
      %166 = arith.extui %165 : vector<2x6xi1> to vector<2x6xi32>
      %167 = arith.sitofp %166 : vector<2x6xi32> to vector<2x6xf32>
      %168 = vector.shape_cast %167 : vector<2x6xf32> to vector<1x2x6xf32>
      %cst_53 = arith.constant dense<0.000000e+00> : vector<1xf32>
      %169 = vector.multi_reduction <add>, %168, %cst_53 [1, 2] : vector<1x2x6xf32> to vector<1xf32>
      %170 = vector.shape_cast %169 : vector<1xf32> to vector<1x1x1xf32>
      %171 = vector.extract %170[0, 0, 0] : f32 from vector<1x1x1xf32>
      %cst_54 = arith.constant 2.000000e-01 : f32
      %172 = arith.mulf %cst_54, %171 : f32
      %cst_55 = arith.constant 0.000000e+00 : f32
      %173 = vector.broadcast %cst_55 : f32 to vector<2x6xf32>
      %174 = arith.select %165, %154, %173 : vector<2x6xi1>, vector<2x6xf32>
      %175 = vector.shape_cast %174 : vector<2x6xf32> to vector<1x2x6xf32>
      %cst_56 = arith.constant dense<0.000000e+00> : vector<1xf32>
      %176 = vector.multi_reduction <add>, %175, %cst_56 [1, 2] : vector<1x2x6xf32> to vector<1xf32>
      %177 = vector.shape_cast %176 : vector<1xf32> to vector<1x1x1xf32>
      %178 = vector.extract %177[0, 0, 0] : f32 from vector<1x1x1xf32>
      %179 = arith.subf %172, %178 : f32
      %cst_57 = arith.constant 1.000000e+00 : f32
      %180 = arith.mulf %cst_57, %179 : f32
      %181 = vector.shape_cast %149 : vector<2x6xf32> to vector<2x6x1xf32>
      %182 = vector.broadcast %181 : vector<2x6x1xf32> to vector<2x6x60xf32>
      %183 = arith.mulf %128, %182 : vector<2x6x60xf32>
      %cst_58 = arith.constant dense<0.000000e+00> : vector<2x60xf32>
      %184 = vector.multi_reduction <add>, %183, %cst_58 [1] : vector<2x6x60xf32> to vector<2x60xf32>
      %185 = arith.subf %184, %34 : vector<2x60xf32>
      %186 = math.absf %185 : vector<2x60xf32>
      %cst_59 = arith.constant 1.000000e+00 : f32
      %187 = vector.broadcast %cst_59 : f32 to vector<2x60xf32>
      %188 = arith.cmpf olt, %186, %187 : vector<2x60xf32>
      %cst_60 = arith.constant 5.000000e-01 : f32
      %189 = vector.broadcast %cst_60 : f32 to vector<2x60xf32>
      %190 = arith.mulf %189, %185 : vector<2x60xf32>
      %191 = arith.mulf %190, %185 : vector<2x60xf32>
      %cst_61 = arith.constant 5.000000e-01 : f32
      %192 = vector.broadcast %cst_61 : f32 to vector<2x60xf32>
      %193 = arith.subf %186, %192 : vector<2x60xf32>
      %194 = arith.select %188, %191, %193 : vector<2x60xi1>, vector<2x60xf32>
      %c0_62 = arith.constant 0 : index
      %195 = memref.load %arg6[%c0_62] : memref<12xf32, #tpu.memory_space<smem>>
      memref.store %50, %arg6[%c0_62] : memref<12xf32, #tpu.memory_space<smem>>
      %c2 = arith.constant 2 : index
      %196 = memref.load %arg6[%c2] : memref<12xf32, #tpu.memory_space<smem>>
      memref.store %58, %arg6[%c2] : memref<12xf32, #tpu.memory_space<smem>>
      %c3 = arith.constant 3 : index
      %197 = memref.load %arg6[%c3] : memref<12xf32, #tpu.memory_space<smem>>
      memref.store %75, %arg6[%c3] : memref<12xf32, #tpu.memory_space<smem>>
      %c4 = arith.constant 4 : index
      %198 = memref.load %arg6[%c4] : memref<12xf32, #tpu.memory_space<smem>>
      memref.store %87, %arg6[%c4] : memref<12xf32, #tpu.memory_space<smem>>
      %c5 = arith.constant 5 : index
      %199 = memref.load %arg6[%c5] : memref<12xf32, #tpu.memory_space<smem>>
      memref.store %99, %arg6[%c5] : memref<12xf32, #tpu.memory_space<smem>>
      %c6 = arith.constant 6 : index
      %200 = memref.load %arg6[%c6] : memref<12xf32, #tpu.memory_space<smem>>
      memref.store %113, %arg6[%c6] : memref<12xf32, #tpu.memory_space<smem>>
      %c7 = arith.constant 7 : index
      %201 = memref.load %arg6[%c7] : memref<12xf32, #tpu.memory_space<smem>>
      memref.store %127, %arg6[%c7] : memref<12xf32, #tpu.memory_space<smem>>
      %c8 = arith.constant 8 : index
      %202 = memref.load %arg6[%c8] : memref<12xf32, #tpu.memory_space<smem>>
      memref.store %180, %arg6[%c8] : memref<12xf32, #tpu.memory_space<smem>>
      %c9 = arith.constant 9 : index
      %203 = memref.load %arg6[%c9] : memref<12xf32, #tpu.memory_space<smem>>
      memref.store %171, %arg6[%c9] : memref<12xf32, #tpu.memory_space<smem>>
      %204 = arith.mulf %194, %35 : vector<2x60xf32>
      %205 = vector.shape_cast %204 : vector<2x60xf32> to vector<1x2x60xf32>
      %cst_63 = arith.constant dense<0.000000e+00> : vector<1xf32>
      %206 = vector.multi_reduction <add>, %205, %cst_63 [1, 2] : vector<1x2x60xf32> to vector<1xf32>
      %207 = vector.shape_cast %206 : vector<1xf32> to vector<1x1x1xf32>
      %208 = vector.extract %207[0, 0, 0] : f32 from vector<1x1x1xf32>
      %c10 = arith.constant 10 : index
      %209 = memref.load %arg6[%c10] : memref<12xf32, #tpu.memory_space<smem>>
      memref.store %208, %arg6[%c10] : memref<12xf32, #tpu.memory_space<smem>>
      %210 = vector.shape_cast %35 : vector<2x60xf32> to vector<1x2x60xf32>
      %cst_64 = arith.constant dense<0.000000e+00> : vector<1xf32>
      %211 = vector.multi_reduction <add>, %210, %cst_64 [1, 2] : vector<1x2x60xf32> to vector<1xf32>
      %212 = vector.shape_cast %211 : vector<1xf32> to vector<1x1x1xf32>
      %213 = vector.extract %212[0, 0, 0] : f32 from vector<1x1x1xf32>
      %c11 = arith.constant 11 : index
      %214 = memref.load %arg6[%c11] : memref<12xf32, #tpu.memory_space<smem>>
      memref.store %213, %arg6[%c11] : memref<12xf32, #tpu.memory_space<smem>>
    } else {
    }
    %c0 = arith.constant 0 : index
    %c0_1 = arith.constant 0 : index
    %3 = vector.load %arg1[%c0, %c0_1] : memref<2048x128xf32, #tpu.memory_space<vmem>>, vector<2048x128xf32>
    %c0_2 = arith.constant 0 : index
    %c0_3 = arith.constant 0 : index
    %4 = vector.load %arg2[%c0_2, %c0_3] : memref<2048x128xf32, #tpu.memory_space<vmem>>, vector<2048x128xf32>
    %c1_i32 = arith.constant 1 : i32
    %5 = arith.cmpi eq, %arg0, %c1_i32 : i32
    %c352_i32 = arith.constant 352 : i32
    %c2048_i32 = arith.constant 2048 : i32
    %6 = arith.select %5, %c352_i32, %c2048_i32 : i32
    %7 = tpu.iota {dimensions = array<i32: 0>} : vector<2048x128xi32>
    %8 = vector.broadcast %6 : i32 to vector<2048x128xi32>
    %9 = arith.cmpi slt, %7, %8 : vector<2048x128xi32>
    %cst = arith.constant 0.000000e+00 : f32
    %10 = vector.broadcast %cst : f32 to vector<2048x128xf32>
    %11 = arith.select %9, %3, %10 : vector<2048x128xi1>, vector<2048x128xf32>
    %cst_4 = arith.constant 0.000000e+00 : f32
    %12 = vector.broadcast %cst_4 : f32 to vector<2048x128xf32>
    %13 = arith.select %9, %4, %12 : vector<2048x128xi1>, vector<2048x128xf32>
    %14 = math.exp %13 : vector<2048x128xf32>
    %15 = arith.mulf %11, %11 : vector<2048x128xf32>
    %16 = arith.addf %14, %15 : vector<2048x128xf32>
    %17 = arith.subf %16, %13 : vector<2048x128xf32>
    %cst_5 = arith.constant 1.000000e+00 : f32
    %18 = vector.broadcast %cst_5 : f32 to vector<2048x128xf32>
    %19 = arith.subf %17, %18 : vector<2048x128xf32>
    %cst_6 = arith.constant 5.000000e-01 : f32
    %20 = vector.broadcast %cst_6 : f32 to vector<2048x128xf32>
    %21 = arith.mulf %20, %19 : vector<2048x128xf32>
    %c0_7 = arith.constant 0 : index
    %c0_8 = arith.constant 0 : index
    %22 = vector.load %arg7[%c0_7, %c0_8] : memref<8x128xf32, #tpu.memory_space<vmem>>, vector<8x128xf32>
    %23 = vector.shape_cast %21 : vector<2048x128xf32> to vector<256x8x128xf32>
    %cst_9 = arith.constant dense<0.000000e+00> : vector<8x128xf32>
    %24 = vector.multi_reduction <add>, %23, %cst_9 [0] : vector<256x8x128xf32> to vector<8x128xf32>
    %25 = arith.addf %22, %24 : vector<8x128xf32>
    %c0_10 = arith.constant 0 : index
    %c0_11 = arith.constant 0 : index
    %26 = vector.load %arg7[%c0_10, %c0_11] : memref<8x128xf32, #tpu.memory_space<vmem>>, vector<8x128xf32>
    tpu.vector_store %arg7[%c0_10, %c0_11], %25 {strides = array<i32>} : memref<8x128xf32, #tpu.memory_space<vmem>>, vector<8x128xf32>,
    %c1_i32_12 = arith.constant 1 : i32
    %27 = arith.cmpi eq, %arg0, %c1_i32_12 : i32
    %28 = arith.extui %27 : i1 to i32
    %c0_i32_13 = arith.constant 0 : i32
    %29 = arith.cmpi ne, %28, %c0_i32_13 : i32
    scf.if %29 {
      %c0_14 = arith.constant 0 : index
      %c0_15 = arith.constant 0 : index
      %30 = vector.load %arg7[%c0_14, %c0_15] : memref<8x128xf32, #tpu.memory_space<vmem>>, vector<8x128xf32>
      %31 = vector.shape_cast %30 : vector<8x128xf32> to vector<1x8x128xf32>
      %cst_16 = arith.constant dense<0.000000e+00> : vector<1xf32>
      %32 = vector.multi_reduction <add>, %31, %cst_16 [1, 2] : vector<1x8x128xf32> to vector<1xf32>
      %33 = vector.shape_cast %32 : vector<1xf32> to vector<1x1x1xf32>
      %34 = vector.extract %33[0, 0, 0] : f32 from vector<1x1x1xf32>
      %c1 = arith.constant 1 : index
      %35 = memref.load %arg6[%c1] : memref<12xf32, #tpu.memory_space<smem>>
      memref.store %34, %arg6[%c1] : memref<12xf32, #tpu.memory_space<smem>>
    } else {
    }
    return
  }
  func.func @transform_0(%arg0: i32) -> (i32, i32) {
    %c0_i32 = arith.constant 0 : i32
    %c0_i32_0 = arith.constant 0 : i32
    return %arg0, %c0_i32 : i32, i32
  }
  func.func @transform_1(%arg0: i32) -> (i32, i32) {
    %c0_i32 = arith.constant 0 : i32
    %c0_i32_0 = arith.constant 0 : i32
    return %arg0, %c0_i32 : i32, i32
  }
  func.func @transform_2(%arg0: i32) -> (i32, i32) {
    %c0_i32 = arith.constant 0 : i32
    %c0_i32_0 = arith.constant 0 : i32
    %c0_i32_1 = arith.constant 0 : i32
    return %c0_i32, %c0_i32_0 : i32, i32
  }
  func.func @transform_3(%arg0: i32) -> (i32, i32, i32) {
    %c0_i32 = arith.constant 0 : i32
    %c0_i32_0 = arith.constant 0 : i32
    %c0_i32_1 = arith.constant 0 : i32
    %c0_i32_2 = arith.constant 0 : i32
    return %c0_i32, %c0_i32_0, %c0_i32_1 : i32, i32, i32
  }
  func.func @transform_4(%arg0: i32) -> (i32, i32, i32) {
    %c0_i32 = arith.constant 0 : i32
    %c0_i32_0 = arith.constant 0 : i32
    %c0_i32_1 = arith.constant 0 : i32
    %c0_i32_2 = arith.constant 0 : i32
    return %c0_i32, %c0_i32_0, %c0_i32_1 : i32, i32, i32
  }
  func.func @transform_5(%arg0: i32) -> i32 {
    %c0_i32 = arith.constant 0 : i32
    %c0_i32_0 = arith.constant 0 : i32
    return %c0_i32 : i32
  }
}

</mosaic_0001>

<llo_original>
// kernel: _loss_core.1
$region0: #{_loss_core.1}
  #allocation0 [shape = 'u32[]', space=smem, size = 0x4, offset = 0x4, fixed_abs, tag = 'smem constant byte address 0x4 - core index']
  #allocation1 [shape = 'u32[144,128]{1,0:T(1,128)}', space=vmem, size = 0x12000, scoped, tag = 'internal scratch']
  #allocation2 [shape = 'f32[8,128]{1,0:T(8,128)}', space=vmem, size = 0x1000, scoped, tag = 'scratch operand']
  %s0 = inlined_call_operand.vmem [shape: f32[2400,128], index: 0, kind: input, shape index: {}]
  %s1 = inlined_call_operand.vmem [shape: f32[2400,128], index: 1, kind: input, shape index: {}]
  %s2 = inlined_call_operand.vmem [shape: f32[2,221], index: 2, kind: input, shape index: {}]
  %s3 = inlined_call_operand.vmem [shape: f32[2,6,92], index: 3, kind: input, shape index: {}]
  %s4 = inlined_call_operand.vmem [shape: f32[2,6,60], index: 4, kind: input, shape index: {}]
  %s5 = inlined_call_operand.vmem [shape: f32[12], index: 5, kind: output, shape index: {}]
  %s6 = sld [smem:[#allocation0]]
  $region61: #{_loss_core.1} parent=0
    _
  %s8 = ssub.s32 1, %s6
  %s9 = scalar_select 0, %s8, %s6
  $region1: #{_loss_core.1} parent=0
    #allocation3 [shape = 'u8[512]{0}', space=smem, size = 0x200, scoped, tag = 'output window, operand 0, single buffered']
    #allocation4 [shape = 's32[2]{0}', space=sflag, size = 0x8, scoped, tag = 'scoped memory for _loss_core.1']
    %10 = vsyncpa [#allocation4], 0
    loop: start=0, step=1, limit=4
    $region2: #{_loss_core.1} parent=1 // loop_pre_header
      _
    $region3: #{_loss_core.1} parent=1 // loop_header
      %s12 = sphi 0, %s16
      %p13 = scmp.ge.s32.totalorder %s12, 4
      %s22 = sphi 0, %s24
      %s25 = sphi 0, %s22
      %s26 = sphi 0, %s25
      %s42 = sphi 0, %s26
      %s48 = sphi 0, %s50
      %s51 = sphi 0, %s48
      %s52 = sphi 0, %s51
      %s68 = sphi 0, %s52
      %s72 = sphi 0, %s72
      %s74 = sphi 0, %s72
      %s75 = sphi 0, %s74
      %s89 = sphi 0, %s75
      %s93 = sphi 0, %s93
      %s95 = sphi 0, %s93
      %s96 = sphi 0, %s95
      %s110 = sphi 0, %s96
      %s114 = sphi 0, %s114
      %s116 = sphi 0, %s114
      %s117 = sphi 0, %s116
      %s131 = sphi 0, %s117
      %s135 = sphi 0, %s135
      %s137 = sphi 0, %s135
      %s138 = sphi 0, %s137
      %s152 = sphi 0, %s138
    $region4: #{_loss_core.1} parent=1 // loop_header_branch
      %15 = sbr.rel (%p13) target = $region8
    $region5: #{_loss_core.1} parent=1 // loop_body
      %s17 = ssub.s32 %s12, 1
      %s18 = ssub.s32 %s12, 2
      %s19 = sadd.s32 %s12, 1
      %s20 = ssub.s32 %s12, %s19
      %p21 = scmp.eq.s32.totalorder %s20, 0
      %s23 = sadd.s32 %s22, 1
      %s24 = scalar_select %p21, %s22, %s23
      %p27 = pneg %p21
      %p28 = scmp.eq.s32.totalorder %s12, 1
      %p29 = por %p27, %p28
      %p30 = scmp.ne.s32.totalorder %s22, %s25
      %p31 = scmp.eq.s32.totalorder %s12, 0
      %p32 = por %p30, %p31
      %p33 = scmp.ne.s32.totalorder %s22, %s25
      %p34 = scmp.eq.s32.totalorder %s17, 1
      %p35 = por %p33, %p34
      %p36 = scmp.ne.s32.totalorder %s25, %s26
      %p37 = scmp.eq.s32.totalorder %s17, 0
      %p38 = por %p36, %p37
      %p39 = scmp.ne.s32.totalorder %s25, %s26
      %p40 = scmp.eq.s32.totalorder %s18, 1
      %p41 = por %p39, %p40
      %p43 = scmp.ne.s32.totalorder %s26, %s42
      %p44 = scmp.eq.s32.totalorder %s18, 0
      %p45 = por %p43, %p44
      %s46 = ssub.s32 %s12, %s19
      %p47 = scmp.eq.s32.totalorder %s46, 0
      %s49 = sadd.s32 %s48, 1
      %s50 = scalar_select %p47, %s48, %s49
      %p53 = pneg %p47
      %p54 = scmp.eq.s32.totalorder %s12, 1
      %p55 = por %p53, %p54
      %p56 = scmp.ne.s32.totalorder %s48, %s51
      %p57 = scmp.eq.s32.totalorder %s12, 0
      %p58 = por %p56, %p57
      %p59 = scmp.ne.s32.totalorder %s48, %s51
      %p60 = scmp.eq.s32.totalorder %s17, 1
      %p61 = por %p59, %p60
      %p62 = scmp.ne.s32.totalorder %s51, %s52
      %p63 = scmp.eq.s32.totalorder %s17, 0
      %p64 = por %p62, %p63
      %p65 = scmp.ne.s32.totalorder %s51, %s52
      %p66 = scmp.eq.s32.totalorder %s18, 1
      %p67 = por %p65, %p66
      %p69 = scmp.ne.s32.totalorder %s52, %s68
      %p70 = scmp.eq.s32.totalorder %s18, 0
      %p71 = por %p69, %p70
      %s73 = sadd.s32 %s72, 1
      %p76 = scmp.eq.s32.totalorder %s12, 1
      %p77 = scmp.ne.s32.totalorder %s72, %s74
      %p78 = scmp.eq.s32.totalorder %s12, 0
      %p79 = por %p77, %p78
      %p80 = scmp.ne.s32.totalorder %s72, %s74
      %p81 = scmp.eq.s32.totalorder %s17, 1
      %p82 = por %p80, %p81
      %p83 = scmp.ne.s32.totalorder %s74, %s75
      %p84 = scmp.eq.s32.totalorder %s17, 0
      %p85 = por %p83, %p84
      %p86 = scmp.ne.s32.totalorder %s74, %s75
      %p87 = scmp.eq.s32.totalorder %s18, 1
      %p88 = por %p86, %p87
      %p90 = scmp.ne.s32.totalorder %s75, %s89
      %p91 = scmp.eq.s32.totalorder %s18, 0
      %p92 = por %p90, %p91
      %s94 = sadd.s32 %s93, 1
      %p97 = scmp.eq.s32.totalorder %s12, 1
      %p98 = scmp.ne.s32.totalorder %s93, %s95
      %p99 = scmp.eq.s32.totalorder %s12, 0
      %p100 = por %p98, %p99
      %p101 = scmp.ne.s32.totalorder %s93, %s95
      %p102 = scmp.eq.s32.totalorder %s17, 1
      %p103 = por %p101, %p102
      %p104 = scmp.ne.s32.totalorder %s95, %s96
      %p105 = scmp.eq.s32.totalorder %s17, 0
      %p106 = por %p104, %p105
      %p107 = scmp.ne.s32.totalorder %s95, %s96
      %p108 = scmp.eq.s32.totalorder %s18, 1
      %p109 = por %p107, %p108
      %p111 = scmp.ne.s32.totalorder %s96, %s110
      %p112 = scmp.eq.s32.totalorder %s18, 0
      %p113 = por %p111, %p112
      %s115 = sadd.s32 %s114, 1
      %p118 = scmp.eq.s32.totalorder %s12, 1
      %p119 = scmp.ne.s32.totalorder %s114, %s116
      %p120 = scmp.eq.s32.totalorder %s12, 0
      %p121 = por %p119, %p120
      %p122 = scmp.ne.s32.totalorder %s114, %s116
      %p123 = scmp.eq.s32.totalorder %s17, 1
      %p124 = por %p122, %p123
      %p125 = scmp.ne.s32.totalorder %s116, %s117
      %p126 = scmp.eq.s32.totalorder %s17, 0
      %p127 = por %p125, %p126
      %p128 = scmp.ne.s32.totalorder %s116, %s117
      %p129 = scmp.eq.s32.totalorder %s18, 1
      %p130 = por %p128, %p129
      %p132 = scmp.ne.s32.totalorder %s117, %s131
      %p133 = scmp.eq.s32.totalorder %s18, 0
      %p134 = por %p132, %p133
      %s136 = sadd.s32 %s135, 1
      %p139 = scmp.eq.s32.totalorder %s12, 1
      %p140 = scmp.ne.s32.totalorder %s135, %s137
      %p141 = scmp.eq.s32.totalorder %s12, 0
      %p142 = por %p140, %p141
      %p143 = scmp.ne.s32.totalorder %s135, %s137
      %p144 = scmp.eq.s32.totalorder %s17, 1
      %p145 = por %p143, %p144
      %p146 = scmp.ne.s32.totalorder %s137, %s138
      %p147 = scmp.eq.s32.totalorder %s17, 0
      %p148 = por %p146, %p147
      %p149 = scmp.ne.s32.totalorder %s137, %s138
      %p150 = scmp.eq.s32.totalorder %s18, 1
      %p151 = por %p149, %p150
      %p153 = scmp.ne.s32.totalorder %s138, %s152
      %p154 = scmp.eq.s32.totalorder %s18, 0
      %p155 = por %p153, %p154
      %p156 = scmp.le.s32.totalorder 1, %s12
      %p157 = scmp.lt.s32.totalorder %s12, 3
      %p158 = pnand %p156, %p157
      %p159 = pneg %p158
      // Predicated region
      $region9: #{_loss_core.1} parent=5 // pred_check
        _
      $region10: #{_loss_core.1} parent=5 // pred_check_branch
        %161 = sbr.rel (%p158) target = $region12
      $region11: #{_loss_core.1} parent=5 // pred_region
        %s162 = ssub.s32 %s12, 1
        // Predicated region
        $region13: #{_loss_core.1} parent=11 // pred_check
          %p163 = pneg %p85
        $region14: #{_loss_core.1} parent=11 // pred_check_branch
          %165 = sbr.rel (%p163) target = $region16
        $region15: #{_loss_core.1} parent=11 // pred_region
          _
        $region16: #{_loss_core.1} parent=11 // pred_fallthru
          _
        // Predicated region
        $region17: #{_loss_core.1} parent=11 // pred_check
          %p166 = pneg %p106
        $region18: #{_loss_core.1} parent=11 // pred_check_branch
          %168 = sbr.rel (%p166) target = $region20
        $region19: #{_loss_core.1} parent=11 // pred_region
          _
        $region20: #{_loss_core.1} parent=11 // pred_fallthru
          _
        // Predicated region
        $region21: #{_loss_core.1} parent=11 // pred_check
          %p169 = pneg %p127
        $region22: #{_loss_core.1} parent=11 // pred_check_branch
          %171 = sbr.rel (%p169) target = $region24
        $region23: #{_loss_core.1} parent=11 // pred_region
          _
        $region24: #{_loss_core.1} parent=11 // pred_fallthru
          _
      $region12: #{_loss_core.1} parent=5 // pred_fallthru
        _
      %p172 = scmp.lt.s32.totalorder %s12, 2
      // Predicated region
      $region25: #{_loss_core.1} parent=5 // pred_check
        %p173 = pneg %p172
      $region26: #{_loss_core.1} parent=5 // pred_check_branch
        %175 = sbr.rel (%p173) target = $region28
      $region27: #{_loss_core.1} parent=5 // pred_region
        // Predicated region
        $region29: #{_loss_core.1} parent=27 // pred_check
          %p176 = pneg %p32
        $region30: #{_loss_core.1} parent=27 // pred_check_branch
          %178 = sbr.rel (%p176) target = $region32
        $region31: #{_loss_core.1} parent=27 // pred_region
          %s179 = smul.u32 256, %s12
          %s180 = ssub.s32 300, %s179
          %p181 = scmp.lt.s32.totalorder %s180, 256
          %s182 = scalar_select %p181, %s180, 256
          %s183 = smul.u32 128, %s182
          %p184 = scmp.lt.s32.totalorder %s179, 299
          %s185 = scalar_select %p184, %s179, 299
          %s186 = smul.addr %s185, 8
          %s187 = scalar_lea.vmem %s0, %s186
          %s188 = smul.u32 256, %s12
          %s189 = ssub.s32 300, %s188
          %p190 = scmp.lt.s32.totalorder %s189, 256
          %s191 = scalar_select %p190, %s189, 256
          %s192 = smul.u32 128, %s191
        $region32: #{_loss_core.1} parent=27 // pred_fallthru
          _
        // Predicated region
        $region33: #{_loss_core.1} parent=27 // pred_check
          %p193 = pneg %p58
        $region34: #{_loss_core.1} parent=27 // pred_check_branch
          %195 = sbr.rel (%p193) target = $region36
        $region35: #{_loss_core.1} parent=27 // pred_region
          %s196 = smul.u32 256, %s12
          %s197 = ssub.s32 300, %s196
          %p198 = scmp.lt.s32.totalorder %s197, 256
          %s199 = scalar_select %p198, %s197, 256
          %s200 = smul.u32 128, %s199
          %p201 = scmp.lt.s32.totalorder %s196, 299
          %s202 = scalar_select %p201, %s196, 299
          %s203 = smul.addr %s202, 8
          %s204 = scalar_lea.vmem %s1, %s203
          %s205 = smul.u32 256, %s12
          %s206 = ssub.s32 300, %s205
          %p207 = scmp.lt.s32.totalorder %s206, 256
          %s208 = scalar_select %p207, %s206, 256
          %s209 = smul.u32 128, %s208
        $region36: #{_loss_core.1} parent=27 // pred_fallthru
          _
      $region28: #{_loss_core.1} parent=5 // pred_fallthru
        _
      %p210 = scmp.le.s32.totalorder 1, %s12
      %p211 = scmp.lt.s32.totalorder %s12, 3
      %p212 = pnand %p210, %p211
      %p213 = pneg %p212
      // Predicated region
      $region37: #{_loss_core.1} parent=5 // pred_check
        _
      $region38: #{_loss_core.1} parent=5 // pred_check_branch
        %215 = sbr.rel (%p212) target = $region40
      $region39: #{_loss_core.1} parent=5 // pred_region
        %s216 = ssub.s32 %s12, 1
        %s217 = smul.u32 256, %s17
        %s218 = ssub.s32 300, %s217
        %p219 = scmp.lt.s32.totalorder %s218, 256
        %s220 = scalar_select %p219, %s218, 256
        %s221 = smul.u32 128, %s220
        %p222 = scmp.lt.s32.totalorder %s217, 299
        %s223 = scalar_select %p222, %s217, 299
        %s224 = smul.addr %s223, 8
        %s225 = scalar_lea.vmem %s0, %s224
        %p226 = pneg %p38
        %p227 = pneg %p35
        %s228 = smul.u32 256, %s17
        %s229 = ssub.s32 300, %s228
        %p230 = scmp.lt.s32.totalorder %s229, 256
        %s231 = scalar_select %p230, %s229, 256
        %s232 = smul.u32 128, %s231
        %p233 = scmp.lt.s32.totalorder %s228, 299
        %s234 = scalar_select %p233, %s228, 299
        %s235 = smul.addr %s234, 8
        %s236 = scalar_lea.vmem %s1, %s235
        %p237 = pneg %p64
        %p238 = pneg %p61
        %p239 = pneg %p85
        %p240 = pneg %p82
        %p241 = pneg %p106
        %p242 = pneg %p103
        %p243 = pneg %p127
        %p244 = pneg %p124
        %p245 = pneg %p148
        %p246 = pneg %p145
        %s247 = smul.u32 256, %s17
        %s248 = ssub.s32 300, %s247
        %p249 = scmp.lt.s32.totalorder %s248, 256
        %s250 = scalar_select %p249, %s248, 256
        %s251 = smul.u32 128, %s250
        %p252 = scmp.lt.s32.totalorder %s247, 299
        %s253 = scalar_select %p252, %s247, 299
        %s254 = smul.addr %s253, 8
        %s255 = scalar_lea.vmem %s0, %s254
        %s256 = smul.u32 256, %s17
        %s257 = ssub.s32 300, %s256
        %p258 = scmp.lt.s32.totalorder %s257, 256
        %s259 = scalar_select %p258, %s257, 256
        %s260 = smul.u32 128, %s259
        %s261 = smul.u32 256, %s17
        %s262 = ssub.s32 300, %s261
        %p263 = scmp.lt.s32.totalorder %s262, 256
        %s264 = scalar_select %p263, %s262, 256
        %s265 = smul.u32 128, %s264
        %p266 = scmp.lt.s32.totalorder %s261, 299
        %s267 = scalar_select %p266, %s261, 299
        %s268 = smul.addr %s267, 8
        %s269 = scalar_lea.vmem %s1, %s268
        %s270 = smul.u32 256, %s17
        %s271 = ssub.s32 300, %s270
        %p272 = scmp.lt.s32.totalorder %s271, 256
        %s273 = scalar_select %p272, %s271, 256
        %s274 = smul.u32 128, %s273
        %p275 = scmp.eq.s32.totalorder %s17, 0
        // Predicated region
        $region41: #{_loss_core.1} parent=39 // pred_check
          %p276 = pneg %p275
        $region42: #{_loss_core.1} parent=39 // pred_check_branch
          %278 = sbr.rel (%p276) target = $region44
        $region43: #{_loss_core.1} parent=39 // pred_region
          %279 = vst [vmem:[#allocation2] sm:$0xff] 0.0
          %v280 = vld [vmem:[%s2] sm:$0xf]
          %v281 = vld [vmem:[%s3] sm:$0x3f]
          %v282 = vld [vmem:[%s3 + $0x8] sm:$0x3f]
          %v285 = vunpack.c.l.s4 1966171168
          %v286 = vunpack.c.0.s8 %v285
          %v287 = vlaneseq
          %v288 = vshrl.u32 %v287, 7
          %v289 = vsub.s32 %v286, %v288
          %v290 = vrot.slane %v280, %v289
          %v291 = vcombine.high %v290, %v290
          %v292 = vlaneseq
          %v293 = vshrl.u32 %v292, 7
          %v294 = vsub.s32 0, %v293
          %v295 = vrot.slane %v290, %v294
          %v296 = vlaneseq
          %v297 = vshrl.u32 %v296, 7
          %v298 = vsub.s32 0, %v297
          %v299 = vrot.slane %v291, %v298
          %v302 = vsub.f32 %v295, %v281
          %v303 = vsub.f32 %v299, %v282
          %v304 = vmul.f32 %v302, %v302
          %v305 = vmul.f32 %v303, %v303
          %vm306 = vcmask 488448
          %v307 = vsel %vm306, %v304, 0.0
          %v308 = vsel %vm306, %v305, 0.0
          %v309 = vadd.f32 %v307, %v308
          %310 = vadd.xlane.f32.xlu0 %v309
          %v311 = vpop.xlane.xlu0 %310
          %v312 = vrot.slane %v311, 4
          %v313 = vadd.f32 %v311, %v312
          %v314 = vrot.slane %v313, 2
          %v315 = vadd.f32 %v313, %v314
          %v316 = vrot.slane %v315, 1
          %v317 = vadd.f32 %v315, %v316
          %s318 = vtos %v317
          %s319 = smul.f32 %s318, 0.5
          %320 = vrot.lane.b32.xlu0 %v290, 76
          %v321 = vpop.permute.xlu0 %320
          %322 = vrot.lane.b32.xlu0 %v291, 76
          %v323 = vpop.permute.xlu0 %322
          %v324 = vrot.slane %v321, 1
          %v325 = vrot.slane %v323, 1
          %v326 = vlaneseq
          %v327 = vshrl.u32 %v326, 7
          %v328 = vsub.s32 0, %v327
          %v329 = vrot.slane %v324, %v328
          %v330 = vlaneseq
          %v331 = vshrl.u32 %v330, 7
          %v332 = vsub.s32 0, %v331
          %v333 = vrot.slane %v325, %v332
          %338 = vrot.lane.b32.xlu0 %v281, 68
          %v339 = vpop.permute.xlu0 %338
          %340 = vrot.lane.b32.xlu0 %v282, 68
          %v341 = vpop.permute.xlu0 %340
          %v344 = vsub.f32 %v329, %v339
          %v345 = vsub.f32 %v333, %v341
          %v346 = vand.u32 2147483647, %v344
          %v347 = vand.u32 2147483647, %v345
          %vm348 = vcmask 259072
          %v349 = vsel %vm348, %v346, 0.0
          %v350 = vsel %vm348, %v347, 0.0
          %v351 = vadd.f32 %v349, %v350
          %352 = vadd.xlane.f32.xlu0 %v351
          %v353 = vpop.xlane.xlu0 %352
          %v354 = vrot.slane %v353, 4
          %v355 = vadd.f32 %v353, %v354
          %v356 = vrot.slane %v355, 2
          %v357 = vadd.f32 %v355, %v356
          %v358 = vrot.slane %v357, 1
          %v359 = vadd.f32 %v357, %v358
          %s360 = vtos %v359
          %361 = vrot.lane.b32.xlu0 %v280, 38
          %v362 = vpop.permute.xlu0 %361
          %v363 = vrot.slane %v362, 2
          %v365 = vsub.f32 0.0, %v363
          %v366 = vmax.f32 %v365, 0.0
          %v367 = vand.u32 2147483647, %v365
          %v368 = vsub.f32 0.0, %v367
          %v369 = vmul.f32 %v368, 1.442695
          %v370 = vpow.pop %v369
          %v371 = vadd.f32 %v370, 1.0
          %v372 = vlog2.pop %v371
          %v373 = vmul.f32 %v372, 0.6931472
          %v374 = vmul.f32 -0.5, %v370
          %v375 = vadd.f32 %v374, 1.0
          %v376 = vmul.f32 %v375, %v370
          %v377 = vand.u32 2147483647, %v370
          %vm378 = vcmp.lt.f32.partialorder %v377, 0.0004427343
          %v379 = vsel %vm378, %v376, %v373
          %v380 = vadd.f32 %v366, %v379
          %vm381 = vcmask 1024
          %v382 = vsel %vm381, %v380, 0.0
          %383 = vadd.xlane.f32.xlu0 %v382
          %v384 = vpop.xlane.xlu0 %383
          %v385 = vrot.slane %v384, 4
          %v386 = vadd.f32 %v384, %v385
          %v387 = vrot.slane %v386, 2
          %v388 = vadd.f32 %v386, %v387
          %v389 = vrot.slane %v388, 1
          %v390 = vadd.f32 %v388, %v389
          %s391 = vtos %v390
          %392 = vrot.lane.b32.xlu0 %v280, 37
          %v393 = vpop.permute.xlu0 %392
          %v394 = vrot.slane %v393, 2
          %v396 = vmax.f32 %v394, 0.0
          %v397 = vand.u32 2147483647, %v394
          %v398 = vsub.f32 0.0, %v397
          %v399 = vmul.f32 %v398, 1.442695
          %v400 = vpow.pop %v399
          %v401 = vadd.f32 %v400, 1.0
          %v402 = vlog2.pop %v401
          %v403 = vmul.f32 %v402, 0.6931472
          %v404 = vmul.f32 -0.5, %v400
          %v405 = vadd.f32 %v404, 1.0
          %v406 = vmul.f32 %v405, %v400
          %v407 = vand.u32 2147483647, %v400
          %vm408 = vcmp.lt.f32.partialorder %v407, 0.0004427343
          %v409 = vsel %vm408, %v406, %v403
          %v410 = vadd.f32 %v396, %v409
          %v411 = vsel %vm381, %v410, 0.0
          %412 = vadd.xlane.f32.xlu0 %v411
          %v413 = vpop.xlane.xlu0 %412
          %v414 = vrot.slane %v413, 4
          %v415 = vadd.f32 %v413, %v414
          %v416 = vrot.slane %v415, 2
          %v417 = vadd.f32 %v415, %v416
          %v418 = vrot.slane %v417, 1
          %v419 = vadd.f32 %v417, %v418
          %s420 = vtos %v419
          %421 = vrot.lane.b32.xlu0 %v280, 36
          %v422 = vpop.permute.xlu0 %421
          %v423 = vrot.slane %v422, 2
          %v425 = vmax.f32 %v423, 0.0
          %v426 = vand.u32 2147483647, %v423
          %v427 = vsub.f32 0.0, %v426
          %v428 = vmul.f32 %v427, 1.442695
          %v429 = vpow.pop %v428
          %v430 = vadd.f32 %v429, 1.0
          %v431 = vlog2.pop %v430
          %v432 = vmul.f32 %v431, 0.6931472
          %v433 = vmul.f32 -0.5, %v429
          %v434 = vadd.f32 %v433, 1.0
          %v435 = vmul.f32 %v434, %v429
          %v436 = vand.u32 2147483647, %v429
          %vm437 = vcmp.lt.f32.partialorder %v436, 0.0004427343
          %v438 = vsel %vm437, %v435, %v432
          %v439 = vadd.f32 %v425, %v438
          %v440 = vsel %vm381, %v439, 0.0
          %441 = vadd.xlane.f32.xlu0 %v440
          %v442 = vpop.xlane.xlu0 %441
          %v443 = vrot.slane %v442, 4
          %v444 = vadd.f32 %v442, %v443
          %v445 = vrot.slane %v444, 2
          %v446 = vadd.f32 %v444, %v445
          %v447 = vrot.slane %v446, 1
          %v448 = vadd.f32 %v446, %v447
          %s449 = vtos %v448
          %v450 = vsub.f32 0.0, %v394
          %v451 = vmax.f32 %v450, 0.0
          %v452 = vand.u32 2147483647, %v450
          %v453 = vsub.f32 0.0, %v452
          %v454 = vmul.f32 %v453, 1.442695
          %v455 = vpow.pop %v454
          %v456 = vadd.f32 %v455, 1.0
          %v457 = vlog2.pop %v456
          %v458 = vmul.f32 %v457, 0.6931472
          %v459 = vmul.f32 -0.5, %v455
          %v460 = vadd.f32 %v459, 1.0
          %v461 = vmul.f32 %v460, %v455
          %v462 = vand.u32 2147483647, %v455
          %vm463 = vcmp.lt.f32.partialorder %v462, 0.0004427343
          %v464 = vsel %vm463, %v461, %v458
          %v465 = vadd.f32 %v451, %v464
          %v466 = vsel %vm381, %v465, 0.0
          %467 = vadd.xlane.f32.xlu0 %v466
          %v468 = vpop.xlane.xlu0 %467
          %v469 = vrot.slane %v468, 4
          %v470 = vadd.f32 %v468, %v469
          %v471 = vrot.slane %v470, 2
          %v472 = vadd.f32 %v470, %v471
          %v473 = vrot.slane %v472, 1
          %v474 = vadd.f32 %v472, %v473
          %s475 = vtos %v474
          %v476 = vsub.f32 0.0, %v423
          %v477 = vmax.f32 %v476, 0.0
          %v478 = vand.u32 2147483647, %v476
          %v479 = vsub.f32 0.0, %v478
          %v480 = vmul.f32 %v479, 1.442695
          %v481 = vpow.pop %v480
          %v482 = vadd.f32 %v481, 1.0
          %v483 = vlog2.pop %v482
          %v484 = vmul.f32 %v483, 0.6931472
          %v485 = vmul.f32 -0.5, %v481
          %v486 = vadd.f32 %v485, 1.0
          %v487 = vmul.f32 %v486, %v481
          %v488 = vand.u32 2147483647, %v481
          %vm489 = vcmp.lt.f32.partialorder %v488, 0.0004427343
          %v490 = vsel %vm489, %v487, %v484
          %v491 = vadd.f32 %v477, %v490
          %v492 = vsel %vm381, %v491, 0.0
          %493 = vadd.xlane.f32.xlu0 %v492
          %v494 = vpop.xlane.xlu0 %493
          %v495 = vrot.slane %v494, 4
          %v496 = vadd.f32 %v494, %v495
          %v497 = vrot.slane %v496, 2
          %v498 = vadd.f32 %v496, %v497
          %v499 = vrot.slane %v498, 1
          %v500 = vadd.f32 %v498, %v499
          %s501 = vtos %v500
          %v502 = vld [vmem:[%s4] sm:$0x3f]
          %v503 = vld [vmem:[%s4 + $0x8] sm:$0x3f]
          %504 = vrot.lane.b32.xlu0 %v295, 68
          %v505 = vpop.permute.xlu0 %504
          %506 = vrot.lane.b32.xlu0 %v299, 68
          %v507 = vpop.permute.xlu0 %506
          %v510 = vsub.f32 %v502, %v505
          %v511 = vsub.f32 %v503, %v507
          %v512 = vmul.f32 %v510, %v510
          %v513 = vmul.f32 %v511, %v511
          %516 = vrot.lane.b32.xlu0 %v512, 70
          %v517 = vpop.permute.xlu0 %516
          %518 = vrot.lane.b32.xlu0 %v513, 70
          %v519 = vpop.permute.xlu0 %518
          %vm522 = vcmask 13312
          %v523 = vsel %vm522, %v517, 0.0
          %524 = vadd.xlane.f32.xlu0 %v523
          %v525 = vpop.xlane.xlu0 %524
          %v526 = vsel %vm522, %v519, 0.0
          %527 = vadd.xlane.f32.xlu0 %v526
          %v528 = vpop.xlane.xlu0 %527
          %v529 = vrsqrt.pop %v525
          %v530 = vmul.f32 %v525, %v529
          %vm531 = vcmp.eq.f32.partialorder %v525, inf
          %v532 = vsel %vm531, %v525, %v530
          %vm533 = vcmp.eq.f32.partialorder %v525, 0.0
          %v534 = vand.u32 %v525, 2147483648
          %v535 = vsel %vm533, %v534, %v532
          %v536 = vrsqrt.pop %v528
          %v537 = vmul.f32 %v528, %v536
          %vm538 = vcmp.eq.f32.partialorder %v528, inf
          %v539 = vsel %vm538, %v528, %v537
          %vm540 = vcmp.eq.f32.partialorder %v528, 0.0
          %v541 = vand.u32 %v528, 2147483648
          %v542 = vsel %vm540, %v541, %v539
          %v545 = vlaneseq
          %v546 = vand.u32 %v545, 127
          %v547 = vlaneseq
          %v548 = vshrl.u32 %v547, 7
          %v549 = vsub.s32 %v546, %v548
          %v550 = vrot.slane %v535, %v549
          %v551 = vlaneseq
          %v552 = vshrl.u32 %v551, 7
          %v553 = vsub.s32 %v546, %v552
          %v554 = vrot.slane %v542, %v553
          %vm555 = vcmask 1041409
          %v556 = vsel %vm555, %v554, %v550
          %vm558 = vcmask 41984
          %v559 = vsel %vm558, %v556, inf
          %560 = vmin.xlane.f32.xlu0 %v559
          %v561 = vpop.xlane.xlu0 %560
          %v563 = vlaneseq
          %v564 = vshrl.u32 %v563, 7
          %v565 = vsub.s32 0, %v564
          %v566 = vrot.slane %v561, %v565
          %v567 = vlaneseq
          %v568 = vshrl.u32 %v567, 7
          %v569 = vsub.s32 1, %v568
          %v570 = vrot.slane %v561, %v569
          %vm573 = vcmp.eq.f32.partialorder %v535, %v566
          %vm574 = vcmp.eq.f32.partialorder %v542, %v570
          %576 = vbcast.lane.b32.xlu0 %v546, 256
          %v577 = vpop.permute.xlu0 %576
          %v578 = vsel %vm573, %v577, 6
          %v579 = vsel %vm574, %v577, 6
          %580 = vset.pattern.permute.xlu0 0
          %581 = vperm.xlu0 %580, %v578
          %v582 = vpop.permute.xlu0 %581
          %583 = vset.pattern.permute.xlu0 0
          %584 = vperm.xlu0 %583, %v579
          %v585 = vpop.permute.xlu0 %584
          %v586 = vlaneseq
          %v587 = vshrl.u32 %v586, 7
          %v588 = vsub.s32 %v546, %v587
          %v589 = vrot.slane %v582, %v588
          %v590 = vlaneseq
          %v591 = vshrl.u32 %v590, 7
          %v592 = vsub.s32 %v546, %v591
          %v593 = vrot.slane %v585, %v592
          %v594 = vsel %vm555, %v593, %v589
          %v595 = vsel %vm558, %v594, 2147483647
          %v596 = vand.u32 %v595, 65535
          %v597 = vshra.s32 %v595, 16
          %v598 = vcvt.s32.f32 %v596
          %v599 = vcvt.s32.f32 %v597
          %600 = vmin.xlane.f32.xlu0 %v599
          %v601 = vpop.xlane.xlu0 %600
          %vm602 = vcmp.eq.f32.partialorder %v599, %v601
          %v603 = vsel %vm602, %v598, inf
          %604 = vmin.xlane.f32.xlu0 %v603
          %v605 = vpop.xlane.xlu0 %604
          %v606 = vcvt.f32.s32 %v605
          %v607 = vcvt.f32.s32 %v601
          %v608 = vshll.u32 %v607, 16
          %v609 = vadd.s32 %v608, %v606
          %vm610 = vcmp.eq.s32.totalorder %v546, %v609
          %v611 = vsel %vm610, 1, 0
          %v612 = vcvt.s32.f32 %v611
          %613 = vrot.lane.b32.xlu0 %v280, 44
          %v614 = vpop.permute.xlu0 %613
          %v615 = vrot.slane %v614, 2
          %v617 = vmul.f32 %v615, %v612
          %v618 = vsel %vm558, %v617, 0.0
          %619 = vadd.xlane.f32.xlu0 %v618
          %v620 = vpop.xlane.xlu0 %619
          %v622 = vunpack.c.l.s4 1983009808
          %v623 = vunpack.c.0.s8 %v622
          %v624 = vlaneseq
          %v625 = vshrl.u32 %v624, 7
          %v626 = vsub.s32 %v623, %v625
          %v627 = vrot.slane %v280, %v626
          %v628 = vcombine.high %v627, %v627
          %629 = vrot.lane.b32.xlu0 %v628, 44
          %v630 = vpop.permute.xlu0 %629
          %v632 = vsub.f32 %v620, %v630
          %vm633 = vcmp.lt.f32.partialorder %v561, 2.0
          %v634 = vsub.f32 %v535, %v566
          %v635 = vsub.f32 %v542, %v570
          %vm636 = vcmp.gt.f32.partialorder %v634, 0.2
          %vm637 = vcmp.gt.f32.partialorder %v635, 0.2
          %v638 = vsel %vm633, 1, 0
          %vm639 = vcmp.eq.s32.totalorder %v638, 1
          %v640 = vsel %vm636, 1, 0
          %v641 = vsel %vm637, 1, 0
          %642 = vset.pattern.permute.xlu0 0
          %643 = vperm.xlu0 %642, %v640
          %v644 = vpop.permute.xlu0 %643
          %645 = vset.pattern.permute.xlu0 0
          %646 = vperm.xlu0 %645, %v641
          %v647 = vpop.permute.xlu0 %646
          %v648 = vlaneseq
          %v649 = vshrl.u32 %v648, 7
          %v650 = vsub.s32 %v546, %v649
          %v651 = vrot.slane %v644, %v650
          %v652 = vlaneseq
          %v653 = vshrl.u32 %v652, 7
          %v654 = vsub.s32 %v546, %v653
          %v655 = vrot.slane %v647, %v654
          %v656 = vsel %vm555, %v655, %v651
          %vm657 = vcmp.ne.s32.totalorder %v656, 0
          %vm658 = vmand %vm639, %vm657
          %vm659 = vcmp.lt.f32.partialorder %v632, 0.2
          %vm660 = vmand %vm658, %vm659
          %v661 = vsel %vm660, 1, 0
          %v662 = vcvt.s32.f32 %v661
          %v663 = vsel %vm558, %v662, 0.0
          %664 = vadd.xlane.f32.xlu0 %v663
          %v665 = vpop.xlane.xlu0 %664
          %v666 = vrot.slane %v665, 4
          %v667 = vadd.f32 %v665, %v666
          %v668 = vrot.slane %v667, 2
          %v669 = vadd.f32 %v667, %v668
          %v670 = vrot.slane %v669, 1
          %v671 = vadd.f32 %v669, %v670
          %s672 = vtos %v671
          %s673 = smul.f32 %s672, 0.2
          %v674 = vsel %vm660, %v632, 0.0
          %v675 = vsel %vm558, %v674, 0.0
          %676 = vadd.xlane.f32.xlu0 %v675
          %v677 = vpop.xlane.xlu0 %676
          %v678 = vrot.slane %v677, 4
          %v679 = vadd.f32 %v677, %v678
          %v680 = vrot.slane %v679, 2
          %v681 = vadd.f32 %v679, %v680
          %v682 = vrot.slane %v681, 1
          %v683 = vadd.f32 %v681, %v682
          %s684 = vtos %v683
          %s685 = ssub.f32 %s673, %s684
          %v686 = vlaneseq
          %v687 = vshrl.u32 %v686, 7
          %v688 = vsub.s32 0, %v687
          %v689 = vrot.slane %v612, %v688
          %691 = vbcast.lane.b32.xlu0 %v689, 256
          %v692 = vpop.permute.xlu0 %691
          %v693 = vlaneseq
          %v694 = vshrl.u32 %v693, 7
          %v695 = vsub.s32 1, %v694
          %v696 = vrot.slane %v612, %v695
          %698 = vbcast.lane.b32.xlu0 %v696, 256
          %v699 = vpop.permute.xlu0 %698
          %v700 = vmul.f32 %v502, %v692
          %v701 = vmul.f32 %v503, %v699
          %v702 = vsel %vm306, %v700, 0.0
          %v703 = vrot.slane %v702, 4
          %v704 = vadd.f32 %v702, %v703
          %v705 = vrot.slane %v704, 2
          %v706 = vadd.f32 %v704, %v705
          %v707 = vrot.slane %v706, 1
          %v708 = vadd.f32 %v706, %v707
          %v709 = vsel %vm306, %v701, 0.0
          %v710 = vrot.slane %v709, 4
          %v711 = vadd.f32 %v709, %v710
          %v712 = vrot.slane %v711, 2
          %v713 = vadd.f32 %v711, %v712
          %v714 = vrot.slane %v713, 1
          %v715 = vadd.f32 %v713, %v714
          %v716 = vrot.slane %v627, 1
          %717 = vrot.lane.b32.xlu0 %v627, 68
          %v718 = vpop.permute.xlu0 %717
          %719 = vrot.lane.b32.xlu0 %v716, 68
          %v720 = vpop.permute.xlu0 %719
          %v723 = vsub.f32 %v708, %v718
          %v724 = vsub.f32 %v715, %v720
          %v725 = vand.u32 2147483647, %v723
          %v726 = vand.u32 2147483647, %v724
          %vm727 = vcmp.lt.f32.partialorder %v725, 1.0
          %vm728 = vcmp.lt.f32.partialorder %v726, 1.0
          %v729 = vmul.f32 %v723, 0.5
          %v730 = vmul.f32 %v724, 0.5
          %v731 = vmul.f32 %v729, %v723
          %v732 = vmul.f32 %v730, %v724
          %v733 = vsub.f32 %v725, 0.5
          %v734 = vsub.f32 %v726, 0.5
          %v735 = vsel %vm727, %v731, %v733
          %v736 = vsel %vm728, %v732, %v734
          %s737 = scalar_lea.smem [#allocation3], 0
          %738 = sst [smem:[%s737]] %s319
          %s739 = scalar_lea.smem [#allocation3], 2
          %740 = sst [smem:[%s739]] %s360
          %s741 = scalar_lea.smem [#allocation3], 3
          %742 = sst [smem:[%s741]] %s391
          %s743 = scalar_lea.smem [#allocation3], 4
          %744 = sst [smem:[%s743]] %s420
          %s745 = scalar_lea.smem [#allocation3], 5
          %746 = sst [smem:[%s745]] %s449
          %s747 = scalar_lea.smem [#allocation3], 6
          %748 = sst [smem:[%s747]] %s475
          %s749 = scalar_lea.smem [#allocation3], 7
          %750 = sst [smem:[%s749]] %s501
          %s751 = scalar_lea.smem [#allocation3], 8
          %752 = sst [smem:[%s751]] %s685
          %s753 = scalar_lea.smem [#allocation3], 9
          %754 = sst [smem:[%s753]] %s672
          %v755 = vrot.slane %v628, 1
          %756 = vrot.lane.b32.xlu0 %v627, 8
          %v757 = vpop.permute.xlu0 %756
          %758 = vrot.lane.b32.xlu0 %v628, 8
          %v759 = vpop.permute.xlu0 %758
          %760 = vrot.lane.b32.xlu0 %v716, 8
          %v761 = vpop.permute.xlu0 %760
          %762 = vrot.lane.b32.xlu0 %v755, 8
          %v763 = vpop.permute.xlu0 %762
          %vm764 = vcmask 64512
          %v765 = vsel %vm764, %v757, %v759
          %v766 = vsel %vm764, %v761, %v763
          %v769 = vmul.f32 %v735, %v765
          %v770 = vmul.f32 %v736, %v766
          %v773 = vrot.slane %v770, 7
          %v774 = vsel %vm555, %v773, %v769
          %vm776 = vcmask 484352
          %v777 = vsel %vm776, %v774, 0.0
          %778 = vadd.xlane.f32.xlu0 %v777
          %v779 = vpop.xlane.xlu0 %778
          %v780 = vrot.slane %v779, 4
          %v781 = vadd.f32 %v779, %v780
          %v782 = vrot.slane %v781, 2
          %v783 = vadd.f32 %v781, %v782
          %v784 = vrot.slane %v783, 1
          %v785 = vadd.f32 %v783, %v784
          %s786 = vtos %v785
          %s787 = scalar_lea.smem [#allocation3], 10
          %788 = sst [smem:[%s787]] %s786
          %v789 = vsel %vm776, %v765, 0.0
          %790 = vadd.xlane.f32.xlu0 %v789
          %v791 = vpop.xlane.xlu0 %790
          %v792 = vrot.slane %v791, 4
          %v793 = vadd.f32 %v791, %v792
          %v794 = vrot.slane %v793, 2
          %v795 = vadd.f32 %v793, %v794
          %v796 = vrot.slane %v795, 1
          %v797 = vadd.f32 %v795, %v796
          %s798 = vtos %v797
          %s799 = scalar_lea.smem [#allocation3], 11
          %800 = sst [smem:[%s799]] %s798
        $region44: #{_loss_core.1} parent=39 // pred_fallthru
          _
        %v801 = vld [vmem:[%s255] sm:$0xff]
        %v802 = vld [vmem:[%s255 + $0x8] sm:$0xff]
        %v803 = vld [vmem:[%s255 + $0x10] sm:$0xff]
        %v804 = vld [vmem:[%s255 + $0x18] sm:$0xff]
        %v805 = vld [vmem:[%s255 + $0x20] sm:$0xff]
        %v806 = vld [vmem:[%s255 + $0x28] sm:$0xff]
        %v807 = vld [vmem:[%s255 + $0x30] sm:$0xff]
        %v808 = vld [vmem:[%s255 + $0x38] sm:$0xff]
        %v809 = vld [vmem:[%s255 + $0x40] sm:$0xff]
        %v810 = vld [vmem:[%s255 + $0x48] sm:$0xff]
        %v811 = vld [vmem:[%s255 + $0x50] sm:$0xff]
        %v812 = vld [vmem:[%s255 + $0x58] sm:$0xff]
        %v813 = vld [vmem:[%s255 + $0x60] sm:$0xff]
        %v814 = vld [vmem:[%s255 + $0x68] sm:$0xff]
        %v815 = vld [vmem:[%s255 + $0x70] sm:$0xff]
        %v816 = vld [vmem:[%s255 + $0x78] sm:$0xff]
        %v817 = vld [vmem:[%s255 + $0x80] sm:$0xff]
        %v818 = vld [vmem:[%s255 + $0x88] sm:$0xff]
        %v819 = vld [vmem:[%s255 + $0x90] sm:$0xff]
        %v820 = vld [vmem:[%s255 + $0x98] sm:$0xff]
        %v821 = vld [vmem:[%s255 + $0xa0] sm:$0xff]
        %v822 = vld [vmem:[%s255 + $0xa8] sm:$0xff]
        %v823 = vld [vmem:[%s255 + $0xb0] sm:$0xff]
        %v824 = vld [vmem:[%s255 + $0xb8] sm:$0xff]
        %v825 = vld [vmem:[%s255 + $0xc0] sm:$0xff]
        %v826 = vld [vmem:[%s255 + $0xc8] sm:$0xff]
        %v827 = vld [vmem:[%s255 + $0xd0] sm:$0xff]
        %v828 = vld [vmem:[%s255 + $0xd8] sm:$0xff]
        %v829 = vld [vmem:[%s255 + $0xe0] sm:$0xff]
        %v830 = vld [vmem:[%s255 + $0xe8] sm:$0xff]
        %v831 = vld [vmem:[%s255 + $0xf0] sm:$0xff]
        %v832 = vld [vmem:[%s255 + $0xf8] sm:$0xff]
        %v833 = vld [vmem:[%s255 + $0x100] sm:$0xff]
        %v834 = vld [vmem:[%s255 + $0x108] sm:$0xff]
        %v835 = vld [vmem:[%s255 + $0x110] sm:$0xff]
        %v836 = vld [vmem:[%s255 + $0x118] sm:$0xff]
        %v837 = vld [vmem:[%s255 + $0x120] sm:$0xff]
        %v838 = vld [vmem:[%s255 + $0x128] sm:$0xff]
        %v839 = vld [vmem:[%s255 + $0x130] sm:$0xff]
        %v840 = vld [vmem:[%s255 + $0x138] sm:$0xff]
        %v841 = vld [vmem:[%s255 + $0x140] sm:$0xff]
        %v842 = vld [vmem:[%s255 + $0x148] sm:$0xff]
        %v843 = vld [vmem:[%s255 + $0x150] sm:$0xff]
        %v844 = vld [vmem:[%s255 + $0x158] sm:$0xff]
        %v845 = vld [vmem:[%s255 + $0x160] sm:$0xff]
        %v846 = vld [vmem:[%s255 + $0x168] sm:$0xff]
        %v847 = vld [vmem:[%s255 + $0x170] sm:$0xff]
        %v848 = vld [vmem:[%s255 + $0x178] sm:$0xff]
        %v849 = vld [vmem:[%s255 + $0x180] sm:$0xff]
        %v850 = vld [vmem:[%s255 + $0x188] sm:$0xff]
        %v851 = vld [vmem:[%s255 + $0x190] sm:$0xff]
        %v852 = vld [vmem:[%s255 + $0x198] sm:$0xff]
        %v853 = vld [vmem:[%s255 + $0x1a0] sm:$0xff]
        %v854 = vld [vmem:[%s255 + $0x1a8] sm:$0xff]
        %v855 = vld [vmem:[%s255 + $0x1b0] sm:$0xff]
        %v856 = vld [vmem:[%s255 + $0x1b8] sm:$0xff]
        %v857 = vld [vmem:[%s255 + $0x1c0] sm:$0xff]
        %v858 = vld [vmem:[%s255 + $0x1c8] sm:$0xff]
        %v859 = vld [vmem:[%s255 + $0x1d0] sm:$0xff]
        %v860 = vld [vmem:[%s255 + $0x1d8] sm:$0xff]
        %v861 = vld [vmem:[%s255 + $0x1e0] sm:$0xff]
        %v862 = vld [vmem:[%s255 + $0x1e8] sm:$0xff]
        %v863 = vld [vmem:[%s255 + $0x1f0] sm:$0xff]
        %v864 = vld [vmem:[%s255 + $0x1f8] sm:$0xff]
        %v865 = vld [vmem:[%s255 + $0x200] sm:$0xff]
        %v866 = vld [vmem:[%s255 + $0x208] sm:$0xff]
        %v867 = vld [vmem:[%s255 + $0x210] sm:$0xff]
        %v868 = vld [vmem:[%s255 + $0x218] sm:$0xff]
        %v869 = vld [vmem:[%s255 + $0x220] sm:$0xff]
        %v870 = vld [vmem:[%s255 + $0x228] sm:$0xff]
        %v871 = vld [vmem:[%s255 + $0x230] sm:$0xff]
        %v872 = vld [vmem:[%s255 + $0x238] sm:$0xff]
        %v873 = vld [vmem:[%s255 + $0x240] sm:$0xff]
        %v874 = vld [vmem:[%s255 + $0x248] sm:$0xff]
        %v875 = vld [vmem:[%s255 + $0x250] sm:$0xff]
        %v876 = vld [vmem:[%s255 + $0x258] sm:$0xff]
        %v877 = vld [vmem:[%s255 + $0x260] sm:$0xff]
        %v878 = vld [vmem:[%s255 + $0x268] sm:$0xff]
        %v879 = vld [vmem:[%s255 + $0x270] sm:$0xff]
        %v880 = vld [vmem:[%s255 + $0x278] sm:$0xff]
        %v881 = vld [vmem:[%s255 + $0x280] sm:$0xff]
        %v882 = vld [vmem:[%s255 + $0x288] sm:$0xff]
        %v883 = vld [vmem:[%s255 + $0x290] sm:$0xff]
        %v884 = vld [vmem:[%s255 + $0x298] sm:$0xff]
        %v885 = vld [vmem:[%s255 + $0x2a0] sm:$0xff]
        %v886 = vld [vmem:[%s255 + $0x2a8] sm:$0xff]
        %v887 = vld [vmem:[%s255 + $0x2b0] sm:$0xff]
        %v888 = vld [vmem:[%s255 + $0x2b8] sm:$0xff]
        %v889 = vld [vmem:[%s255 + $0x2c0] sm:$0xff]
        %v890 = vld [vmem:[%s255 + $0x2c8] sm:$0xff]
        %v891 = vld [vmem:[%s255 + $0x2d0] sm:$0xff]
        %v892 = vld [vmem:[%s255 + $0x2d8] sm:$0xff]
        %v893 = vld [vmem:[%s255 + $0x2e0] sm:$0xff]
        %v894 = vld [vmem:[%s255 + $0x2e8] sm:$0xff]
        %v895 = vld [vmem:[%s255 + $0x2f0] sm:$0xff]
        %v896 = vld [vmem:[%s255 + $0x2f8] sm:$0xff]
        %v897 = vld [vmem:[%s255 + $0x300] sm:$0xff]
        %v898 = vld [vmem:[%s255 + $0x308] sm:$0xff]
        %v899 = vld [vmem:[%s255 + $0x310] sm:$0xff]
        %v900 = vld [vmem:[%s255 + $0x318] sm:$0xff]
        %v901 = vld [vmem:[%s255 + $0x320] sm:$0xff]
        %v902 = vld [vmem:[%s255 + $0x328] sm:$0xff]
        %v903 = vld [vmem:[%s255 + $0x330] sm:$0xff]
        %v904 = vld [vmem:[%s255 + $0x338] sm:$0xff]
        %v905 = vld [vmem:[%s255 + $0x340] sm:$0xff]
        %v906 = vld [vmem:[%s255 + $0x348] sm:$0xff]
        %v907 = vld [vmem:[%s255 + $0x350] sm:$0xff]
        %v908 = vld [vmem:[%s255 + $0x358] sm:$0xff]
        %v909 = vld [vmem:[%s255 + $0x360] sm:$0xff]
        %v910 = vld [vmem:[%s255 + $0x368] sm:$0xff]
        %v911 = vld [vmem:[%s255 + $0x370] sm:$0xff]
        %v912 = vld [vmem:[%s255 + $0x378] sm:$0xff]
        %v913 = vld [vmem:[%s255 + $0x380] sm:$0xff]
        %v914 = vld [vmem:[%s255 + $0x388] sm:$0xff]
        %v915 = vld [vmem:[%s255 + $0x390] sm:$0xff]
        %v916 = vld [vmem:[%s255 + $0x398] sm:$0xff]
        %v917 = vld [vmem:[%s255 + $0x3a0] sm:$0xff]
        %v918 = vld [vmem:[%s255 + $0x3a8] sm:$0xff]
        %v919 = vld [vmem:[%s255 + $0x3b0] sm:$0xff]
        %v920 = vld [vmem:[%s255 + $0x3b8] sm:$0xff]
        %v921 = vld [vmem:[%s255 + $0x3c0] sm:$0xff]
        %v922 = vld [vmem:[%s255 + $0x3c8] sm:$0xff]
        %v923 = vld [vmem:[%s255 + $0x3d0] sm:$0xff]
        %v924 = vld [vmem:[%s255 + $0x3d8] sm:$0xff]
        %v925 = vld [vmem:[%s255 + $0x3e0] sm:$0xff]
        %v926 = vld [vmem:[%s255 + $0x3e8] sm:$0xff]
        %v927 = vld [vmem:[%s255 + $0x3f0] sm:$0xff]
        %v928 = vld [vmem:[%s255 + $0x3f8] sm:$0xff]
        %v929 = vld [vmem:[%s255 + $0x400] sm:$0xff]
        %v930 = vld [vmem:[%s255 + $0x408] sm:$0xff]
        %v931 = vld [vmem:[%s255 + $0x410] sm:$0xff]
        %v932 = vld [vmem:[%s255 + $0x418] sm:$0xff]
        %v933 = vld [vmem:[%s255 + $0x420] sm:$0xff]
        %v934 = vld [vmem:[%s255 + $0x428] sm:$0xff]
        %v935 = vld [vmem:[%s255 + $0x430] sm:$0xff]
        %v936 = vld [vmem:[%s255 + $0x438] sm:$0xff]
        %v937 = vld [vmem:[%s255 + $0x440] sm:$0xff]
        %v938 = vld [vmem:[%s255 + $0x448] sm:$0xff]
        %v939 = vld [vmem:[%s255 + $0x450] sm:$0xff]
        %v940 = vld [vmem:[%s255 + $0x458] sm:$0xff]
        %v941 = vld [vmem:[%s255 + $0x460] sm:$0xff]
        %v942 = vld [vmem:[%s255 + $0x468] sm:$0xff]
        %v943 = vld [vmem:[%s255 + $0x470] sm:$0xff]
        %v944 = vld [vmem:[%s255 + $0x478] sm:$0xff]
        %v945 = vld [vmem:[%s255 + $0x480] sm:$0xff]
        %v946 = vld [vmem:[%s255 + $0x488] sm:$0xff]
        %v947 = vld [vmem:[%s255 + $0x490] sm:$0xff]
        %v948 = vld [vmem:[%s255 + $0x498] sm:$0xff]
        %v949 = vld [vmem:[%s255 + $0x4a0] sm:$0xff]
        %v950 = vld [vmem:[%s255 + $0x4a8] sm:$0xff]
        %v951 = vld [vmem:[%s255 + $0x4b0] sm:$0xff]
        %v952 = vld [vmem:[%s255 + $0x4b8] sm:$0xff]
        %v953 = vld [vmem:[%s255 + $0x4c0] sm:$0xff]
        %v954 = vld [vmem:[%s255 + $0x4c8] sm:$0xff]
        %v955 = vld [vmem:[%s255 + $0x4d0] sm:$0xff]
        %v956 = vld [vmem:[%s255 + $0x4d8] sm:$0xff]
        %v957 = vld [vmem:[%s255 + $0x4e0] sm:$0xff]
        %v958 = vld [vmem:[%s255 + $0x4e8] sm:$0xff]
        %v959 = vld [vmem:[%s255 + $0x4f0] sm:$0xff]
        %v960 = vld [vmem:[%s255 + $0x4f8] sm:$0xff]
        %v961 = vld [vmem:[%s255 + $0x500] sm:$0xff]
        %v962 = vld [vmem:[%s255 + $0x508] sm:$0xff]
        %v963 = vld [vmem:[%s255 + $0x510] sm:$0xff]
        %v964 = vld [vmem:[%s255 + $0x518] sm:$0xff]
        %v965 = vld [vmem:[%s255 + $0x520] sm:$0xff]
        %v966 = vld [vmem:[%s255 + $0x528] sm:$0xff]
        %v967 = vld [vmem:[%s255 + $0x530] sm:$0xff]
        %v968 = vld [vmem:[%s255 + $0x538] sm:$0xff]
        %v969 = vld [vmem:[%s255 + $0x540] sm:$0xff]
        %v970 = vld [vmem:[%s255 + $0x548] sm:$0xff]
        %v971 = vld [vmem:[%s255 + $0x550] sm:$0xff]
        %v972 = vld [vmem:[%s255 + $0x558] sm:$0xff]
        %v973 = vld [vmem:[%s255 + $0x560] sm:$0xff]
        %v974 = vld [vmem:[%s255 + $0x568] sm:$0xff]
        %v975 = vld [vmem:[%s255 + $0x570] sm:$0xff]
        %v976 = vld [vmem:[%s255 + $0x578] sm:$0xff]
        %v977 = vld [vmem:[%s255 + $0x580] sm:$0xff]
        %v978 = vld [vmem:[%s255 + $0x588] sm:$0xff]
        %v979 = vld [vmem:[%s255 + $0x590] sm:$0xff]
        %v980 = vld [vmem:[%s255 + $0x598] sm:$0xff]
        %v981 = vld [vmem:[%s255 + $0x5a0] sm:$0xff]
        %v982 = vld [vmem:[%s255 + $0x5a8] sm:$0xff]
        %v983 = vld [vmem:[%s255 + $0x5b0] sm:$0xff]
        %v984 = vld [vmem:[%s255 + $0x5b8] sm:$0xff]
        %v985 = vld [vmem:[%s255 + $0x5c0] sm:$0xff]
        %v986 = vld [vmem:[%s255 + $0x5c8] sm:$0xff]
        %v987 = vld [vmem:[%s255 + $0x5d0] sm:$0xff]
        %v988 = vld [vmem:[%s255 + $0x5d8] sm:$0xff]
        %v989 = vld [vmem:[%s255 + $0x5e0] sm:$0xff]
        %v990 = vld [vmem:[%s255 + $0x5e8] sm:$0xff]
        %v991 = vld [vmem:[%s255 + $0x5f0] sm:$0xff]
        %v992 = vld [vmem:[%s255 + $0x5f8] sm:$0xff]
        %v993 = vld [vmem:[%s255 + $0x600] sm:$0xff]
        %v994 = vld [vmem:[%s255 + $0x608] sm:$0xff]
        %v995 = vld [vmem:[%s255 + $0x610] sm:$0xff]
        %v996 = vld [vmem:[%s255 + $0x618] sm:$0xff]
        %v997 = vld [vmem:[%s255 + $0x620] sm:$0xff]
        %v998 = vld [vmem:[%s255 + $0x628] sm:$0xff]
        %v999 = vld [vmem:[%s255 + $0x630] sm:$0xff]
        %v1000 = vld [vmem:[%s255 + $0x638] sm:$0xff]
        %v1001 = vld [vmem:[%s255 + $0x640] sm:$0xff]
        %v1002 = vld [vmem:[%s255 + $0x648] sm:$0xff]
        %v1003 = vld [vmem:[%s255 + $0x650] sm:$0xff]
        %v1004 = vld [vmem:[%s255 + $0x658] sm:$0xff]
        %v1005 = vld [vmem:[%s255 + $0x660] sm:$0xff]
        %v1006 = vld [vmem:[%s255 + $0x668] sm:$0xff]
        %v1007 = vld [vmem:[%s255 + $0x670] sm:$0xff]
        %v1008 = vld [vmem:[%s255 + $0x678] sm:$0xff]
        %v1009 = vld [vmem:[%s255 + $0x680] sm:$0xff]
        %v1010 = vld [vmem:[%s255 + $0x688] sm:$0xff]
        %v1011 = vld [vmem:[%s255 + $0x690] sm:$0xff]
        %v1012 = vld [vmem:[%s255 + $0x698] sm:$0xff]
        %v1013 = vld [vmem:[%s255 + $0x6a0] sm:$0xff]
        %v1014 = vld [vmem:[%s255 + $0x6a8] sm:$0xff]
        %v1015 = vld [vmem:[%s255 + $0x6b0] sm:$0xff]
        %v1016 = vld [vmem:[%s255 + $0x6b8] sm:$0xff]
        %v1017 = vld [vmem:[%s255 + $0x6c0] sm:$0xff]
        %v1018 = vld [vmem:[%s255 + $0x6c8] sm:$0xff]
        %v1019 = vld [vmem:[%s255 + $0x6d0] sm:$0xff]
        %v1020 = vld [vmem:[%s255 + $0x6d8] sm:$0xff]
        %v1021 = vld [vmem:[%s255 + $0x6e0] sm:$0xff]
        %v1022 = vld [vmem:[%s255 + $0x6e8] sm:$0xff]
        %v1023 = vld [vmem:[%s255 + $0x6f0] sm:$0xff]
        %v1024 = vld [vmem:[%s255 + $0x6f8] sm:$0xff]
        %v1025 = vld [vmem:[%s255 + $0x700] sm:$0xff]
        %v1026 = vld [vmem:[%s255 + $0x708] sm:$0xff]
        %v1027 = vld [vmem:[%s255 + $0x710] sm:$0xff]
        %v1028 = vld [vmem:[%s255 + $0x718] sm:$0xff]
        %v1029 = vld [vmem:[%s255 + $0x720] sm:$0xff]
        %v1030 = vld [vmem:[%s255 + $0x728] sm:$0xff]
        %v1031 = vld [vmem:[%s255 + $0x730] sm:$0xff]
        %v1032 = vld [vmem:[%s255 + $0x738] sm:$0xff]
        %v1033 = vld [vmem:[%s255 + $0x740] sm:$0xff]
        %v1034 = vld [vmem:[%s255 + $0x748] sm:$0xff]
        %v1035 = vld [vmem:[%s255 + $0x750] sm:$0xff]
        %v1036 = vld [vmem:[%s255 + $0x758] sm:$0xff]
        %v1037 = vld [vmem:[%s255 + $0x760] sm:$0xff]
        %v1038 = vld [vmem:[%s255 + $0x768] sm:$0xff]
        %v1039 = vld [vmem:[%s255 + $0x770] sm:$0xff]
        %v1040 = vld [vmem:[%s255 + $0x778] sm:$0xff]
        %v1041 = vld [vmem:[%s255 + $0x780] sm:$0xff]
        %v1042 = vld [vmem:[%s255 + $0x788] sm:$0xff]
        %v1043 = vld [vmem:[%s255 + $0x790] sm:$0xff]
        %v1044 = vld [vmem:[%s255 + $0x798] sm:$0xff]
        %v1045 = vld [vmem:[%s255 + $0x7a0] sm:$0xff]
        %v1046 = vld [vmem:[%s255 + $0x7a8] sm:$0xff]
        %v1047 = vld [vmem:[%s255 + $0x7b0] sm:$0xff]
        %v1048 = vld [vmem:[%s255 + $0x7b8] sm:$0xff]
        %v1049 = vld [vmem:[%s255 + $0x7c0] sm:$0xff]
        %v1050 = vld [vmem:[%s255 + $0x7c8] sm:$0xff]
        %v1051 = vld [vmem:[%s255 + $0x7d0] sm:$0xff]
        %v1052 = vld [vmem:[%s255 + $0x7d8] sm:$0xff]
        %v1053 = vld [vmem:[%s255 + $0x7e0] sm:$0xff]
        %v1054 = vld [vmem:[%s255 + $0x7e8] sm:$0xff]
        %v1055 = vld [vmem:[%s255 + $0x7f0] sm:$0xff]
        %v1056 = vld [vmem:[%s255 + $0x7f8] sm:$0xff]
        %v1057 = vld [vmem:[%s269] sm:$0xff]
        %v1058 = vld [vmem:[%s269 + $0x8] sm:$0xff]
        %v1059 = vld [vmem:[%s269 + $0x10] sm:$0xff]
        %v1060 = vld [vmem:[%s269 + $0x18] sm:$0xff]
        %v1061 = vld [vmem:[%s269 + $0x20] sm:$0xff]
        %v1062 = vld [vmem:[%s269 + $0x28] sm:$0xff]
        %v1063 = vld [vmem:[%s269 + $0x30] sm:$0xff]
        %v1064 = vld [vmem:[%s269 + $0x38] sm:$0xff]
        %v1065 = vld [vmem:[%s269 + $0x40] sm:$0xff]
        %v1066 = vld [vmem:[%s269 + $0x48] sm:$0xff]
        %v1067 = vld [vmem:[%s269 + $0x50] sm:$0xff]
        %v1068 = vld [vmem:[%s269 + $0x58] sm:$0xff]
        %v1069 = vld [vmem:[%s269 + $0x60] sm:$0xff]
        %v1070 = vld [vmem:[%s269 + $0x68] sm:$0xff]
        %v1071 = vld [vmem:[%s269 + $0x70] sm:$0xff]
        %v1072 = vld [vmem:[%s269 + $0x78] sm:$0xff]
        %v1073 = vld [vmem:[%s269 + $0x80] sm:$0xff]
        %v1074 = vld [vmem:[%s269 + $0x88] sm:$0xff]
        %v1075 = vld [vmem:[%s269 + $0x90] sm:$0xff]
        %v1076 = vld [vmem:[%s269 + $0x98] sm:$0xff]
        %v1077 = vld [vmem:[%s269 + $0xa0] sm:$0xff]
        %v1078 = vld [vmem:[%s269 + $0xa8] sm:$0xff]
        %v1079 = vld [vmem:[%s269 + $0xb0] sm:$0xff]
        %v1080 = vld [vmem:[%s269 + $0xb8] sm:$0xff]
        %v1081 = vld [vmem:[%s269 + $0xc0] sm:$0xff]
        %v1082 = vld [vmem:[%s269 + $0xc8] sm:$0xff]
        %v1083 = vld [vmem:[%s269 + $0xd0] sm:$0xff]
        %v1084 = vld [vmem:[%s269 + $0xd8] sm:$0xff]
        %v1085 = vld [vmem:[%s269 + $0xe0] sm:$0xff]
        %v1086 = vld [vmem:[%s269 + $0xe8] sm:$0xff]
        %v1087 = vld [vmem:[%s269 + $0xf0] sm:$0xff]
        %v1088 = vld [vmem:[%s269 + $0xf8] sm:$0xff]
        %v1089 = vld [vmem:[%s269 + $0x100] sm:$0xff]
        %v1090 = vld [vmem:[%s269 + $0x108] sm:$0xff]
        %v1091 = vld [vmem:[%s269 + $0x110] sm:$0xff]
        %v1092 = vld [vmem:[%s269 + $0x118] sm:$0xff]
        %v1093 = vld [vmem:[%s269 + $0x120] sm:$0xff]
        %v1094 = vld [vmem:[%s269 + $0x128] sm:$0xff]
        %v1095 = vld [vmem:[%s269 + $0x130] sm:$0xff]
        %v1096 = vld [vmem:[%s269 + $0x138] sm:$0xff]
        %v1097 = vld [vmem:[%s269 + $0x140] sm:$0xff]
        %v1098 = vld [vmem:[%s269 + $0x148] sm:$0xff]
        %v1099 = vld [vmem:[%s269 + $0x150] sm:$0xff]
        %v1100 = vld [vmem:[%s269 + $0x158] sm:$0xff]
        %v1101 = vld [vmem:[%s269 + $0x160] sm:$0xff]
        %v1102 = vld [vmem:[%s269 + $0x168] sm:$0xff]
        %v1103 = vld [vmem:[%s269 + $0x170] sm:$0xff]
        %v1104 = vld [vmem:[%s269 + $0x178] sm:$0xff]
        %v1105 = vld [vmem:[%s269 + $0x180] sm:$0xff]
        %v1106 = vld [vmem:[%s269 + $0x188] sm:$0xff]
        %v1107 = vld [vmem:[%s269 + $0x190] sm:$0xff]
        %v1108 = vld [vmem:[%s269 + $0x198] sm:$0xff]
        %v1109 = vld [vmem:[%s269 + $0x1a0] sm:$0xff]
        %v1110 = vld [vmem:[%s269 + $0x1a8] sm:$0xff]
        %v1111 = vld [vmem:[%s269 + $0x1b0] sm:$0xff]
        %v1112 = vld [vmem:[%s269 + $0x1b8] sm:$0xff]
        %v1113 = vld [vmem:[%s269 + $0x1c0] sm:$0xff]
        %v1114 = vld [vmem:[%s269 + $0x1c8] sm:$0xff]
        %v1115 = vld [vmem:[%s269 + $0x1d0] sm:$0xff]
        %v1116 = vld [vmem:[%s269 + $0x1d8] sm:$0xff]
        %v1117 = vld [vmem:[%s269 + $0x1e0] sm:$0xff]
        %v1118 = vld [vmem:[%s269 + $0x1e8] sm:$0xff]
        %v1119 = vld [vmem:[%s269 + $0x1f0] sm:$0xff]
        %v1120 = vld [vmem:[%s269 + $0x1f8] sm:$0xff]
        %v1121 = vld [vmem:[%s269 + $0x200] sm:$0xff]
        %v1122 = vld [vmem:[%s269 + $0x208] sm:$0xff]
        %v1123 = vld [vmem:[%s269 + $0x210] sm:$0xff]
        %v1124 = vld [vmem:[%s269 + $0x218] sm:$0xff]
        %v1125 = vld [vmem:[%s269 + $0x220] sm:$0xff]
        %v1126 = vld [vmem:[%s269 + $0x228] sm:$0xff]
        %v1127 = vld [vmem:[%s269 + $0x230] sm:$0xff]
        %v1128 = vld [vmem:[%s269 + $0x238] sm:$0xff]
        %v1129 = vld [vmem:[%s269 + $0x240] sm:$0xff]
        %v1130 = vld [vmem:[%s269 + $0x248] sm:$0xff]
        %v1131 = vld [vmem:[%s269 + $0x250] sm:$0xff]
        %v1132 = vld [vmem:[%s269 + $0x258] sm:$0xff]
        %v1133 = vld [vmem:[%s269 + $0x260] sm:$0xff]
        %v1134 = vld [vmem:[%s269 + $0x268] sm:$0xff]
        %v1135 = vld [vmem:[%s269 + $0x270] sm:$0xff]
        %v1136 = vld [vmem:[%s269 + $0x278] sm:$0xff]
        %v1137 = vld [vmem:[%s269 + $0x280] sm:$0xff]
        %v1138 = vld [vmem:[%s269 + $0x288] sm:$0xff]
        %v1139 = vld [vmem:[%s269 + $0x290] sm:$0xff]
        %v1140 = vld [vmem:[%s269 + $0x298] sm:$0xff]
        %v1141 = vld [vmem:[%s269 + $0x2a0] sm:$0xff]
        %v1142 = vld [vmem:[%s269 + $0x2a8] sm:$0xff]
        %v1143 = vld [vmem:[%s269 + $0x2b0] sm:$0xff]
        %v1144 = vld [vmem:[%s269 + $0x2b8] sm:$0xff]
        %v1145 = vld [vmem:[%s269 + $0x2c0] sm:$0xff]
        %v1146 = vld [vmem:[%s269 + $0x2c8] sm:$0xff]
        %v1147 = vld [vmem:[%s269 + $0x2d0] sm:$0xff]
        %v1148 = vld [vmem:[%s269 + $0x2d8] sm:$0xff]
        %v1149 = vld [vmem:[%s269 + $0x2e0] sm:$0xff]
        %v1150 = vld [vmem:[%s269 + $0x2e8] sm:$0xff]
        %v1151 = vld [vmem:[%s269 + $0x2f0] sm:$0xff]
        %v1152 = vld [vmem:[%s269 + $0x2f8] sm:$0xff]
        %v1153 = vld [vmem:[%s269 + $0x300] sm:$0xff]
        %v1154 = vld [vmem:[%s269 + $0x308] sm:$0xff]
        %v1155 = vld [vmem:[%s269 + $0x310] sm:$0xff]
        %v1156 = vld [vmem:[%s269 + $0x318] sm:$0xff]
        %v1157 = vld [vmem:[%s269 + $0x320] sm:$0xff]
        %v1158 = vld [vmem:[%s269 + $0x328] sm:$0xff]
        %v1159 = vld [vmem:[%s269 + $0x330] sm:$0xff]
        %v1160 = vld [vmem:[%s269 + $0x338] sm:$0xff]
        %v1161 = vld [vmem:[%s269 + $0x340] sm:$0xff]
        %v1162 = vld [vmem:[%s269 + $0x348] sm:$0xff]
        %v1163 = vld [vmem:[%s269 + $0x350] sm:$0xff]
        %v1164 = vld [vmem:[%s269 + $0x358] sm:$0xff]
        %v1165 = vld [vmem:[%s269 + $0x360] sm:$0xff]
        %v1166 = vld [vmem:[%s269 + $0x368] sm:$0xff]
        %v1167 = vld [vmem:[%s269 + $0x370] sm:$0xff]
        %v1168 = vld [vmem:[%s269 + $0x378] sm:$0xff]
        %v1169 = vld [vmem:[%s269 + $0x380] sm:$0xff]
        %v1170 = vld [vmem:[%s269 + $0x388] sm:$0xff]
        %v1171 = vld [vmem:[%s269 + $0x390] sm:$0xff]
        %v1172 = vld [vmem:[%s269 + $0x398] sm:$0xff]
        %v1173 = vld [vmem:[%s269 + $0x3a0] sm:$0xff]
        %v1174 = vld [vmem:[%s269 + $0x3a8] sm:$0xff]
        %v1175 = vld [vmem:[%s269 + $0x3b0] sm:$0xff]
        %v1176 = vld [vmem:[%s269 + $0x3b8] sm:$0xff]
        %v1177 = vld [vmem:[%s269 + $0x3c0] sm:$0xff]
        %v1178 = vld [vmem:[%s269 + $0x3c8] sm:$0xff]
        %v1179 = vld [vmem:[%s269 + $0x3d0] sm:$0xff]
        %v1180 = vld [vmem:[%s269 + $0x3d8] sm:$0xff]
        %v1181 = vld [vmem:[%s269 + $0x3e0] sm:$0xff]
        %v1182 = vld [vmem:[%s269 + $0x3e8] sm:$0xff]
        %v1183 = vld [vmem:[%s269 + $0x3f0] sm:$0xff]
        %v1184 = vld [vmem:[%s269 + $0x3f8] sm:$0xff]
        %v1185 = vld [vmem:[%s269 + $0x400] sm:$0xff]
        %v1186 = vld [vmem:[%s269 + $0x408] sm:$0xff]
        %v1187 = vld [vmem:[%s269 + $0x410] sm:$0xff]
        %v1188 = vld [vmem:[%s269 + $0x418] sm:$0xff]
        %v1189 = vld [vmem:[%s269 + $0x420] sm:$0xff]
        %v1190 = vld [vmem:[%s269 + $0x428] sm:$0xff]
        %v1191 = vld [vmem:[%s269 + $0x430] sm:$0xff]
        %v1192 = vld [vmem:[%s269 + $0x438] sm:$0xff]
        %v1193 = vld [vmem:[%s269 + $0x440] sm:$0xff]
        %v1194 = vld [vmem:[%s269 + $0x448] sm:$0xff]
        %v1195 = vld [vmem:[%s269 + $0x450] sm:$0xff]
        %v1196 = vld [vmem:[%s269 + $0x458] sm:$0xff]
        %v1197 = vld [vmem:[%s269 + $0x460] sm:$0xff]
        %v1198 = vld [vmem:[%s269 + $0x468] sm:$0xff]
        %v1199 = vld [vmem:[%s269 + $0x470] sm:$0xff]
        %v1200 = vld [vmem:[%s269 + $0x478] sm:$0xff]
        %v1201 = vld [vmem:[%s269 + $0x480] sm:$0xff]
        %v1202 = vld [vmem:[%s269 + $0x488] sm:$0xff]
        %v1203 = vld [vmem:[%s269 + $0x490] sm:$0xff]
        %v1204 = vld [vmem:[%s269 + $0x498] sm:$0xff]
        %v1205 = vld [vmem:[%s269 + $0x4a0] sm:$0xff]
        %v1206 = vld [vmem:[%s269 + $0x4a8] sm:$0xff]
        %v1207 = vld [vmem:[%s269 + $0x4b0] sm:$0xff]
        %v1208 = vld [vmem:[%s269 + $0x4b8] sm:$0xff]
        %v1209 = vld [vmem:[%s269 + $0x4c0] sm:$0xff]
        %v1210 = vld [vmem:[%s269 + $0x4c8] sm:$0xff]
        %v1211 = vld [vmem:[%s269 + $0x4d0] sm:$0xff]
        %v1212 = vld [vmem:[%s269 + $0x4d8] sm:$0xff]
        %v1213 = vld [vmem:[%s269 + $0x4e0] sm:$0xff]
        %v1214 = vld [vmem:[%s269 + $0x4e8] sm:$0xff]
        %v1215 = vld [vmem:[%s269 + $0x4f0] sm:$0xff]
        %v1216 = vld [vmem:[%s269 + $0x4f8] sm:$0xff]
        %v1217 = vld [vmem:[%s269 + $0x500] sm:$0xff]
        %v1218 = vld [vmem:[%s269 + $0x508] sm:$0xff]
        %v1219 = vld [vmem:[%s269 + $0x510] sm:$0xff]
        %v1220 = vld [vmem:[%s269 + $0x518] sm:$0xff]
        %v1221 = vld [vmem:[%s269 + $0x520] sm:$0xff]
        %v1222 = vld [vmem:[%s269 + $0x528] sm:$0xff]
        %v1223 = vld [vmem:[%s269 + $0x530] sm:$0xff]
        %v1224 = vld [vmem:[%s269 + $0x538] sm:$0xff]
        %v1225 = vld [vmem:[%s269 + $0x540] sm:$0xff]
        %v1226 = vld [vmem:[%s269 + $0x548] sm:$0xff]
        %v1227 = vld [vmem:[%s269 + $0x550] sm:$0xff]
        %v1228 = vld [vmem:[%s269 + $0x558] sm:$0xff]
        %v1229 = vld [vmem:[%s269 + $0x560] sm:$0xff]
        %v1230 = vld [vmem:[%s269 + $0x568] sm:$0xff]
        %v1231 = vld [vmem:[%s269 + $0x570] sm:$0xff]
        %v1232 = vld [vmem:[%s269 + $0x578] sm:$0xff]
        %v1233 = vld [vmem:[%s269 + $0x580] sm:$0xff]
        %v1234 = vld [vmem:[%s269 + $0x588] sm:$0xff]
        %v1235 = vld [vmem:[%s269 + $0x590] sm:$0xff]
        %v1236 = vld [vmem:[%s269 + $0x598] sm:$0xff]
        %v1237 = vld [vmem:[%s269 + $0x5a0] sm:$0xff]
        %v1238 = vld [vmem:[%s269 + $0x5a8] sm:$0xff]
        %v1239 = vld [vmem:[%s269 + $0x5b0] sm:$0xff]
        %v1240 = vld [vmem:[%s269 + $0x5b8] sm:$0xff]
        %v1241 = vld [vmem:[%s269 + $0x5c0] sm:$0xff]
        %v1242 = vld [vmem:[%s269 + $0x5c8] sm:$0xff]
        %v1243 = vld [vmem:[%s269 + $0x5d0] sm:$0xff]
        %v1244 = vld [vmem:[%s269 + $0x5d8] sm:$0xff]
        %v1245 = vld [vmem:[%s269 + $0x5e0] sm:$0xff]
        %v1246 = vld [vmem:[%s269 + $0x5e8] sm:$0xff]
        %v1247 = vld [vmem:[%s269 + $0x5f0] sm:$0xff]
        %v1248 = vld [vmem:[%s269 + $0x5f8] sm:$0xff]
        %v1249 = vld [vmem:[%s269 + $0x600] sm:$0xff]
        %v1250 = vld [vmem:[%s269 + $0x608] sm:$0xff]
        %v1251 = vld [vmem:[%s269 + $0x610] sm:$0xff]
        %v1252 = vld [vmem:[%s269 + $0x618] sm:$0xff]
        %v1253 = vld [vmem:[%s269 + $0x620] sm:$0xff]
        %v1254 = vld [vmem:[%s269 + $0x628] sm:$0xff]
        %v1255 = vld [vmem:[%s269 + $0x630] sm:$0xff]
        %v1256 = vld [vmem:[%s269 + $0x638] sm:$0xff]
        %v1257 = vld [vmem:[%s269 + $0x640] sm:$0xff]
        %v1258 = vld [vmem:[%s269 + $0x648] sm:$0xff]
        %v1259 = vld [vmem:[%s269 + $0x650] sm:$0xff]
        %v1260 = vld [vmem:[%s269 + $0x658] sm:$0xff]
        %v1261 = vld [vmem:[%s269 + $0x660] sm:$0xff]
        %v1262 = vld [vmem:[%s269 + $0x668] sm:$0xff]
        %v1263 = vld [vmem:[%s269 + $0x670] sm:$0xff]
        %v1264 = vld [vmem:[%s269 + $0x678] sm:$0xff]
        %v1265 = vld [vmem:[%s269 + $0x680] sm:$0xff]
        %v1266 = vld [vmem:[%s269 + $0x688] sm:$0xff]
        %v1267 = vld [vmem:[%s269 + $0x690] sm:$0xff]
        %v1268 = vld [vmem:[%s269 + $0x698] sm:$0xff]
        %v1269 = vld [vmem:[%s269 + $0x6a0] sm:$0xff]
        %v1270 = vld [vmem:[%s269 + $0x6a8] sm:$0xff]
        %v1271 = vld [vmem:[%s269 + $0x6b0] sm:$0xff]
        %v1272 = vld [vmem:[%s269 + $0x6b8] sm:$0xff]
        %v1273 = vld [vmem:[%s269 + $0x6c0] sm:$0xff]
        %v1274 = vld [vmem:[%s269 + $0x6c8] sm:$0xff]
        %v1275 = vld [vmem:[%s269 + $0x6d0] sm:$0xff]
        %v1276 = vld [vmem:[%s269 + $0x6d8] sm:$0xff]
        %v1277 = vld [vmem:[%s269 + $0x6e0] sm:$0xff]
        %v1278 = vld [vmem:[%s269 + $0x6e8] sm:$0xff]
        %v1279 = vld [vmem:[%s269 + $0x6f0] sm:$0xff]
        %v1280 = vld [vmem:[%s269 + $0x6f8] sm:$0xff]
        %v1281 = vld [vmem:[%s269 + $0x700] sm:$0xff]
        %v1282 = vld [vmem:[%s269 + $0x708] sm:$0xff]
        %v1283 = vld [vmem:[%s269 + $0x710] sm:$0xff]
        %v1284 = vld [vmem:[%s269 + $0x718] sm:$0xff]
        %v1285 = vld [vmem:[%s269 + $0x720] sm:$0xff]
        %v1286 = vld [vmem:[%s269 + $0x728] sm:$0xff]
        %v1287 = vld [vmem:[%s269 + $0x730] sm:$0xff]
        %v1288 = vld [vmem:[%s269 + $0x738] sm:$0xff]
        %v1289 = vld [vmem:[%s269 + $0x740] sm:$0xff]
        %v1290 = vld [vmem:[%s269 + $0x748] sm:$0xff]
        %v1291 = vld [vmem:[%s269 + $0x750] sm:$0xff]
        %v1292 = vld [vmem:[%s269 + $0x758] sm:$0xff]
        %v1293 = vld [vmem:[%s269 + $0x760] sm:$0xff]
        %v1294 = vld [vmem:[%s269 + $0x768] sm:$0xff]
        %v1295 = vld [vmem:[%s269 + $0x770] sm:$0xff]
        %v1296 = vld [vmem:[%s269 + $0x778] sm:$0xff]
        %v1297 = vld [vmem:[%s269 + $0x780] sm:$0xff]
        %v1298 = vld [vmem:[%s269 + $0x788] sm:$0xff]
        %v1299 = vld [vmem:[%s269 + $0x790] sm:$0xff]
        %v1300 = vld [vmem:[%s269 + $0x798] sm:$0xff]
        %v1301 = vld [vmem:[%s269 + $0x7a0] sm:$0xff]
        %v1302 = vld [vmem:[%s269 + $0x7a8] sm:$0xff]
        %v1303 = vld [vmem:[%s269 + $0x7b0] sm:$0xff]
        %v1304 = vld [vmem:[%s269 + $0x7b8] sm:$0xff]
        %v1305 = vld [vmem:[%s269 + $0x7c0] sm:$0xff]
        %v1306 = vld [vmem:[%s269 + $0x7c8] sm:$0xff]
        %v1307 = vld [vmem:[%s269 + $0x7d0] sm:$0xff]
        %v1308 = vld [vmem:[%s269 + $0x7d8] sm:$0xff]
        %v1309 = vld [vmem:[%s269 + $0x7e0] sm:$0xff]
        %v1310 = vld [vmem:[%s269 + $0x7e8] sm:$0xff]
        %v1311 = vld [vmem:[%s269 + $0x7f0] sm:$0xff]
        %v1312 = vld [vmem:[%s269 + $0x7f8] sm:$0xff]
        %p1313 = scmp.eq.s32.totalorder %s17, 1
        %s1314 = scalar_select %p1313, 352, 2048
        %v1315 = vlaneseq
        %v1316 = vshrl.u32 %v1315, 7
        %v1317 = vadd.s32 %v1316, 8
        %v1318 = vadd.s32 %v1316, 16
        %v1319 = vadd.s32 %v1316, 24
        %v1320 = vadd.s32 %v1316, 32
        %v1321 = vadd.s32 %v1316, 40
        %v1322 = vadd.s32 %v1316, 48
        %v1323 = vadd.s32 %v1316, 56
        %v1324 = vadd.s32 %v1316, 64
        %v1325 = vadd.s32 %v1316, 72
        %v1326 = vadd.s32 %v1316, 80
        %v1327 = vadd.s32 %v1316, 88
        %v1328 = vadd.s32 %v1316, 96
        %v1329 = vadd.s32 %v1316, 104
        %v1330 = vadd.s32 %v1316, 112
        %v1331 = vadd.s32 %v1316, 120
        %v1332 = vadd.s32 %v1316, 128
        %v1333 = vadd.s32 %v1316, 136
        %v1334 = vadd.s32 %v1316, 144
        %v1335 = vadd.s32 %v1316, 152
        %v1336 = vadd.s32 %v1316, 160
        %v1337 = vadd.s32 %v1316, 168
        %v1338 = vadd.s32 %v1316, 176
        %v1339 = vadd.s32 %v1316, 184
        %v1340 = vadd.s32 %v1316, 192
        %v1341 = vadd.s32 %v1316, 200
        %v1342 = vadd.s32 %v1316, 208
        %v1343 = vadd.s32 %v1316, 216
        %v1344 = vadd.s32 %v1316, 224
        %v1345 = vadd.s32 %v1316, 232
        %v1346 = vadd.s32 %v1316, 240
        %v1347 = vadd.s32 %v1316, 248
        %v1348 = vadd.s32 %v1316, 256
        %v1349 = vadd.s32 %v1316, 264
        %v1350 = vadd.s32 %v1316, 272
        %v1351 = vadd.s32 %v1316, 280
        %v1352 = vadd.s32 %v1316, 288
        %v1353 = vadd.s32 %v1316, 296
        %v1354 = vadd.s32 %v1316, 304
        %v1355 = vadd.s32 %v1316, 312
        %v1356 = vadd.s32 %v1316, 320
        %v1357 = vadd.s32 %v1316, 328
        %v1358 = vadd.s32 %v1316, 336
        %v1359 = vadd.s32 %v1316, 344
        %v1360 = vadd.s32 %v1316, 352
        %v1361 = vadd.s32 %v1316, 360
        %v1362 = vadd.s32 %v1316, 368
        %v1363 = vadd.s32 %v1316, 376
        %v1364 = vadd.s32 %v1316, 384
        %v1365 = vadd.s32 %v1316, 392
        %v1366 = vadd.s32 %v1316, 400
        %v1367 = vadd.s32 %v1316, 408
        %v1368 = vadd.s32 %v1316, 416
        %v1369 = vadd.s32 %v1316, 424
        %v1370 = vadd.s32 %v1316, 432
        %v1371 = vadd.s32 %v1316, 440
        %v1372 = vadd.s32 %v1316, 448
        %v1373 = vadd.s32 %v1316, 456
        %v1374 = vadd.s32 %v1316, 464
        %v1375 = vadd.s32 %v1316, 472
        %v1376 = vadd.s32 %v1316, 480
        %v1377 = vadd.s32 %v1316, 488
        %v1378 = vadd.s32 %v1316, 496
        %v1379 = vadd.s32 %v1316, 504
        %v1380 = vadd.s32 %v1316, 512
        %v1381 = vadd.s32 %v1316, 520
        %v1382 = vadd.s32 %v1316, 528
        %v1383 = vadd.s32 %v1316, 536
        %v1384 = vadd.s32 %v1316, 544
        %v1385 = vadd.s32 %v1316, 552
        %v1386 = vadd.s32 %v1316, 560
        %v1387 = vadd.s32 %v1316, 568
        %v1388 = vadd.s32 %v1316, 576
        %v1389 = vadd.s32 %v1316, 584
        %v1390 = vadd.s32 %v1316, 592
        %v1391 = vadd.s32 %v1316, 600
        %v1392 = vadd.s32 %v1316, 608
        %v1393 = vadd.s32 %v1316, 616
        %v1394 = vadd.s32 %v1316, 624
        %v1395 = vadd.s32 %v1316, 632
        %v1396 = vadd.s32 %v1316, 640
        %v1397 = vadd.s32 %v1316, 648
        %v1398 = vadd.s32 %v1316, 656
        %v1399 = vadd.s32 %v1316, 664
        %v1400 = vadd.s32 %v1316, 672
        %v1401 = vadd.s32 %v1316, 680
        %v1402 = vadd.s32 %v1316, 688
        %v1403 = vadd.s32 %v1316, 696
        %v1404 = vadd.s32 %v1316, 704
        %v1405 = vadd.s32 %v1316, 712
        %v1406 = vadd.s32 %v1316, 720
        %v1407 = vadd.s32 %v1316, 728
        %v1408 = vadd.s32 %v1316, 736
        %v1409 = vadd.s32 %v1316, 744
        %v1410 = vadd.s32 %v1316, 752
        %v1411 = vadd.s32 %v1316, 760
        %v1412 = vadd.s32 %v1316, 768
        %v1413 = vadd.s32 %v1316, 776
        %v1414 = vadd.s32 %v1316, 784
        %v1415 = vadd.s32 %v1316, 792
        %v1416 = vadd.s32 %v1316, 800
        %v1417 = vadd.s32 %v1316, 808
        %v1418 = vadd.s32 %v1316, 816
        %v1419 = vadd.s32 %v1316, 824
        %v1420 = vadd.s32 %v1316, 832
        %v1421 = vadd.s32 %v1316, 840
        %v1422 = vadd.s32 %v1316, 848
        %v1423 = vadd.s32 %v1316, 856
        %v1424 = vadd.s32 %v1316, 864
        %v1425 = vadd.s32 %v1316, 872
        %v1426 = vadd.s32 %v1316, 880
        %v1427 = vadd.s32 %v1316, 888
        %v1428 = vadd.s32 %v1316, 896
        %v1429 = vadd.s32 %v1316, 904
        %v1430 = vadd.s32 %v1316, 912
        %v1431 = vadd.s32 %v1316, 920
        %v1432 = vadd.s32 %v1316, 928
        %v1433 = vadd.s32 %v1316, 936
        %v1434 = vadd.s32 %v1316, 944
        %v1435 = vadd.s32 %v1316, 952
        %v1436 = vadd.s32 %v1316, 960
        %v1437 = vadd.s32 %v1316, 968
        %v1438 = vadd.s32 %v1316, 976
        %v1439 = vadd.s32 %v1316, 984
        %v1440 = vadd.s32 %v1316, 992
        %v1441 = vadd.s32 %v1316, 1000
        %v1442 = vadd.s32 %v1316, 1008
        %v1443 = vadd.s32 %v1316, 1016
        %v1444 = vadd.s32 %v1316, 1024
        %v1445 = vadd.s32 %v1316, 1032
        %v1446 = vadd.s32 %v1316, 1040
        %v1447 = vadd.s32 %v1316, 1048
        %v1448 = vadd.s32 %v1316, 1056
        %v1449 = vadd.s32 %v1316, 1064
        %v1450 = vadd.s32 %v1316, 1072
        %v1451 = vadd.s32 %v1316, 1080
        %v1452 = vadd.s32 %v1316, 1088
        %v1453 = vadd.s32 %v1316, 1096
        %v1454 = vadd.s32 %v1316, 1104
        %v1455 = vadd.s32 %v1316, 1112
        %v1456 = vadd.s32 %v1316, 1120
        %v1457 = vadd.s32 %v1316, 1128
        %v1458 = vadd.s32 %v1316, 1136
        %v1459 = vadd.s32 %v1316, 1144
        %v1460 = vadd.s32 %v1316, 1152
        %v1461 = vadd.s32 %v1316, 1160
        %v1462 = vadd.s32 %v1316, 1168
        %v1463 = vadd.s32 %v1316, 1176
        %v1464 = vadd.s32 %v1316, 1184
        %v1465 = vadd.s32 %v1316, 1192
        %v1466 = vadd.s32 %v1316, 1200
        %v1467 = vadd.s32 %v1316, 1208
        %v1468 = vadd.s32 %v1316, 1216
        %v1469 = vadd.s32 %v1316, 1224
        %v1470 = vadd.s32 %v1316, 1232
        %v1471 = vadd.s32 %v1316, 1240
        %v1472 = vadd.s32 %v1316, 1248
        %v1473 = vadd.s32 %v1316, 1256
        %v1474 = vadd.s32 %v1316, 1264
        %v1475 = vadd.s32 %v1316, 1272
        %v1476 = vadd.s32 %v1316, 1280
        %v1477 = vadd.s32 %v1316, 1288
        %v1478 = vadd.s32 %v1316, 1296
        %v1479 = vadd.s32 %v1316, 1304
        %v1480 = vadd.s32 %v1316, 1312
        %v1481 = vadd.s32 %v1316, 1320
        %v1482 = vadd.s32 %v1316, 1328
        %v1483 = vadd.s32 %v1316, 1336
        %v1484 = vadd.s32 %v1316, 1344
        %v1485 = vadd.s32 %v1316, 1352
        %v1486 = vadd.s32 %v1316, 1360
        %v1487 = vadd.s32 %v1316, 1368
        %v1488 = vadd.s32 %v1316, 1376
        %v1489 = vadd.s32 %v1316, 1384
        %v1490 = vadd.s32 %v1316, 1392
        %v1491 = vadd.s32 %v1316, 1400
        %v1492 = vadd.s32 %v1316, 1408
        %v1493 = vadd.s32 %v1316, 1416
        %v1494 = vadd.s32 %v1316, 1424
        %v1495 = vadd.s32 %v1316, 1432
        %v1496 = vadd.s32 %v1316, 1440
        %v1497 = vadd.s32 %v1316, 1448
        %v1498 = vadd.s32 %v1316, 1456
        %v1499 = vadd.s32 %v1316, 1464
        %v1500 = vadd.s32 %v1316, 1472
        %v1501 = vadd.s32 %v1316, 1480
        %v1502 = vadd.s32 %v1316, 1488
        %v1503 = vadd.s32 %v1316, 1496
        %v1504 = vadd.s32 %v1316, 1504
        %v1505 = vadd.s32 %v1316, 1512
        %v1506 = vadd.s32 %v1316, 1520
        %v1507 = vadd.s32 %v1316, 1528
        %v1508 = vadd.s32 %v1316, 1536
        %v1509 = vadd.s32 %v1316, 1544
        %v1510 = vadd.s32 %v1316, 1552
        %v1511 = vadd.s32 %v1316, 1560
        %v1512 = vadd.s32 %v1316, 1568
        %v1513 = vadd.s32 %v1316, 1576
        %v1514 = vadd.s32 %v1316, 1584
        %v1515 = vadd.s32 %v1316, 1592
        %v1516 = vadd.s32 %v1316, 1600
        %v1517 = vadd.s32 %v1316, 1608
        %v1518 = vadd.s32 %v1316, 1616
        %v1519 = vadd.s32 %v1316, 1624
        %v1520 = vadd.s32 %v1316, 1632
        %v1521 = vadd.s32 %v1316, 1640
        %v1522 = vadd.s32 %v1316, 1648
        %v1523 = vadd.s32 %v1316, 1656
        %v1524 = vadd.s32 %v1316, 1664
        %v1525 = vadd.s32 %v1316, 1672
        %v1526 = vadd.s32 %v1316, 1680
        %v1527 = vadd.s32 %v1316, 1688
        %v1528 = vadd.s32 %v1316, 1696
        %v1529 = vadd.s32 %v1316, 1704
        %v1530 = vadd.s32 %v1316, 1712
        %v1531 = vadd.s32 %v1316, 1720
        %v1532 = vadd.s32 %v1316, 1728
        %v1533 = vadd.s32 %v1316, 1736
        %v1534 = vadd.s32 %v1316, 1744
        %v1535 = vadd.s32 %v1316, 1752
        %v1536 = vadd.s32 %v1316, 1760
        %v1537 = vadd.s32 %v1316, 1768
        %v1538 = vadd.s32 %v1316, 1776
        %v1539 = vadd.s32 %v1316, 1784
        %v1540 = vadd.s32 %v1316, 1792
        %v1541 = vadd.s32 %v1316, 1800
        %v1542 = vadd.s32 %v1316, 1808
        %v1543 = vadd.s32 %v1316, 1816
        %v1544 = vadd.s32 %v1316, 1824
        %v1545 = vadd.s32 %v1316, 1832
        %v1546 = vadd.s32 %v1316, 1840
        %v1547 = vadd.s32 %v1316, 1848
        %v1548 = vadd.s32 %v1316, 1856
        %v1549 = vadd.s32 %v1316, 1864
        %v1550 = vadd.s32 %v1316, 1872
        %v1551 = vadd.s32 %v1316, 1880
        %v1552 = vadd.s32 %v1316, 1888
        %v1553 = vadd.s32 %v1316, 1896
        %v1554 = vadd.s32 %v1316, 1904
        %v1555 = vadd.s32 %v1316, 1912
        %v1556 = vadd.s32 %v1316, 1920
        %v1557 = vadd.s32 %v1316, 1928
        %v1558 = vadd.s32 %v1316, 1936
        %v1559 = vadd.s32 %v1316, 1944
        %v1560 = vadd.s32 %v1316, 1952
        %v1561 = vadd.s32 %v1316, 1960
        %v1562 = vadd.s32 %v1316, 1968
        %v1563 = vadd.s32 %v1316, 1976
        %v1564 = vadd.s32 %v1316, 1984
        %v1565 = vadd.s32 %v1316, 1992
        %v1566 = vadd.s32 %v1316, 2000
        %v1567 = vadd.s32 %v1316, 2008
        %v1568 = vadd.s32 %v1316, 2016
        %v1569 = vadd.s32 %v1316, 2024
        %v1570 = vadd.s32 %v1316, 2032
        %v1571 = vadd.s32 %v1316, 2040
        %v1572 = vstv %s1314
        %vm1573 = vcmp.lt.s32.totalorder %v1316, %v1572
        %vm1574 = vcmp.lt.s32.totalorder %v1317, %v1572
        %vm1575 = vcmp.lt.s32.totalorder %v1318, %v1572
        %vm1576 = vcmp.lt.s32.totalorder %v1319, %v1572
        %vm1577 = vcmp.lt.s32.totalorder %v1320, %v1572
        %vm1578 = vcmp.lt.s32.totalorder %v1321, %v1572
        %vm1579 = vcmp.lt.s32.totalorder %v1322, %v1572
        %vm1580 = vcmp.lt.s32.totalorder %v1323, %v1572
        %vm1581 = vcmp.lt.s32.totalorder %v1324, %v1572
        %vm1582 = vcmp.lt.s32.totalorder %v1325, %v1572
        %vm1583 = vcmp.lt.s32.totalorder %v1326, %v1572
        %vm1584 = vcmp.lt.s32.totalorder %v1327, %v1572
        %vm1585 = vcmp.lt.s32.totalorder %v1328, %v1572
        %vm1586 = vcmp.lt.s32.totalorder %v1329, %v1572
        %vm1587 = vcmp.lt.s32.totalorder %v1330, %v1572
        %vm1588 = vcmp.lt.s32.totalorder %v1331, %v1572
        %vm1589 = vcmp.lt.s32.totalorder %v1332, %v1572
        %vm1590 = vcmp.lt.s32.totalorder %v1333, %v1572
        %vm1591 = vcmp.lt.s32.totalorder %v1334, %v1572
        %vm1592 = vcmp.lt.s32.totalorder %v1335, %v1572
        %vm1593 = vcmp.lt.s32.totalorder %v1336, %v1572
        %vm1594 = vcmp.lt.s32.totalorder %v1337, %v1572
        %vm1595 = vcmp.lt.s32.totalorder %v1338, %v1572
        %vm1596 = vcmp.lt.s32.totalorder %v1339, %v1572
        %vm1597 = vcmp.lt.s32.totalorder %v1340, %v1572
        %vm1598 = vcmp.lt.s32.totalorder %v1341, %v1572
        %vm1599 = vcmp.lt.s32.totalorder %v1342, %v1572
        %vm1600 = vcmp.lt.s32.totalorder %v1343, %v1572
        %vm1601 = vcmp.lt.s32.totalorder %v1344, %v1572
        %vm1602 = vcmp.lt.s32.totalorder %v1345, %v1572
        %vm1603 = vcmp.lt.s32.totalorder %v1346, %v1572
        %vm1604 = vcmp.lt.s32.totalorder %v1347, %v1572
        %vm1605 = vcmp.lt.s32.totalorder %v1348, %v1572
        %vm1606 = vcmp.lt.s32.totalorder %v1349, %v1572
        %vm1607 = vcmp.lt.s32.totalorder %v1350, %v1572
        %vm1608 = vcmp.lt.s32.totalorder %v1351, %v1572
        %vm1609 = vcmp.lt.s32.totalorder %v1352, %v1572
        %vm1610 = vcmp.lt.s32.totalorder %v1353, %v1572
        %vm1611 = vcmp.lt.s32.totalorder %v1354, %v1572
        %vm1612 = vcmp.lt.s32.totalorder %v1355, %v1572
        %vm1613 = vcmp.lt.s32.totalorder %v1356, %v1572
        %vm1614 = vcmp.lt.s32.totalorder %v1357, %v1572
        %vm1615 = vcmp.lt.s32.totalorder %v1358, %v1572
        %vm1616 = vcmp.lt.s32.totalorder %v1359, %v1572
        %vm1617 = vcmp.lt.s32.totalorder %v1360, %v1572
        %vm1618 = vcmp.lt.s32.totalorder %v1361, %v1572
        %vm1619 = vcmp.lt.s32.totalorder %v1362, %v1572
        %vm1620 = vcmp.lt.s32.totalorder %v1363, %v1572
        %vm1621 = vcmp.lt.s32.totalorder %v1364, %v1572
        %vm1622 = vcmp.lt.s32.totalorder %v1365, %v1572
        %vm1623 = vcmp.lt.s32.totalorder %v1366, %v1572
        %vm1624 = vcmp.lt.s32.totalorder %v1367, %v1572
        %vm1625 = vcmp.lt.s32.totalorder %v1368, %v1572
        %vm1626 = vcmp.lt.s32.totalorder %v1369, %v1572
        %vm1627 = vcmp.lt.s32.totalorder %v1370, %v1572
        %vm1628 = vcmp.lt.s32.totalorder %v1371, %v1572
        %vm1629 = vcmp.lt.s32.totalorder %v1372, %v1572
        %vm1630 = vcmp.lt.s32.totalorder %v1373, %v1572
        %vm1631 = vcmp.lt.s32.totalorder %v1374, %v1572
        %vm1632 = vcmp.lt.s32.totalorder %v1375, %v1572
        %vm1633 = vcmp.lt.s32.totalorder %v1376, %v1572
        %vm1634 = vcmp.lt.s32.totalorder %v1377, %v1572
        %vm1635 = vcmp.lt.s32.totalorder %v1378, %v1572
        %vm1636 = vcmp.lt.s32.totalorder %v1379, %v1572
        %vm1637 = vcmp.lt.s32.totalorder %v1380, %v1572
        %vm1638 = vcmp.lt.s32.totalorder %v1381, %v1572
        %vm1639 = vcmp.lt.s32.totalorder %v1382, %v1572
        %vm1640 = vcmp.lt.s32.totalorder %v1383, %v1572
        %vm1641 = vcmp.lt.s32.totalorder %v1384, %v1572
        %vm1642 = vcmp.lt.s32.totalorder %v1385, %v1572
        %vm1643 = vcmp.lt.s32.totalorder %v1386, %v1572
        %vm1644 = vcmp.lt.s32.totalorder %v1387, %v1572
        %vm1645 = vcmp.lt.s32.totalorder %v1388, %v1572
        %vm1646 = vcmp.lt.s32.totalorder %v1389, %v1572
        %vm1647 = vcmp.lt.s32.totalorder %v1390, %v1572
        %vm1648 = vcmp.lt.s32.totalorder %v1391, %v1572
        %vm1649 = vcmp.lt.s32.totalorder %v1392, %v1572
        %vm1650 = vcmp.lt.s32.totalorder %v1393, %v1572
        %vm1651 = vcmp.lt.s32.totalorder %v1394, %v1572
        %vm1652 = vcmp.lt.s32.totalorder %v1395, %v1572
        %vm1653 = vcmp.lt.s32.totalorder %v1396, %v1572
        %vm1654 = vcmp.lt.s32.totalorder %v1397, %v1572
        %vm1655 = vcmp.lt.s32.totalorder %v1398, %v1572
        %vm1656 = vcmp.lt.s32.totalorder %v1399, %v1572
        %vm1657 = vcmp.lt.s32.totalorder %v1400, %v1572
        %vm1658 = vcmp.lt.s32.totalorder %v1401, %v1572
        %vm1659 = vcmp.lt.s32.totalorder %v1402, %v1572
        %vm1660 = vcmp.lt.s32.totalorder %v1403, %v1572
        %vm1661 = vcmp.lt.s32.totalorder %v1404, %v1572
        %vm1662 = vcmp.lt.s32.totalorder %v1405, %v1572
        %vm1663 = vcmp.lt.s32.totalorder %v1406, %v1572
        %vm1664 = vcmp.lt.s32.totalorder %v1407, %v1572
        %vm1665 = vcmp.lt.s32.totalorder %v1408, %v1572
        %vm1666 = vcmp.lt.s32.totalorder %v1409, %v1572
        %vm1667 = vcmp.lt.s32.totalorder %v1410, %v1572
        %vm1668 = vcmp.lt.s32.totalorder %v1411, %v1572
        %vm1669 = vcmp.lt.s32.totalorder %v1412, %v1572
        %vm1670 = vcmp.lt.s32.totalorder %v1413, %v1572
        %vm1671 = vcmp.lt.s32.totalorder %v1414, %v1572
        %vm1672 = vcmp.lt.s32.totalorder %v1415, %v1572
        %vm1673 = vcmp.lt.s32.totalorder %v1416, %v1572
        %vm1674 = vcmp.lt.s32.totalorder %v1417, %v1572
        %vm1675 = vcmp.lt.s32.totalorder %v1418, %v1572
        %vm1676 = vcmp.lt.s32.totalorder %v1419, %v1572
        %vm1677 = vcmp.lt.s32.totalorder %v1420, %v1572
        %vm1678 = vcmp.lt.s32.totalorder %v1421, %v1572
        %vm1679 = vcmp.lt.s32.totalorder %v1422, %v1572
        %vm1680 = vcmp.lt.s32.totalorder %v1423, %v1572
        %vm1681 = vcmp.lt.s32.totalorder %v1424, %v1572
        %vm1682 = vcmp.lt.s32.totalorder %v1425, %v1572
        %vm1683 = vcmp.lt.s32.totalorder %v1426, %v1572
        %vm1684 = vcmp.lt.s32.totalorder %v1427, %v1572
        %vm1685 = vcmp.lt.s32.totalorder %v1428, %v1572
        %vm1686 = vcmp.lt.s32.totalorder %v1429, %v1572
        %vm1687 = vcmp.lt.s32.totalorder %v1430, %v1572
        %vm1688 = vcmp.lt.s32.totalorder %v1431, %v1572
        %vm1689 = vcmp.lt.s32.totalorder %v1432, %v1572
        %vm1690 = vcmp.lt.s32.totalorder %v1433, %v1572
        %vm1691 = vcmp.lt.s32.totalorder %v1434, %v1572
        %vm1692 = vcmp.lt.s32.totalorder %v1435, %v1572
        %vm1693 = vcmp.lt.s32.totalorder %v1436, %v1572
        %vm1694 = vcmp.lt.s32.totalorder %v1437, %v1572
        %vm1695 = vcmp.lt.s32.totalorder %v1438, %v1572
        %vm1696 = vcmp.lt.s32.totalorder %v1439, %v1572
        %vm1697 = vcmp.lt.s32.totalorder %v1440, %v1572
        %vm1698 = vcmp.lt.s32.totalorder %v1441, %v1572
        %vm1699 = vcmp.lt.s32.totalorder %v1442, %v1572
        %vm1700 = vcmp.lt.s32.totalorder %v1443, %v1572
        %vm1701 = vcmp.lt.s32.totalorder %v1444, %v1572
        %vm1702 = vcmp.lt.s32.totalorder %v1445, %v1572
        %vm1703 = vcmp.lt.s32.totalorder %v1446, %v1572
        %vm1704 = vcmp.lt.s32.totalorder %v1447, %v1572
        %vm1705 = vcmp.lt.s32.totalorder %v1448, %v1572
        %vm1706 = vcmp.lt.s32.totalorder %v1449, %v1572
        %vm1707 = vcmp.lt.s32.totalorder %v1450, %v1572
        %vm1708 = vcmp.lt.s32.totalorder %v1451, %v1572
        %vm1709 = vcmp.lt.s32.totalorder %v1452, %v1572
        %vm1710 = vcmp.lt.s32.totalorder %v1453, %v1572
        %vm1711 = vcmp.lt.s32.totalorder %v1454, %v1572
        %vm1712 = vcmp.lt.s32.totalorder %v1455, %v1572
        %vm1713 = vcmp.lt.s32.totalorder %v1456, %v1572
        %vm1714 = vcmp.lt.s32.totalorder %v1457, %v1572
        %vm1715 = vcmp.lt.s32.totalorder %v1458, %v1572
        %vm1716 = vcmp.lt.s32.totalorder %v1459, %v1572
        %vm1717 = vcmp.lt.s32.totalorder %v1460, %v1572
        %vm1718 = vcmp.lt.s32.totalorder %v1461, %v1572
        %vm1719 = vcmp.lt.s32.totalorder %v1462, %v1572
        %vm1720 = vcmp.lt.s32.totalorder %v1463, %v1572
        %vm1721 = vcmp.lt.s32.totalorder %v1464, %v1572
        %vm1722 = vcmp.lt.s32.totalorder %v1465, %v1572
        %vm1723 = vcmp.lt.s32.totalorder %v1466, %v1572
        %vm1724 = vcmp.lt.s32.totalorder %v1467, %v1572
        %vm1725 = vcmp.lt.s32.totalorder %v1468, %v1572
        %vm1726 = vcmp.lt.s32.totalorder %v1469, %v1572
        %vm1727 = vcmp.lt.s32.totalorder %v1470, %v1572
        %vm1728 = vcmp.lt.s32.totalorder %v1471, %v1572
        %vm1729 = vcmp.lt.s32.totalorder %v1472, %v1572
        %vm1730 = vcmp.lt.s32.totalorder %v1473, %v1572
        %vm1731 = vcmp.lt.s32.totalorder %v1474, %v1572
        %vm1732 = vcmp.lt.s32.totalorder %v1475, %v1572
        %vm1733 = vcmp.lt.s32.totalorder %v1476, %v1572
        %vm1734 = vcmp.lt.s32.totalorder %v1477, %v1572
        %vm1735 = vcmp.lt.s32.totalorder %v1478, %v1572
        %vm1736 = vcmp.lt.s32.totalorder %v1479, %v1572
        %vm1737 = vcmp.lt.s32.totalorder %v1480, %v1572
        %vm1738 = vcmp.lt.s32.totalorder %v1481, %v1572
        %vm1739 = vcmp.lt.s32.totalorder %v1482, %v1572
        %vm1740 = vcmp.lt.s32.totalorder %v1483, %v1572
        %vm1741 = vcmp.lt.s32.totalorder %v1484, %v1572
        %vm1742 = vcmp.lt.s32.totalorder %v1485, %v1572
        %vm1743 = vcmp.lt.s32.totalorder %v1486, %v1572
        %vm1744 = vcmp.lt.s32.totalorder %v1487, %v1572
        %vm1745 = vcmp.lt.s32.totalorder %v1488, %v1572
        %vm1746 = vcmp.lt.s32.totalorder %v1489, %v1572
        %vm1747 = vcmp.lt.s32.totalorder %v1490, %v1572
        %vm1748 = vcmp.lt.s32.totalorder %v1491, %v1572
        %vm1749 = vcmp.lt.s32.totalorder %v1492, %v1572
        %vm1750 = vcmp.lt.s32.totalorder %v1493, %v1572
        %vm1751 = vcmp.lt.s32.totalorder %v1494, %v1572
        %vm1752 = vcmp.lt.s32.totalorder %v1495, %v1572
        %vm1753 = vcmp.lt.s32.totalorder %v1496, %v1572
        %vm1754 = vcmp.lt.s32.totalorder %v1497, %v1572
        %vm1755 = vcmp.lt.s32.totalorder %v1498, %v1572
        %vm1756 = vcmp.lt.s32.totalorder %v1499, %v1572
        %vm1757 = vcmp.lt.s32.totalorder %v1500, %v1572
        %vm1758 = vcmp.lt.s32.totalorder %v1501, %v1572
        %vm1759 = vcmp.lt.s32.totalorder %v1502, %v1572
        %vm1760 = vcmp.lt.s32.totalorder %v1503, %v1572
        %vm1761 = vcmp.lt.s32.totalorder %v1504, %v1572
        %vm1762 = vcmp.lt.s32.totalorder %v1505, %v1572
        %vm1763 = vcmp.lt.s32.totalorder %v1506, %v1572
        %vm1764 = vcmp.lt.s32.totalorder %v1507, %v1572
        %vm1765 = vcmp.lt.s32.totalorder %v1508, %v1572
        %vm1766 = vcmp.lt.s32.totalorder %v1509, %v1572
        %vm1767 = vcmp.lt.s32.totalorder %v1510, %v1572
        %vm1768 = vcmp.lt.s32.totalorder %v1511, %v1572
        %vm1769 = vcmp.lt.s32.totalorder %v1512, %v1572
        %vm1770 = vcmp.lt.s32.totalorder %v1513, %v1572
        %vm1771 = vcmp.lt.s32.totalorder %v1514, %v1572
        %vm1772 = vcmp.lt.s32.totalorder %v1515, %v1572
        %vm1773 = vcmp.lt.s32.totalorder %v1516, %v1572
        %vm1774 = vcmp.lt.s32.totalorder %v1517, %v1572
        %vm1775 = vcmp.lt.s32.totalorder %v1518, %v1572
        %vm1776 = vcmp.lt.s32.totalorder %v1519, %v1572
        %vm1777 = vcmp.lt.s32.totalorder %v1520, %v1572
        %vm1778 = vcmp.lt.s32.totalorder %v1521, %v1572
        %vm1779 = vcmp.lt.s32.totalorder %v1522, %v1572
        %vm1780 = vcmp.lt.s32.totalorder %v1523, %v1572
        %vm1781 = vcmp.lt.s32.totalorder %v1524, %v1572
        %vm1782 = vcmp.lt.s32.totalorder %v1525, %v1572
        %vm1783 = vcmp.lt.s32.totalorder %v1526, %v1572
        %vm1784 = vcmp.lt.s32.totalorder %v1527, %v1572
        %vm1785 = vcmp.lt.s32.totalorder %v1528, %v1572
        %vm1786 = vcmp.lt.s32.totalorder %v1529, %v1572
        %vm1787 = vcmp.lt.s32.totalorder %v1530, %v1572
        %vm1788 = vcmp.lt.s32.totalorder %v1531, %v1572
        %vm1789 = vcmp.lt.s32.totalorder %v1532, %v1572
        %vm1790 = vcmp.lt.s32.totalorder %v1533, %v1572
        %vm1791 = vcmp.lt.s32.totalorder %v1534, %v1572
        %vm1792 = vcmp.lt.s32.totalorder %v1535, %v1572
        %vm1793 = vcmp.lt.s32.totalorder %v1536, %v1572
        %vm1794 = vcmp.lt.s32.totalorder %v1537, %v1572
        %vm1795 = vcmp.lt.s32.totalorder %v1538, %v1572
        %vm1796 = vcmp.lt.s32.totalorder %v1539, %v1572
        %vm1797 = vcmp.lt.s32.totalorder %v1540, %v1572
        %vm1798 = vcmp.lt.s32.totalorder %v1541, %v1572
        %vm1799 = vcmp.lt.s32.totalorder %v1542, %v1572
        %vm1800 = vcmp.lt.s32.totalorder %v1543, %v1572
        %vm1801 = vcmp.lt.s32.totalorder %v1544, %v1572
        %vm1802 = vcmp.lt.s32.totalorder %v1545, %v1572
        %vm1803 = vcmp.lt.s32.totalorder %v1546, %v1572
        %vm1804 = vcmp.lt.s32.totalorder %v1547, %v1572
        %vm1805 = vcmp.lt.s32.totalorder %v1548, %v1572
        %vm1806 = vcmp.lt.s32.totalorder %v1549, %v1572
        %vm1807 = vcmp.lt.s32.totalorder %v1550, %v1572
        %vm1808 = vcmp.lt.s32.totalorder %v1551, %v1572
        %vm1809 = vcmp.lt.s32.totalorder %v1552, %v1572
        %vm1810 = vcmp.lt.s32.totalorder %v1553, %v1572
        %vm1811 = vcmp.lt.s32.totalorder %v1554, %v1572
        %vm1812 = vcmp.lt.s32.totalorder %v1555, %v1572
        %vm1813 = vcmp.lt.s32.totalorder %v1556, %v1572
        %vm1814 = vcmp.lt.s32.totalorder %v1557, %v1572
        %vm1815 = vcmp.lt.s32.totalorder %v1558, %v1572
        %vm1816 = vcmp.lt.s32.totalorder %v1559, %v1572
        %vm1817 = vcmp.lt.s32.totalorder %v1560, %v1572
        %vm1818 = vcmp.lt.s32.totalorder %v1561, %v1572
        %vm1819 = vcmp.lt.s32.totalorder %v1562, %v1572
        %vm1820 = vcmp.lt.s32.totalorder %v1563, %v1572
        %vm1821 = vcmp.lt.s32.totalorder %v1564, %v1572
        %vm1822 = vcmp.lt.s32.totalorder %v1565, %v1572
        %vm1823 = vcmp.lt.s32.totalorder %v1566, %v1572
        %vm1824 = vcmp.lt.s32.totalorder %v1567, %v1572
        %vm1825 = vcmp.lt.s32.totalorder %v1568, %v1572
        %vm1826 = vcmp.lt.s32.totalorder %v1569, %v1572
        %vm1827 = vcmp.lt.s32.totalorder %v1570, %v1572
        %vm1828 = vcmp.lt.s32.totalorder %v1571, %v1572
        %v1829 = vsel %vm1573, %v801, 0.0
        %v1830 = vsel %vm1574, %v802, 0.0
        %v1831 = vsel %vm1575, %v803, 0.0
        %v1832 = vsel %vm1576, %v804, 0.0
        %v1833 = vsel %vm1577, %v805, 0.0
        %v1834 = vsel %vm1578, %v806, 0.0
        %v1835 = vsel %vm1579, %v807, 0.0
        %v1836 = vsel %vm1580, %v808, 0.0
        %v1837 = vsel %vm1581, %v809, 0.0
        %v1838 = vsel %vm1582, %v810, 0.0
        %v1839 = vsel %vm1583, %v811, 0.0
        %v1840 = vsel %vm1584, %v812, 0.0
        %v1841 = vsel %vm1585, %v813, 0.0
        %v1842 = vsel %vm1586, %v814, 0.0
        %v1843 = vsel %vm1587, %v815, 0.0
        %v1844 = vsel %vm1588, %v816, 0.0
        %v1845 = vsel %vm1589, %v817, 0.0
        %v1846 = vsel %vm1590, %v818, 0.0
        %v1847 = vsel %vm1591, %v819, 0.0
        %v1848 = vsel %vm1592, %v820, 0.0
        %v1849 = vsel %vm1593, %v821, 0.0
        %v1850 = vsel %vm1594, %v822, 0.0
        %v1851 = vsel %vm1595, %v823, 0.0
        %v1852 = vsel %vm1596, %v824, 0.0
        %v1853 = vsel %vm1597, %v825, 0.0
        %v1854 = vsel %vm1598, %v826, 0.0
        %v1855 = vsel %vm1599, %v827, 0.0
        %v1856 = vsel %vm1600, %v828, 0.0
        %v1857 = vsel %vm1601, %v829, 0.0
        %v1858 = vsel %vm1602, %v830, 0.0
        %v1859 = vsel %vm1603, %v831, 0.0
        %v1860 = vsel %vm1604, %v832, 0.0
        %v1861 = vsel %vm1605, %v833, 0.0
        %v1862 = vsel %vm1606, %v834, 0.0
        %v1863 = vsel %vm1607, %v835, 0.0
        %v1864 = vsel %vm1608, %v836, 0.0
        %v1865 = vsel %vm1609, %v837, 0.0
        %v1866 = vsel %vm1610, %v838, 0.0
        %v1867 = vsel %vm1611, %v839, 0.0
        %v1868 = vsel %vm1612, %v840, 0.0
        %v1869 = vsel %vm1613, %v841, 0.0
        %v1870 = vsel %vm1614, %v842, 0.0
        %v1871 = vsel %vm1615, %v843, 0.0
        %v1872 = vsel %vm1616, %v844, 0.0
        %v1873 = vsel %vm1617, %v845, 0.0
        %v1874 = vsel %vm1618, %v846, 0.0
        %v1875 = vsel %vm1619, %v847, 0.0
        %v1876 = vsel %vm1620, %v848, 0.0
        %v1877 = vsel %vm1621, %v849, 0.0
        %v1878 = vsel %vm1622, %v850, 0.0
        %v1879 = vsel %vm1623, %v851, 0.0
        %v1880 = vsel %vm1624, %v852, 0.0
        %v1881 = vsel %vm1625, %v853, 0.0
        %v1882 = vsel %vm1626, %v854, 0.0
        %v1883 = vsel %vm1627, %v855, 0.0
        %v1884 = vsel %vm1628, %v856, 0.0
        %v1885 = vsel %vm1629, %v857, 0.0
        %v1886 = vsel %vm1630, %v858, 0.0
        %v1887 = vsel %vm1631, %v859, 0.0
        %v1888 = vsel %vm1632, %v860, 0.0
        %v1889 = vsel %vm1633, %v861, 0.0
        %v1890 = vsel %vm1634, %v862, 0.0
        %v1891 = vsel %vm1635, %v863, 0.0
        %v1892 = vsel %vm1636, %v864, 0.0
        %v1893 = vsel %vm1637, %v865, 0.0
        %v1894 = vsel %vm1638, %v866, 0.0
        %v1895 = vsel %vm1639, %v867, 0.0
        %v1896 = vsel %vm1640, %v868, 0.0
        %v1897 = vsel %vm1641, %v869, 0.0
        %v1898 = vsel %vm1642, %v870, 0.0
        %v1899 = vsel %vm1643, %v871, 0.0
        %v1900 = vsel %vm1644, %v872, 0.0
        %v1901 = vsel %vm1645, %v873, 0.0
        %v1902 = vsel %vm1646, %v874, 0.0
        %v1903 = vsel %vm1647, %v875, 0.0
        %v1904 = vsel %vm1648, %v876, 0.0
        %v1905 = vsel %vm1649, %v877, 0.0
        %v1906 = vsel %vm1650, %v878, 0.0
        %v1907 = vsel %vm1651, %v879, 0.0
        %v1908 = vsel %vm1652, %v880, 0.0
        %v1909 = vsel %vm1653, %v881, 0.0
        %v1910 = vsel %vm1654, %v882, 0.0
        %v1911 = vsel %vm1655, %v883, 0.0
        %v1912 = vsel %vm1656, %v884, 0.0
        %v1913 = vsel %vm1657, %v885, 0.0
        %v1914 = vsel %vm1658, %v886, 0.0
        %v1915 = vsel %vm1659, %v887, 0.0
        %v1916 = vsel %vm1660, %v888, 0.0
        %v1917 = vsel %vm1661, %v889, 0.0
        %v1918 = vsel %vm1662, %v890, 0.0
        %v1919 = vsel %vm1663, %v891, 0.0
        %v1920 = vsel %vm1664, %v892, 0.0
        %v1921 = vsel %vm1665, %v893, 0.0
        %v1922 = vsel %vm1666, %v894, 0.0
        %v1923 = vsel %vm1667, %v895, 0.0
        %v1924 = vsel %vm1668, %v896, 0.0
        %v1925 = vsel %vm1669, %v897, 0.0
        %v1926 = vsel %vm1670, %v898, 0.0
        %v1927 = vsel %vm1671, %v899, 0.0
        %v1928 = vsel %vm1672, %v900, 0.0
        %v1929 = vsel %vm1673, %v901, 0.0
        %v1930 = vsel %vm1674, %v902, 0.0
        %v1931 = vsel %vm1675, %v903, 0.0
        %v1932 = vsel %vm1676, %v904, 0.0
        %v1933 = vsel %vm1677, %v905, 0.0
        %v1934 = vsel %vm1678, %v906, 0.0
        %v1935 = vsel %vm1679, %v907, 0.0
        %v1936 = vsel %vm1680, %v908, 0.0
        %v1937 = vsel %vm1681, %v909, 0.0
        %v1938 = vsel %vm1682, %v910, 0.0
        %v1939 = vsel %vm1683, %v911, 0.0
        %v1940 = vsel %vm1684, %v912, 0.0
        %v1941 = vsel %vm1685, %v913, 0.0
        %v1942 = vsel %vm1686, %v914, 0.0
        %v1943 = vsel %vm1687, %v915, 0.0
        %v1944 = vsel %vm1688, %v916, 0.0
        %v1945 = vsel %vm1689, %v917, 0.0
        %v1946 = vsel %vm1690, %v918, 0.0
        %v1947 = vsel %vm1691, %v919, 0.0
        %v1948 = vsel %vm1692, %v920, 0.0
        %v1949 = vsel %vm1693, %v921, 0.0
        %v1950 = vsel %vm1694, %v922, 0.0
        %v1951 = vsel %vm1695, %v923, 0.0
        %v1952 = vsel %vm1696, %v924, 0.0
        %v1953 = vsel %vm1697, %v925, 0.0
        %v1954 = vsel %vm1698, %v926, 0.0
        %v1955 = vsel %vm1699, %v927, 0.0
        %v1956 = vsel %vm1700, %v928, 0.0
        %v1957 = vsel %vm1701, %v929, 0.0
        %v1958 = vsel %vm1702, %v930, 0.0
        %v1959 = vsel %vm1703, %v931, 0.0
        %v1960 = vsel %vm1704, %v932, 0.0
        %v1961 = vsel %vm1705, %v933, 0.0
        %v1962 = vsel %vm1706, %v934, 0.0
        %v1963 = vsel %vm1707, %v935, 0.0
        %v1964 = vsel %vm1708, %v936, 0.0
        %v1965 = vsel %vm1709, %v937, 0.0
        %v1966 = vsel %vm1710, %v938, 0.0
        %v1967 = vsel %vm1711, %v939, 0.0
        %v1968 = vsel %vm1712, %v940, 0.0
        %v1969 = vsel %vm1713, %v941, 0.0
        %v1970 = vsel %vm1714, %v942, 0.0
        %v1971 = vsel %vm1715, %v943, 0.0
        %v1972 = vsel %vm1716, %v944, 0.0
        %v1973 = vsel %vm1717, %v945, 0.0
        %v1974 = vsel %vm1718, %v946, 0.0
        %v1975 = vsel %vm1719, %v947, 0.0
        %v1976 = vsel %vm1720, %v948, 0.0
        %v1977 = vsel %vm1721, %v949, 0.0
        %v1978 = vsel %vm1722, %v950, 0.0
        %v1979 = vsel %vm1723, %v951, 0.0
        %v1980 = vsel %vm1724, %v952, 0.0
        %v1981 = vsel %vm1725, %v953, 0.0
        %v1982 = vsel %vm1726, %v954, 0.0
        %v1983 = vsel %vm1727, %v955, 0.0
        %v1984 = vsel %vm1728, %v956, 0.0
        %v1985 = vsel %vm1729, %v957, 0.0
        %v1986 = vsel %vm1730, %v958, 0.0
        %v1987 = vsel %vm1731, %v959, 0.0
        %v1988 = vsel %vm1732, %v960, 0.0
        %v1989 = vsel %vm1733, %v961, 0.0
        %v1990 = vsel %vm1734, %v962, 0.0
        %v1991 = vsel %vm1735, %v963, 0.0
        %v1992 = vsel %vm1736, %v964, 0.0
        %v1993 = vsel %vm1737, %v965, 0.0
        %v1994 = vsel %vm1738, %v966, 0.0
        %v1995 = vsel %vm1739, %v967, 0.0
        %v1996 = vsel %vm1740, %v968, 0.0
        %v1997 = vsel %vm1741, %v969, 0.0
        %v1998 = vsel %vm1742, %v970, 0.0
        %v1999 = vsel %vm1743, %v971, 0.0
        %v2000 = vsel %vm1744, %v972, 0.0
        %v2001 = vsel %vm1745, %v973, 0.0
        %v2002 = vsel %vm1746, %v974, 0.0
        %v2003 = vsel %vm1747, %v975, 0.0
        %v2004 = vsel %vm1748, %v976, 0.0
        %v2005 = vsel %vm1749, %v977, 0.0
        %v2006 = vsel %vm1750, %v978, 0.0
        %v2007 = vsel %vm1751, %v979, 0.0
        %v2008 = vsel %vm1752, %v980, 0.0
        %v2009 = vsel %vm1753, %v981, 0.0
        %v2010 = vsel %vm1754, %v982, 0.0
        %v2011 = vsel %vm1755, %v983, 0.0
        %v2012 = vsel %vm1756, %v984, 0.0
        %v2013 = vsel %vm1757, %v985, 0.0
        %v2014 = vsel %vm1758, %v986, 0.0
        %v2015 = vsel %vm1759, %v987, 0.0
        %v2016 = vsel %vm1760, %v988, 0.0
        %v2017 = vsel %vm1761, %v989, 0.0
        %v2018 = vsel %vm1762, %v990, 0.0
        %v2019 = vsel %vm1763, %v991, 0.0
        %v2020 = vsel %vm1764, %v992, 0.0
        %v2021 = vsel %vm1765, %v993, 0.0
        %v2022 = vsel %vm1766, %v994, 0.0
        %v2023 = vsel %vm1767, %v995, 0.0
        %v2024 = vsel %vm1768, %v996, 0.0
        %v2025 = vsel %vm1769, %v997, 0.0
        %v2026 = vsel %vm1770, %v998, 0.0
        %v2027 = vsel %vm1771, %v999, 0.0
        %v2028 = vsel %vm1772, %v1000, 0.0
        %v2029 = vsel %vm1773, %v1001, 0.0
        %v2030 = vsel %vm1774, %v1002, 0.0
        %v2031 = vsel %vm1775, %v1003, 0.0
        %v2032 = vsel %vm1776, %v1004, 0.0
        %v2033 = vsel %vm1777, %v1005, 0.0
        %v2034 = vsel %vm1778, %v1006, 0.0
        %v2035 = vsel %vm1779, %v1007, 0.0
        %v2036 = vsel %vm1780, %v1008, 0.0
        %v2037 = vsel %vm1781, %v1009, 0.0
        %v2038 = vsel %vm1782, %v1010, 0.0
        %v2039 = vsel %vm1783, %v1011, 0.0
        %v2040 = vsel %vm1784, %v1012, 0.0
        %v2041 = vsel %vm1785, %v1013, 0.0
        %v2042 = vsel %vm1786, %v1014, 0.0
        %v2043 = vsel %vm1787, %v1015, 0.0
        %v2044 = vsel %vm1788, %v1016, 0.0
        %v2045 = vsel %vm1789, %v1017, 0.0
        %v2046 = vsel %vm1790, %v1018, 0.0
        %v2047 = vsel %vm1791, %v1019, 0.0
        %v2048 = vsel %vm1792, %v1020, 0.0
        %v2049 = vsel %vm1793, %v1021, 0.0
        %v2050 = vsel %vm1794, %v1022, 0.0
        %v2051 = vsel %vm1795, %v1023, 0.0
        %v2052 = vsel %vm1796, %v1024, 0.0
        %v2053 = vsel %vm1797, %v1025, 0.0
        %v2054 = vsel %vm1798, %v1026, 0.0
        %v2055 = vsel %vm1799, %v1027, 0.0
        %v2056 = vsel %vm1800, %v1028, 0.0
        %v2057 = vsel %vm1801, %v1029, 0.0
        %v2058 = vsel %vm1802, %v1030, 0.0
        %v2059 = vsel %vm1803, %v1031, 0.0
        %v2060 = vsel %vm1804, %v1032, 0.0
        %v2061 = vsel %vm1805, %v1033, 0.0
        %v2062 = vsel %vm1806, %v1034, 0.0
        %v2063 = vsel %vm1807, %v1035, 0.0
        %v2064 = vsel %vm1808, %v1036, 0.0
        %v2065 = vsel %vm1809, %v1037, 0.0
        %v2066 = vsel %vm1810, %v1038, 0.0
        %v2067 = vsel %vm1811, %v1039, 0.0
        %v2068 = vsel %vm1812, %v1040, 0.0
        %v2069 = vsel %vm1813, %v1041, 0.0
        %v2070 = vsel %vm1814, %v1042, 0.0
        %v2071 = vsel %vm1815, %v1043, 0.0
        %v2072 = vsel %vm1816, %v1044, 0.0
        %v2073 = vsel %vm1817, %v1045, 0.0
        %v2074 = vsel %vm1818, %v1046, 0.0
        %v2075 = vsel %vm1819, %v1047, 0.0
        %v2076 = vsel %vm1820, %v1048, 0.0
        %v2077 = vsel %vm1821, %v1049, 0.0
        %v2078 = vsel %vm1822, %v1050, 0.0
        %v2079 = vsel %vm1823, %v1051, 0.0
        %v2080 = vsel %vm1824, %v1052, 0.0
        %v2081 = vsel %vm1825, %v1053, 0.0
        %v2082 = vsel %vm1826, %v1054, 0.0
        %v2083 = vsel %vm1827, %v1055, 0.0
        %v2084 = vsel %vm1828, %v1056, 0.0
        %v2085 = vsel %vm1573, %v1057, 0.0
        %v2086 = vsel %vm1574, %v1058, 0.0
        %v2087 = vsel %vm1575, %v1059, 0.0
        %v2088 = vsel %vm1576, %v1060, 0.0
        %v2089 = vsel %vm1577, %v1061, 0.0
        %v2090 = vsel %vm1578, %v1062, 0.0
        %v2091 = vsel %vm1579, %v1063, 0.0
        %v2092 = vsel %vm1580, %v1064, 0.0
        %v2093 = vsel %vm1581, %v1065, 0.0
        %v2094 = vsel %vm1582, %v1066, 0.0
        %v2095 = vsel %vm1583, %v1067, 0.0
        %v2096 = vsel %vm1584, %v1068, 0.0
        %v2097 = vsel %vm1585, %v1069, 0.0
        %v2098 = vsel %vm1586, %v1070, 0.0
        %v2099 = vsel %vm1587, %v1071, 0.0
        %v2100 = vsel %vm1588, %v1072, 0.0
        %v2101 = vsel %vm1589, %v1073, 0.0
        %v2102 = vsel %vm1590, %v1074, 0.0
        %v2103 = vsel %vm1591, %v1075, 0.0
        %v2104 = vsel %vm1592, %v1076, 0.0
        %v2105 = vsel %vm1593, %v1077, 0.0
        %v2106 = vsel %vm1594, %v1078, 0.0
        %v2107 = vsel %vm1595, %v1079, 0.0
        %v2108 = vsel %vm1596, %v1080, 0.0
        %v2109 = vsel %vm1597, %v1081, 0.0
        %v2110 = vsel %vm1598, %v1082, 0.0
        %v2111 = vsel %vm1599, %v1083, 0.0
        %v2112 = vsel %vm1600, %v1084, 0.0
        %v2113 = vsel %vm1601, %v1085, 0.0
        %v2114 = vsel %vm1602, %v1086, 0.0
        %v2115 = vsel %vm1603, %v1087, 0.0
        %v2116 = vsel %vm1604, %v1088, 0.0
        %v2117 = vsel %vm1605, %v1089, 0.0
        %v2118 = vsel %vm1606, %v1090, 0.0
        %v2119 = vsel %vm1607, %v1091, 0.0
        %v2120 = vsel %vm1608, %v1092, 0.0
        %v2121 = vsel %vm1609, %v1093, 0.0
        %v2122 = vsel %vm1610, %v1094, 0.0
        %v2123 = vsel %vm1611, %v1095, 0.0
        %v2124 = vsel %vm1612, %v1096, 0.0
        %v2125 = vsel %vm1613, %v1097, 0.0
        %v2126 = vsel %vm1614, %v1098, 0.0
        %v2127 = vsel %vm1615, %v1099, 0.0
        %v2128 = vsel %vm1616, %v1100, 0.0
        %v2129 = vsel %vm1617, %v1101, 0.0
        %v2130 = vsel %vm1618, %v1102, 0.0
        %v2131 = vsel %vm1619, %v1103, 0.0
        %v2132 = vsel %vm1620, %v1104, 0.0
        %v2133 = vsel %vm1621, %v1105, 0.0
        %v2134 = vsel %vm1622, %v1106, 0.0
        %v2135 = vsel %vm1623, %v1107, 0.0
        %v2136 = vsel %vm1624, %v1108, 0.0
        %v2137 = vsel %vm1625, %v1109, 0.0
        %v2138 = vsel %vm1626, %v1110, 0.0
        %v2139 = vsel %vm1627, %v1111, 0.0
        %v2140 = vsel %vm1628, %v1112, 0.0
        %v2141 = vsel %vm1629, %v1113, 0.0
        %v2142 = vsel %vm1630, %v1114, 0.0
        %v2143 = vsel %vm1631, %v1115, 0.0
        %v2144 = vsel %vm1632, %v1116, 0.0
        %v2145 = vsel %vm1633, %v1117, 0.0
        %v2146 = vsel %vm1634, %v1118, 0.0
        %v2147 = vsel %vm1635, %v1119, 0.0
        %v2148 = vsel %vm1636, %v1120, 0.0
        %v2149 = vsel %vm1637, %v1121, 0.0
        %v2150 = vsel %vm1638, %v1122, 0.0
        %v2151 = vsel %vm1639, %v1123, 0.0
        %v2152 = vsel %vm1640, %v1124, 0.0
        %v2153 = vsel %vm1641, %v1125, 0.0
        %v2154 = vsel %vm1642, %v1126, 0.0
        %v2155 = vsel %vm1643, %v1127, 0.0
        %v2156 = vsel %vm1644, %v1128, 0.0
        %v2157 = vsel %vm1645, %v1129, 0.0
        %v2158 = vsel %vm1646, %v1130, 0.0
        %v2159 = vsel %vm1647, %v1131, 0.0
        %v2160 = vsel %vm1648, %v1132, 0.0
        %v2161 = vsel %vm1649, %v1133, 0.0
        %v2162 = vsel %vm1650, %v1134, 0.0
        %v2163 = vsel %vm1651, %v1135, 0.0
        %v2164 = vsel %vm1652, %v1136, 0.0
        %v2165 = vsel %vm1653, %v1137, 0.0
        %v2166 = vsel %vm1654, %v1138, 0.0
        %v2167 = vsel %vm1655, %v1139, 0.0
        %v2168 = vsel %vm1656, %v1140, 0.0
        %v2169 = vsel %vm1657, %v1141, 0.0
        %v2170 = vsel %vm1658, %v1142, 0.0
        %v2171 = vsel %vm1659, %v1143, 0.0
        %v2172 = vsel %vm1660, %v1144, 0.0
        %v2173 = vsel %vm1661, %v1145, 0.0
        %v2174 = vsel %vm1662, %v1146, 0.0
        %v2175 = vsel %vm1663, %v1147, 0.0
        %v2176 = vsel %vm1664, %v1148, 0.0
        %v2177 = vsel %vm1665, %v1149, 0.0
        %v2178 = vsel %vm1666, %v1150, 0.0
        %v2179 = vsel %vm1667, %v1151, 0.0
        %v2180 = vsel %vm1668, %v1152, 0.0
        %v2181 = vsel %vm1669, %v1153, 0.0
        %v2182 = vsel %vm1670, %v1154, 0.0
        %v2183 = vsel %vm1671, %v1155, 0.0
        %v2184 = vsel %vm1672, %v1156, 0.0
        %v2185 = vsel %vm1673, %v1157, 0.0
        %v2186 = vsel %vm1674, %v1158, 0.0
        %v2187 = vsel %vm1675, %v1159, 0.0
        %v2188 = vsel %vm1676, %v1160, 0.0
        %v2189 = vsel %vm1677, %v1161, 0.0
        %v2190 = vsel %vm1678, %v1162, 0.0
        %v2191 = vsel %vm1679, %v1163, 0.0
        %v2192 = vsel %vm1680, %v1164, 0.0
        %v2193 = vsel %vm1681, %v1165, 0.0
        %v2194 = vsel %vm1682, %v1166, 0.0
        %v2195 = vsel %vm1683, %v1167, 0.0
        %v2196 = vsel %vm1684, %v1168, 0.0
        %v2197 = vsel %vm1685, %v1169, 0.0
        %v2198 = vsel %vm1686, %v1170, 0.0
        %v2199 = vsel %vm1687, %v1171, 0.0
        %v2200 = vsel %vm1688, %v1172, 0.0
        %v2201 = vsel %vm1689, %v1173, 0.0
        %v2202 = vsel %vm1690, %v1174, 0.0
        %v2203 = vsel %vm1691, %v1175, 0.0
        %v2204 = vsel %vm1692, %v1176, 0.0
        %v2205 = vsel %vm1693, %v1177, 0.0
        %v2206 = vsel %vm1694, %v1178, 0.0
        %v2207 = vsel %vm1695, %v1179, 0.0
        %v2208 = vsel %vm1696, %v1180, 0.0
        %v2209 = vsel %vm1697, %v1181, 0.0
        %v2210 = vsel %vm1698, %v1182, 0.0
        %v2211 = vsel %vm1699, %v1183, 0.0
        %v2212 = vsel %vm1700, %v1184, 0.0
        %v2213 = vsel %vm1701, %v1185, 0.0
        %v2214 = vsel %vm1702, %v1186, 0.0
        %v2215 = vsel %vm1703, %v1187, 0.0
        %v2216 = vsel %vm1704, %v1188, 0.0
        %v2217 = vsel %vm1705, %v1189, 0.0
        %v2218 = vsel %vm1706, %v1190, 0.0
        %v2219 = vsel %vm1707, %v1191, 0.0
        %v2220 = vsel %vm1708, %v1192, 0.0
        %v2221 = vsel %vm1709, %v1193, 0.0
        %v2222 = vsel %vm1710, %v1194, 0.0
        %v2223 = vsel %vm1711, %v1195, 0.0
        %v2224 = vsel %vm1712, %v1196, 0.0
        %v2225 = vsel %vm1713, %v1197, 0.0
        %v2226 = vsel %vm1714, %v1198, 0.0
        %v2227 = vsel %vm1715, %v1199, 0.0
        %v2228 = vsel %vm1716, %v1200, 0.0
        %v2229 = vsel %vm1717, %v1201, 0.0
        %v2230 = vsel %vm1718, %v1202, 0.0
        %v2231 = vsel %vm1719, %v1203, 0.0
        %v2232 = vsel %vm1720, %v1204, 0.0
        %v2233 = vsel %vm1721, %v1205, 0.0
        %v2234 = vsel %vm1722, %v1206, 0.0
        %v2235 = vsel %vm1723, %v1207, 0.0
        %v2236 = vsel %vm1724, %v1208, 0.0
        %v2237 = vsel %vm1725, %v1209, 0.0
        %v2238 = vsel %vm1726, %v1210, 0.0
        %v2239 = vsel %vm1727, %v1211, 0.0
        %v2240 = vsel %vm1728, %v1212, 0.0
        %v2241 = vsel %vm1729, %v1213, 0.0
        %v2242 = vsel %vm1730, %v1214, 0.0
        %v2243 = vsel %vm1731, %v1215, 0.0
        %v2244 = vsel %vm1732, %v1216, 0.0
        %v2245 = vsel %vm1733, %v1217, 0.0
        %v2246 = vsel %vm1734, %v1218, 0.0
        %v2247 = vsel %vm1735, %v1219, 0.0
        %v2248 = vsel %vm1736, %v1220, 0.0
        %v2249 = vsel %vm1737, %v1221, 0.0
        %v2250 = vsel %vm1738, %v1222, 0.0
        %v2251 = vsel %vm1739, %v1223, 0.0
        %v2252 = vsel %vm1740, %v1224, 0.0
        %v2253 = vsel %vm1741, %v1225, 0.0
        %v2254 = vsel %vm1742, %v1226, 0.0
        %v2255 = vsel %vm1743, %v1227, 0.0
        %v2256 = vsel %vm1744, %v1228, 0.0
        %v2257 = vsel %vm1745, %v1229, 0.0
        %v2258 = vsel %vm1746, %v1230, 0.0
        %v2259 = vsel %vm1747, %v1231, 0.0
        %v2260 = vsel %vm1748, %v1232, 0.0
        %v2261 = vsel %vm1749, %v1233, 0.0
        %v2262 = vsel %vm1750, %v1234, 0.0
        %v2263 = vsel %vm1751, %v1235, 0.0
        %v2264 = vsel %vm1752, %v1236, 0.0
        %v2265 = vsel %vm1753, %v1237, 0.0
        %v2266 = vsel %vm1754, %v1238, 0.0
        %v2267 = vsel %vm1755, %v1239, 0.0
        %v2268 = vsel %vm1756, %v1240, 0.0
        %v2269 = vsel %vm1757, %v1241, 0.0
        %v2270 = vsel %vm1758, %v1242, 0.0
        %v2271 = vsel %vm1759, %v1243, 0.0
        %v2272 = vsel %vm1760, %v1244, 0.0
        %v2273 = vsel %vm1761, %v1245, 0.0
        %v2274 = vsel %vm1762, %v1246, 0.0
        %v2275 = vsel %vm1763, %v1247, 0.0
        %v2276 = vsel %vm1764, %v1248, 0.0
        %v2277 = vsel %vm1765, %v1249, 0.0
        %v2278 = vsel %vm1766, %v1250, 0.0
        %v2279 = vsel %vm1767, %v1251, 0.0
        %v2280 = vsel %vm1768, %v1252, 0.0
        %v2281 = vsel %vm1769, %v1253, 0.0
        %v2282 = vsel %vm1770, %v1254, 0.0
        %v2283 = vsel %vm1771, %v1255, 0.0
        %v2284 = vsel %vm1772, %v1256, 0.0
        %v2285 = vsel %vm1773, %v1257, 0.0
        %v2286 = vsel %vm1774, %v1258, 0.0
        %v2287 = vsel %vm1775, %v1259, 0.0
        %v2288 = vsel %vm1776, %v1260, 0.0
        %v2289 = vsel %vm1777, %v1261, 0.0
        %v2290 = vsel %vm1778, %v1262, 0.0
        %v2291 = vsel %vm1779, %v1263, 0.0
        %v2292 = vsel %vm1780, %v1264, 0.0
        %v2293 = vsel %vm1781, %v1265, 0.0
        %v2294 = vsel %vm1782, %v1266, 0.0
        %v2295 = vsel %vm1783, %v1267, 0.0
        %v2296 = vsel %vm1784, %v1268, 0.0
        %v2297 = vsel %vm1785, %v1269, 0.0
        %v2298 = vsel %vm1786, %v1270, 0.0
        %v2299 = vsel %vm1787, %v1271, 0.0
        %v2300 = vsel %vm1788, %v1272, 0.0
        %v2301 = vsel %vm1789, %v1273, 0.0
        %v2302 = vsel %vm1790, %v1274, 0.0
        %v2303 = vsel %vm1791, %v1275, 0.0
        %v2304 = vsel %vm1792, %v1276, 0.0
        %v2305 = vsel %vm1793, %v1277, 0.0
        %v2306 = vsel %vm1794, %v1278, 0.0
        %v2307 = vsel %vm1795, %v1279, 0.0
        %v2308 = vsel %vm1796, %v1280, 0.0
        %v2309 = vsel %vm1797, %v1281, 0.0
        %v2310 = vsel %vm1798, %v1282, 0.0
        %v2311 = vsel %vm1799, %v1283, 0.0
        %v2312 = vsel %vm1800, %v1284, 0.0
        %v2313 = vsel %vm1801, %v1285, 0.0
        %v2314 = vsel %vm1802, %v1286, 0.0
        %v2315 = vsel %vm1803, %v1287, 0.0
        %v2316 = vsel %vm1804, %v1288, 0.0
        %v2317 = vsel %vm1805, %v1289, 0.0
        %v2318 = vsel %vm1806, %v1290, 0.0
        %v2319 = vsel %vm1807, %v1291, 0.0
        %v2320 = vsel %vm1808, %v1292, 0.0
        %v2321 = vsel %vm1809, %v1293, 0.0
        %v2322 = vsel %vm1810, %v1294, 0.0
        %v2323 = vsel %vm1811, %v1295, 0.0
        %v2324 = vsel %vm1812, %v1296, 0.0
        %v2325 = vsel %vm1813, %v1297, 0.0
        %v2326 = vsel %vm1814, %v1298, 0.0
        %v2327 = vsel %vm1815, %v1299, 0.0
        %v2328 = vsel %vm1816, %v1300, 0.0
        %v2329 = vsel %vm1817, %v1301, 0.0
        %v2330 = vsel %vm1818, %v1302, 0.0
        %v2331 = vsel %vm1819, %v1303, 0.0
        %v2332 = vsel %vm1820, %v1304, 0.0
        %v2333 = vsel %vm1821, %v1305, 0.0
        %v2334 = vsel %vm1822, %v1306, 0.0
        %v2335 = vsel %vm1823, %v1307, 0.0
        %v2336 = vsel %vm1824, %v1308, 0.0
        %v2337 = vsel %vm1825, %v1309, 0.0
        %v2338 = vsel %vm1826, %v1310, 0.0
        %v2339 = vsel %vm1827, %v1311, 0.0
        %v2340 = vsel %vm1828, %v1312, 0.0
        %v2341 = vmul.f32 %v2085, 1.442695
        %v2342 = vpow.pop %v2341
        %v2343 = vmul.f32 %v2086, 1.442695
        %v2344 = vpow.pop %v2343
        %v2345 = vmul.f32 %v2087, 1.442695
        %v2346 = vpow.pop %v2345
        %v2347 = vmul.f32 %v2088, 1.442695
        %v2348 = vpow.pop %v2347
        %v2349 = vmul.f32 %v2089, 1.442695
        %v2350 = vpow.pop %v2349
        %v2351 = vmul.f32 %v2090, 1.442695
        %v2352 = vpow.pop %v2351
        %v2353 = vmul.f32 %v2091, 1.442695
        %v2354 = vpow.pop %v2353
        %v2355 = vmul.f32 %v2092, 1.442695
        %v2356 = vpow.pop %v2355
        %v2357 = vmul.f32 %v2093, 1.442695
        %v2358 = vpow.pop %v2357
        %v2359 = vmul.f32 %v2094, 1.442695
        %v2360 = vpow.pop %v2359
        %v2361 = vmul.f32 %v2095, 1.442695
        %v2362 = vpow.pop %v2361
        %v2363 = vmul.f32 %v2096, 1.442695
        %v2364 = vpow.pop %v2363
        %v2365 = vmul.f32 %v2097, 1.442695
        %v2366 = vpow.pop %v2365
        %v2367 = vmul.f32 %v2098, 1.442695
        %v2368 = vpow.pop %v2367
        %v2369 = vmul.f32 %v2099, 1.442695
        %v2370 = vpow.pop %v2369
        %v2371 = vmul.f32 %v2100, 1.442695
        %v2372 = vpow.pop %v2371
        %v2373 = vmul.f32 %v2101, 1.442695
        %v2374 = vpow.pop %v2373
        %v2375 = vmul.f32 %v2102, 1.442695
        %v2376 = vpow.pop %v2375
        %v2377 = vmul.f32 %v2103, 1.442695
        %v2378 = vpow.pop %v2377
        %v2379 = vmul.f32 %v2104, 1.442695
        %v2380 = vpow.pop %v2379
        %v2381 = vmul.f32 %v2105, 1.442695
        %v2382 = vpow.pop %v2381
        %v2383 = vmul.f32 %v2106, 1.442695
        %v2384 = vpow.pop %v2383
        %v2385 = vmul.f32 %v2107, 1.442695
        %v2386 = vpow.pop %v2385
        %v2387 = vmul.f32 %v2108, 1.442695
        %v2388 = vpow.pop %v2387
        %v2389 = vmul.f32 %v2109, 1.442695
        %v2390 = vpow.pop %v2389
        %v2391 = vmul.f32 %v2110, 1.442695
        %v2392 = vpow.pop %v2391
        %v2393 = vmul.f32 %v2111, 1.442695
        %v2394 = vpow.pop %v2393
        %v2395 = vmul.f32 %v2112, 1.442695
        %v2396 = vpow.pop %v2395
        %v2397 = vmul.f32 %v2113, 1.442695
        %v2398 = vpow.pop %v2397
        %v2399 = vmul.f32 %v2114, 1.442695
        %v2400 = vpow.pop %v2399
        %v2401 = vmul.f32 %v2115, 1.442695
        %v2402 = vpow.pop %v2401
        %v2403 = vmul.f32 %v2116, 1.442695
        %v2404 = vpow.pop %v2403
        %v2405 = vmul.f32 %v2117, 1.442695
        %v2406 = vpow.pop %v2405
        %v2407 = vmul.f32 %v2118, 1.442695
        %v2408 = vpow.pop %v2407
        %v2409 = vmul.f32 %v2119, 1.442695
        %v2410 = vpow.pop %v2409
        %v2411 = vmul.f32 %v2120, 1.442695
        %v2412 = vpow.pop %v2411
        %v2413 = vmul.f32 %v2121, 1.442695
        %v2414 = vpow.pop %v2413
        %v2415 = vmul.f32 %v2122, 1.442695
        %v2416 = vpow.pop %v2415
        %v2417 = vmul.f32 %v2123, 1.442695
        %v2418 = vpow.pop %v2417
        %v2419 = vmul.f32 %v2124, 1.442695
        %v2420 = vpow.pop %v2419
        %v2421 = vmul.f32 %v2125, 1.442695
        %v2422 = vpow.pop %v2421
        %v2423 = vmul.f32 %v2126, 1.442695
        %v2424 = vpow.pop %v2423
        %v2425 = vmul.f32 %v2127, 1.442695
        %v2426 = vpow.pop %v2425
        %v2427 = vmul.f32 %v2128, 1.442695
        %v2428 = vpow.pop %v2427
        %v2429 = vmul.f32 %v2129, 1.442695
        %v2430 = vpow.pop %v2429
        %v2431 = vmul.f32 %v2130, 1.442695
        %v2432 = vpow.pop %v2431
        %v2433 = vmul.f32 %v2131, 1.442695
        %v2434 = vpow.pop %v2433
        %v2435 = vmul.f32 %v2132, 1.442695
        %v2436 = vpow.pop %v2435
        %v2437 = vmul.f32 %v2133, 1.442695
        %v2438 = vpow.pop %v2437
        %v2439 = vmul.f32 %v2134, 1.442695
        %v2440 = vpow.pop %v2439
        %v2441 = vmul.f32 %v2135, 1.442695
        %v2442 = vpow.pop %v2441
        %v2443 = vmul.f32 %v2136, 1.442695
        %v2444 = vpow.pop %v2443
        %v2445 = vmul.f32 %v2137, 1.442695
        %v2446 = vpow.pop %v2445
        %v2447 = vmul.f32 %v2138, 1.442695
        %v2448 = vpow.pop %v2447
        %v2449 = vmul.f32 %v2139, 1.442695
        %v2450 = vpow.pop %v2449
        %v2451 = vmul.f32 %v2140, 1.442695
        %v2452 = vpow.pop %v2451
        %v2453 = vmul.f32 %v2141, 1.442695
        %v2454 = vpow.pop %v2453
        %v2455 = vmul.f32 %v2142, 1.442695
        %v2456 = vpow.pop %v2455
        %v2457 = vmul.f32 %v2143, 1.442695
        %v2458 = vpow.pop %v2457
        %v2459 = vmul.f32 %v2144, 1.442695
        %v2460 = vpow.pop %v2459
        %v2461 = vmul.f32 %v2145, 1.442695
        %v2462 = vpow.pop %v2461
        %v2463 = vmul.f32 %v2146, 1.442695
        %v2464 = vpow.pop %v2463
        %v2465 = vmul.f32 %v2147, 1.442695
        %v2466 = vpow.pop %v2465
        %v2467 = vmul.f32 %v2148, 1.442695
        %v2468 = vpow.pop %v2467
        %v2469 = vmul.f32 %v2149, 1.442695
        %v2470 = vpow.pop %v2469
        %v2471 = vmul.f32 %v2150, 1.442695
        %v2472 = vpow.pop %v2471
        %v2473 = vmul.f32 %v2151, 1.442695
        %v2474 = vpow.pop %v2473
        %v2475 = vmul.f32 %v2152, 1.442695
        %v2476 = vpow.pop %v2475
        %v2477 = vmul.f32 %v2153, 1.442695
        %v2478 = vpow.pop %v2477
        %v2479 = vmul.f32 %v2154, 1.442695
        %v2480 = vpow.pop %v2479
        %v2481 = vmul.f32 %v2155, 1.442695
        %v2482 = vpow.pop %v2481
        %v2483 = vmul.f32 %v2156, 1.442695
        %v2484 = vpow.pop %v2483
        %v2485 = vmul.f32 %v2157, 1.442695
        %v2486 = vpow.pop %v2485
        %v2487 = vmul.f32 %v2158, 1.442695
        %v2488 = vpow.pop %v2487
        %v2489 = vmul.f32 %v2159, 1.442695
        %v2490 = vpow.pop %v2489
        %v2491 = vmul.f32 %v2160, 1.442695
        %v2492 = vpow.pop %v2491
        %v2493 = vmul.f32 %v2161, 1.442695
        %v2494 = vpow.pop %v2493
        %v2495 = vmul.f32 %v2162, 1.442695
        %v2496 = vpow.pop %v2495
        %v2497 = vmul.f32 %v2163, 1.442695
        %v2498 = vpow.pop %v2497
        %v2499 = vmul.f32 %v2164, 1.442695
        %v2500 = vpow.pop %v2499
        %v2501 = vmul.f32 %v2165, 1.442695
        %v2502 = vpow.pop %v2501
        %v2503 = vmul.f32 %v2166, 1.442695
        %v2504 = vpow.pop %v2503
        %v2505 = vmul.f32 %v2167, 1.442695
        %v2506 = vpow.pop %v2505
        %v2507 = vmul.f32 %v2168, 1.442695
        %v2508 = vpow.pop %v2507
        %v2509 = vmul.f32 %v2169, 1.442695
        %v2510 = vpow.pop %v2509
        %v2511 = vmul.f32 %v2170, 1.442695
        %v2512 = vpow.pop %v2511
        %v2513 = vmul.f32 %v2171, 1.442695
        %v2514 = vpow.pop %v2513
        %v2515 = vmul.f32 %v2172, 1.442695
        %v2516 = vpow.pop %v2515
        %v2517 = vmul.f32 %v2173, 1.442695
        %v2518 = vpow.pop %v2517
        %v2519 = vmul.f32 %v2174, 1.442695
        %v2520 = vpow.pop %v2519
        %v2521 = vmul.f32 %v2175, 1.442695
        %v2522 = vpow.pop %v2521
        %v2523 = vmul.f32 %v2176, 1.442695
        %v2524 = vpow.pop %v2523
        %v2525 = vmul.f32 %v2177, 1.442695
        %v2526 = vpow.pop %v2525
        %v2527 = vmul.f32 %v2178, 1.442695
        %v2528 = vpow.pop %v2527
        %v2529 = vmul.f32 %v2179, 1.442695
        %v2530 = vpow.pop %v2529
        %v2531 = vmul.f32 %v2180, 1.442695
        %v2532 = vpow.pop %v2531
        %v2533 = vmul.f32 %v2181, 1.442695
        %v2534 = vpow.pop %v2533
        %v2535 = vmul.f32 %v2182, 1.442695
        %v2536 = vpow.pop %v2535
        %v2537 = vmul.f32 %v2183, 1.442695
        %v2538 = vpow.pop %v2537
        %v2539 = vmul.f32 %v2184, 1.442695
        %v2540 = vpow.pop %v2539
        %v2541 = vmul.f32 %v2185, 1.442695
        %v2542 = vpow.pop %v2541
        %v2543 = vmul.f32 %v2186, 1.442695
        %v2544 = vpow.pop %v2543
        %v2545 = vmul.f32 %v2187, 1.442695
        %v2546 = vpow.pop %v2545
        %v2547 = vmul.f32 %v2188, 1.442695
        %v2548 = vpow.pop %v2547
        %v2549 = vmul.f32 %v2189, 1.442695
        %v2550 = vpow.pop %v2549
        %v2551 = vmul.f32 %v2190, 1.442695
        %v2552 = vpow.pop %v2551
        %v2553 = vmul.f32 %v2191, 1.442695
        %v2554 = vpow.pop %v2553
        %v2555 = vmul.f32 %v2192, 1.442695
        %v2556 = vpow.pop %v2555
        %v2557 = vmul.f32 %v2193, 1.442695
        %v2558 = vpow.pop %v2557
        %v2559 = vmul.f32 %v2194, 1.442695
        %v2560 = vpow.pop %v2559
        %v2561 = vmul.f32 %v2195, 1.442695
        %v2562 = vpow.pop %v2561
        %v2563 = vmul.f32 %v2196, 1.442695
        %v2564 = vpow.pop %v2563
        %v2565 = vmul.f32 %v2197, 1.442695
        %v2566 = vpow.pop %v2565
        %v2567 = vmul.f32 %v2198, 1.442695
        %v2568 = vpow.pop %v2567
        %v2569 = vmul.f32 %v2199, 1.442695
        %v2570 = vpow.pop %v2569
        %v2571 = vmul.f32 %v2200, 1.442695
        %v2572 = vpow.pop %v2571
        %v2573 = vmul.f32 %v2201, 1.442695
        %v2574 = vpow.pop %v2573
        %v2575 = vmul.f32 %v2202, 1.442695
        %v2576 = vpow.pop %v2575
        %v2577 = vmul.f32 %v2203, 1.442695
        %v2578 = vpow.pop %v2577
        %v2579 = vmul.f32 %v2204, 1.442695
        %v2580 = vpow.pop %v2579
        %v2581 = vmul.f32 %v2205, 1.442695
        %v2582 = vpow.pop %v2581
        %v2583 = vmul.f32 %v2206, 1.442695
        %v2584 = vpow.pop %v2583
        %v2585 = vmul.f32 %v2207, 1.442695
        %v2586 = vpow.pop %v2585
        %v2587 = vmul.f32 %v2208, 1.442695
        %v2588 = vpow.pop %v2587
        %v2589 = vmul.f32 %v2209, 1.442695
        %v2590 = vpow.pop %v2589
        %v2591 = vmul.f32 %v2210, 1.442695
        %v2592 = vpow.pop %v2591
        %v2593 = vmul.f32 %v2211, 1.442695
        %v2594 = vpow.pop %v2593
        %v2595 = vmul.f32 %v2212, 1.442695
        %v2596 = vpow.pop %v2595
        %v2597 = vmul.f32 %v2213, 1.442695
        %v2598 = vpow.pop %v2597
        %v2599 = vmul.f32 %v2214, 1.442695
        %v2600 = vpow.pop %v2599
        %v2601 = vmul.f32 %v2215, 1.442695
        %v2602 = vpow.pop %v2601
        %v2603 = vmul.f32 %v2216, 1.442695
        %v2604 = vpow.pop %v2603
        %v2605 = vmul.f32 %v2217, 1.442695
        %v2606 = vpow.pop %v2605
        %v2607 = vmul.f32 %v2218, 1.442695
        %v2608 = vpow.pop %v2607
        %v2609 = vmul.f32 %v2219, 1.442695
        %v2610 = vpow.pop %v2609
        %v2611 = vmul.f32 %v2220, 1.442695
        %v2612 = vpow.pop %v2611
        %v2613 = vmul.f32 %v2221, 1.442695
        %v2614 = vpow.pop %v2613
        %v2615 = vmul.f32 %v2222, 1.442695
        %v2616 = vpow.pop %v2615
        %v2617 = vmul.f32 %v2223, 1.442695
        %v2618 = vpow.pop %v2617
        %v2619 = vmul.f32 %v2224, 1.442695
        %v2620 = vpow.pop %v2619
        %v2621 = vmul.f32 %v2225, 1.442695
        %v2622 = vpow.pop %v2621
        %v2623 = vmul.f32 %v2226, 1.442695
        %v2624 = vpow.pop %v2623
        %v2625 = vmul.f32 %v2227, 1.442695
        %v2626 = vpow.pop %v2625
        %v2627 = vmul.f32 %v2228, 1.442695
        %v2628 = vpow.pop %v2627
        %v2629 = vmul.f32 %v2229, 1.442695
        %v2630 = vpow.pop %v2629
        %v2631 = vmul.f32 %v2230, 1.442695
        %v2632 = vpow.pop %v2631
        %v2633 = vmul.f32 %v2231, 1.442695
        %v2634 = vpow.pop %v2633
        %v2635 = vmul.f32 %v2232, 1.442695
        %v2636 = vpow.pop %v2635
        %v2637 = vmul.f32 %v2233, 1.442695
        %v2638 = vpow.pop %v2637
        %v2639 = vmul.f32 %v2234, 1.442695
        %v2640 = vpow.pop %v2639
        %v2641 = vmul.f32 %v2235, 1.442695
        %v2642 = vpow.pop %v2641
        %v2643 = vmul.f32 %v2236, 1.442695
        %v2644 = vpow.pop %v2643
        %v2645 = vmul.f32 %v2237, 1.442695
        %v2646 = vpow.pop %v2645
        %v2647 = vmul.f32 %v2238, 1.442695
        %v2648 = vpow.pop %v2647
        %v2649 = vmul.f32 %v2239, 1.442695
        %v2650 = vpow.pop %v2649
        %v2651 = vmul.f32 %v2240, 1.442695
        %v2652 = vpow.pop %v2651
        %v2653 = vmul.f32 %v2241, 1.442695
        %v2654 = vpow.pop %v2653
        %v2655 = vmul.f32 %v2242, 1.442695
        %v2656 = vpow.pop %v2655
        %v2657 = vmul.f32 %v2243, 1.442695
        %v2658 = vpow.pop %v2657
        %v2659 = vmul.f32 %v2244, 1.442695
        %v2660 = vpow.pop %v2659
        %v2661 = vmul.f32 %v2245, 1.442695
        %v2662 = vpow.pop %v2661
        %v2663 = vmul.f32 %v2246, 1.442695
        %v2664 = vpow.pop %v2663
        %v2665 = vmul.f32 %v2247, 1.442695
        %v2666 = vpow.pop %v2665
        %v2667 = vmul.f32 %v2248, 1.442695
        %v2668 = vpow.pop %v2667
        %v2669 = vmul.f32 %v2249, 1.442695
        %v2670 = vpow.pop %v2669
        %v2671 = vmul.f32 %v2250, 1.442695
        %v2672 = vpow.pop %v2671
        %v2673 = vmul.f32 %v2251, 1.442695
        %v2674 = vpow.pop %v2673
        %v2675 = vmul.f32 %v2252, 1.442695
        %v2676 = vpow.pop %v2675
        %v2677 = vmul.f32 %v2253, 1.442695
        %v2678 = vpow.pop %v2677
        %v2679 = vmul.f32 %v2254, 1.442695
        %v2680 = vpow.pop %v2679
        %v2681 = vmul.f32 %v2255, 1.442695
        %v2682 = vpow.pop %v2681
        %v2683 = vmul.f32 %v2256, 1.442695
        %v2684 = vpow.pop %v2683
        %v2685 = vmul.f32 %v2257, 1.442695
        %v2686 = vpow.pop %v2685
        %v2687 = vmul.f32 %v2258, 1.442695
        %v2688 = vpow.pop %v2687
        %v2689 = vmul.f32 %v2259, 1.442695
        %v2690 = vpow.pop %v2689
        %v2691 = vmul.f32 %v2260, 1.442695
        %v2692 = vpow.pop %v2691
        %v2693 = vmul.f32 %v2261, 1.442695
        %v2694 = vpow.pop %v2693
        %v2695 = vmul.f32 %v2262, 1.442695
        %v2696 = vpow.pop %v2695
        %v2697 = vmul.f32 %v2263, 1.442695
        %v2698 = vpow.pop %v2697
        %v2699 = vmul.f32 %v2264, 1.442695
        %v2700 = vpow.pop %v2699
        %v2701 = vmul.f32 %v2265, 1.442695
        %v2702 = vpow.pop %v2701
        %v2703 = vmul.f32 %v2266, 1.442695
        %v2704 = vpow.pop %v2703
        %v2705 = vmul.f32 %v2267, 1.442695
        %v2706 = vpow.pop %v2705
        %v2707 = vmul.f32 %v2268, 1.442695
        %v2708 = vpow.pop %v2707
        %v2709 = vmul.f32 %v2269, 1.442695
        %v2710 = vpow.pop %v2709
        %v2711 = vmul.f32 %v2270, 1.442695
        %v2712 = vpow.pop %v2711
        %v2713 = vmul.f32 %v2271, 1.442695
        %v2714 = vpow.pop %v2713
        %v2715 = vmul.f32 %v2272, 1.442695
        %v2716 = vpow.pop %v2715
        %v2717 = vmul.f32 %v2273, 1.442695
        %v2718 = vpow.pop %v2717
        %v2719 = vmul.f32 %v2274, 1.442695
        %v2720 = vpow.pop %v2719
        %v2721 = vmul.f32 %v2275, 1.442695
        %v2722 = vpow.pop %v2721
        %v2723 = vmul.f32 %v2276, 1.442695
        %v2724 = vpow.pop %v2723
        %v2725 = vmul.f32 %v2277, 1.442695
        %v2726 = vpow.pop %v2725
        %v2727 = vmul.f32 %v2278, 1.442695
        %v2728 = vpow.pop %v2727
        %v2729 = vmul.f32 %v2279, 1.442695
        %v2730 = vpow.pop %v2729
        %v2731 = vmul.f32 %v2280, 1.442695
        %v2732 = vpow.pop %v2731
        %v2733 = vmul.f32 %v2281, 1.442695
        %v2734 = vpow.pop %v2733
        %v2735 = vmul.f32 %v2282, 1.442695
        %v2736 = vpow.pop %v2735
        %v2737 = vmul.f32 %v2283, 1.442695
        %v2738 = vpow.pop %v2737
        %v2739 = vmul.f32 %v2284, 1.442695
        %v2740 = vpow.pop %v2739
        %v2741 = vmul.f32 %v2285, 1.442695
        %v2742 = vpow.pop %v2741
        %v2743 = vmul.f32 %v2286, 1.442695
        %v2744 = vpow.pop %v2743
        %v2745 = vmul.f32 %v2287, 1.442695
        %v2746 = vpow.pop %v2745
        %v2747 = vmul.f32 %v2288, 1.442695
        %v2748 = vpow.pop %v2747
        %v2749 = vmul.f32 %v2289, 1.442695
        %v2750 = vpow.pop %v2749
        %v2751 = vmul.f32 %v2290, 1.442695
        %v2752 = vpow.pop %v2751
        %v2753 = vmul.f32 %v2291, 1.442695
        %v2754 = vpow.pop %v2753
        %v2755 = vmul.f32 %v2292, 1.442695
        %v2756 = vpow.pop %v2755
        %v2757 = vmul.f32 %v2293, 1.442695
        %v2758 = vpow.pop %v2757
        %v2759 = vmul.f32 %v2294, 1.442695
        %v2760 = vpow.pop %v2759
        %v2761 = vmul.f32 %v2295, 1.442695
        %v2762 = vpow.pop %v2761
        %v2763 = vmul.f32 %v2296, 1.442695
        %v2764 = vpow.pop %v2763
        %v2765 = vmul.f32 %v2297, 1.442695
        %v2766 = vpow.pop %v2765
        %v2767 = vmul.f32 %v2298, 1.442695
        %v2768 = vpow.pop %v2767
        %v2769 = vmul.f32 %v2299, 1.442695
        %v2770 = vpow.pop %v2769
        %v2771 = vmul.f32 %v2300, 1.442695
        %v2772 = vpow.pop %v2771
        %v2773 = vmul.f32 %v2301, 1.442695
        %v2774 = vpow.pop %v2773
        %v2775 = vmul.f32 %v2302, 1.442695
        %v2776 = vpow.pop %v2775
        %v2777 = vmul.f32 %v2303, 1.442695
        %v2778 = vpow.pop %v2777
        %v2779 = vmul.f32 %v2304, 1.442695
        %v2780 = vpow.pop %v2779
        %v2781 = vmul.f32 %v2305, 1.442695
        %v2782 = vpow.pop %v2781
        %v2783 = vmul.f32 %v2306, 1.442695
        %v2784 = vpow.pop %v2783
        %v2785 = vmul.f32 %v2307, 1.442695
        %v2786 = vpow.pop %v2785
        %v2787 = vmul.f32 %v2308, 1.442695
        %v2788 = vpow.pop %v2787
        %v2789 = vmul.f32 %v2309, 1.442695
        %v2790 = vpow.pop %v2789
        %v2791 = vmul.f32 %v2310, 1.442695
        %v2792 = vpow.pop %v2791
        %v2793 = vmul.f32 %v2311, 1.442695
        %v2794 = vpow.pop %v2793
        %v2795 = vmul.f32 %v2312, 1.442695
        %v2796 = vpow.pop %v2795
        %v2797 = vmul.f32 %v2313, 1.442695
        %v2798 = vpow.pop %v2797
        %v2799 = vmul.f32 %v2314, 1.442695
        %v2800 = vpow.pop %v2799
        %v2801 = vmul.f32 %v2315, 1.442695
        %v2802 = vpow.pop %v2801
        %v2803 = vmul.f32 %v2316, 1.442695
        %v2804 = vpow.pop %v2803
        %v2805 = vmul.f32 %v2317, 1.442695
        %v2806 = vpow.pop %v2805
        %v2807 = vmul.f32 %v2318, 1.442695
        %v2808 = vpow.pop %v2807
        %v2809 = vmul.f32 %v2319, 1.442695
        %v2810 = vpow.pop %v2809
        %v2811 = vmul.f32 %v2320, 1.442695
        %v2812 = vpow.pop %v2811
        %v2813 = vmul.f32 %v2321, 1.442695
        %v2814 = vpow.pop %v2813
        %v2815 = vmul.f32 %v2322, 1.442695
        %v2816 = vpow.pop %v2815
        %v2817 = vmul.f32 %v2323, 1.442695
        %v2818 = vpow.pop %v2817
        %v2819 = vmul.f32 %v2324, 1.442695
        %v2820 = vpow.pop %v2819
        %v2821 = vmul.f32 %v2325, 1.442695
        %v2822 = vpow.pop %v2821
        %v2823 = vmul.f32 %v2326, 1.442695
        %v2824 = vpow.pop %v2823
        %v2825 = vmul.f32 %v2327, 1.442695
        %v2826 = vpow.pop %v2825
        %v2827 = vmul.f32 %v2328, 1.442695
        %v2828 = vpow.pop %v2827
        %v2829 = vmul.f32 %v2329, 1.442695
        %v2830 = vpow.pop %v2829
        %v2831 = vmul.f32 %v2330, 1.442695
        %v2832 = vpow.pop %v2831
        %v2833 = vmul.f32 %v2331, 1.442695
        %v2834 = vpow.pop %v2833
        %v2835 = vmul.f32 %v2332, 1.442695
        %v2836 = vpow.pop %v2835
        %v2837 = vmul.f32 %v2333, 1.442695
        %v2838 = vpow.pop %v2837
        %v2839 = vmul.f32 %v2334, 1.442695
        %v2840 = vpow.pop %v2839
        %v2841 = vmul.f32 %v2335, 1.442695
        %v2842 = vpow.pop %v2841
        %v2843 = vmul.f32 %v2336, 1.442695
        %v2844 = vpow.pop %v2843
        %v2845 = vmul.f32 %v2337, 1.442695
        %v2846 = vpow.pop %v2845
        %v2847 = vmul.f32 %v2338, 1.442695
        %v2848 = vpow.pop %v2847
        %v2849 = vmul.f32 %v2339, 1.442695
        %v2850 = vpow.pop %v2849
        %v2851 = vmul.f32 %v2340, 1.442695
        %v2852 = vpow.pop %v2851
        %v2853 = vmul.f32 %v1829, %v1829
        %v2854 = vmul.f32 %v1830, %v1830
        %v2855 = vmul.f32 %v1831, %v1831
        %v2856 = vmul.f32 %v1832, %v1832
        %v2857 = vmul.f32 %v1833, %v1833
        %v2858 = vmul.f32 %v1834, %v1834
        %v2859 = vmul.f32 %v1835, %v1835
        %v2860 = vmul.f32 %v1836, %v1836
        %v2861 = vmul.f32 %v1837, %v1837
        %v2862 = vmul.f32 %v1838, %v1838
        %v2863 = vmul.f32 %v1839, %v1839
        %v2864 = vmul.f32 %v1840, %v1840
        %v2865 = vmul.f32 %v1841, %v1841
        %v2866 = vmul.f32 %v1842, %v1842
        %v2867 = vmul.f32 %v1843, %v1843
        %v2868 = vmul.f32 %v1844, %v1844
        %v2869 = vmul.f32 %v1845, %v1845
        %v2870 = vmul.f32 %v1846, %v1846
        %v2871 = vmul.f32 %v1847, %v1847
        %v2872 = vmul.f32 %v1848, %v1848
        %v2873 = vmul.f32 %v1849, %v1849
        %v2874 = vmul.f32 %v1850, %v1850
        %v2875 = vmul.f32 %v1851, %v1851
        %v2876 = vmul.f32 %v1852, %v1852
        %v2877 = vmul.f32 %v1853, %v1853
        %v2878 = vmul.f32 %v1854, %v1854
        %v2879 = vmul.f32 %v1855, %v1855
        %v2880 = vmul.f32 %v1856, %v1856
        %v2881 = vmul.f32 %v1857, %v1857
        %v2882 = vmul.f32 %v1858, %v1858
        %v2883 = vmul.f32 %v1859, %v1859
        %v2884 = vmul.f32 %v1860, %v1860
        %v2885 = vmul.f32 %v1861, %v1861
        %v2886 = vmul.f32 %v1862, %v1862
        %v2887 = vmul.f32 %v1863, %v1863
        %v2888 = vmul.f32 %v1864, %v1864
        %v2889 = vmul.f32 %v1865, %v1865
        %v2890 = vmul.f32 %v1866, %v1866
        %v2891 = vmul.f32 %v1867, %v1867
        %v2892 = vmul.f32 %v1868, %v1868
        %v2893 = vmul.f32 %v1869, %v1869
        %v2894 = vmul.f32 %v1870, %v1870
        %v2895 = vmul.f32 %v1871, %v1871
        %v2896 = vmul.f32 %v1872, %v1872
        %v2897 = vmul.f32 %v1873, %v1873
        %v2898 = vmul.f32 %v1874, %v1874
        %v2899 = vmul.f32 %v1875, %v1875
        %v2900 = vmul.f32 %v1876, %v1876
        %v2901 = vmul.f32 %v1877, %v1877
        %v2902 = vmul.f32 %v1878, %v1878
        %v2903 = vmul.f32 %v1879, %v1879
        %v2904 = vmul.f32 %v1880, %v1880
        %v2905 = vmul.f32 %v1881, %v1881
        %v2906 = vmul.f32 %v1882, %v1882
        %v2907 = vmul.f32 %v1883, %v1883
        %v2908 = vmul.f32 %v1884, %v1884
        %v2909 = vmul.f32 %v1885, %v1885
        %v2910 = vmul.f32 %v1886, %v1886
        %v2911 = vmul.f32 %v1887, %v1887
        %v2912 = vmul.f32 %v1888, %v1888
        %v2913 = vmul.f32 %v1889, %v1889
        %v2914 = vmul.f32 %v1890, %v1890
        %v2915 = vmul.f32 %v1891, %v1891
        %v2916 = vmul.f32 %v1892, %v1892
        %v2917 = vmul.f32 %v1893, %v1893
        %v2918 = vmul.f32 %v1894, %v1894
        %v2919 = vmul.f32 %v1895, %v1895
        %v2920 = vmul.f32 %v1896, %v1896
        %v2921 = vmul.f32 %v1897, %v1897
        %v2922 = vmul.f32 %v1898, %v1898
        %v2923 = vmul.f32 %v1899, %v1899
        %v2924 = vmul.f32 %v1900, %v1900
        %v2925 = vmul.f32 %v1901, %v1901
        %v2926 = vmul.f32 %v1902, %v1902
        %v2927 = vmul.f32 %v1903, %v1903
        %v2928 = vmul.f32 %v1904, %v1904
        %v2929 = vmul.f32 %v1905, %v1905
        %v2930 = vmul.f32 %v1906, %v1906
        %v2931 = vmul.f32 %v1907, %v1907
        %v2932 = vmul.f32 %v1908, %v1908
        %v2933 = vmul.f32 %v1909, %v1909
        %v2934 = vmul.f32 %v1910, %v1910
        %v2935 = vmul.f32 %v1911, %v1911
        %v2936 = vmul.f32 %v1912, %v1912
        %v2937 = vmul.f32 %v1913, %v1913
        %v2938 = vmul.f32 %v1914, %v1914
        %v2939 = vmul.f32 %v1915, %v1915
        %v2940 = vmul.f32 %v1916, %v1916
        %v2941 = vmul.f32 %v1917, %v1917
        %v2942 = vmul.f32 %v1918, %v1918
        %v2943 = vmul.f32 %v1919, %v1919
        %v2944 = vmul.f32 %v1920, %v1920
        %v2945 = vmul.f32 %v1921, %v1921
        %v2946 = vmul.f32 %v1922, %v1922
        %v2947 = vmul.f32 %v1923, %v1923
        %v2948 = vmul.f32 %v1924, %v1924
        %v2949 = vmul.f32 %v1925, %v1925
        %v2950 = vmul.f32 %v1926, %v1926
        %v2951 = vmul.f32 %v1927, %v1927
        %v2952 = vmul.f32 %v1928, %v1928
        %v2953 = vmul.f32 %v1929, %v1929
        %v2954 = vmul.f32 %v1930, %v1930
        %v2955 = vmul.f32 %v1931, %v1931
        %v2956 = vmul.f32 %v1932, %v1932
        %v2957 = vmul.f32 %v1933, %v1933
        %v2958 = vmul.f32 %v1934, %v1934
        %v2959 = vmul.f32 %v1935, %v1935
        %v2960 = vmul.f32 %v1936, %v1936
        %v2961 = vmul.f32 %v1937, %v1937
        %v2962 = vmul.f32 %v1938, %v1938
        %v2963 = vmul.f32 %v1939, %v1939
        %v2964 = vmul.f32 %v1940, %v1940
        %v2965 = vmul.f32 %v1941, %v1941
        %v2966 = vmul.f32 %v1942, %v1942
        %v2967 = vmul.f32 %v1943, %v1943
        %v2968 = vmul.f32 %v1944, %v1944
        %v2969 = vmul.f32 %v1945, %v1945
        %v2970 = vmul.f32 %v1946, %v1946
        %v2971 = vmul.f32 %v1947, %v1947
        %v2972 = vmul.f32 %v1948, %v1948
        %v2973 = vmul.f32 %v1949, %v1949
        %v2974 = vmul.f32 %v1950, %v1950
        %v2975 = vmul.f32 %v1951, %v1951
        %v2976 = vmul.f32 %v1952, %v1952
        %v2977 = vmul.f32 %v1953, %v1953
        %v2978 = vmul.f32 %v1954, %v1954
        %v2979 = vmul.f32 %v1955, %v1955
        %v2980 = vmul.f32 %v1956, %v1956
        %v2981 = vmul.f32 %v1957, %v1957
        %v2982 = vmul.f32 %v1958, %v1958
        %v2983 = vmul.f32 %v1959, %v1959
        %v2984 = vmul.f32 %v1960, %v1960
        %v2985 = vmul.f32 %v1961, %v1961
        %v2986 = vmul.f32 %v1962, %v1962
        %v2987 = vmul.f32 %v1963, %v1963
        %v2988 = vmul.f32 %v1964, %v1964
        %v2989 = vmul.f32 %v1965, %v1965
        %v2990 = vmul.f32 %v1966, %v1966
        %v2991 = vmul.f32 %v1967, %v1967
        %v2992 = vmul.f32 %v1968, %v1968
        %v2993 = vmul.f32 %v1969, %v1969
        %v2994 = vmul.f32 %v1970, %v1970
        %v2995 = vmul.f32 %v1971, %v1971
        %v2996 = vmul.f32 %v1972, %v1972
        %v2997 = vmul.f32 %v1973, %v1973
        %v2998 = vmul.f32 %v1974, %v1974
        %v2999 = vmul.f32 %v1975, %v1975
        %v3000 = vmul.f32 %v1976, %v1976
        %v3001 = vmul.f32 %v1977, %v1977
        %v3002 = vmul.f32 %v1978, %v1978
        %v3003 = vmul.f32 %v1979, %v1979
        %v3004 = vmul.f32 %v1980, %v1980
        %v3005 = vmul.f32 %v1981, %v1981
        %v3006 = vmul.f32 %v1982, %v1982
        %v3007 = vmul.f32 %v1983, %v1983
        %v3008 = vmul.f32 %v1984, %v1984
        %v3009 = vmul.f32 %v1985, %v1985
        %v3010 = vmul.f32 %v1986, %v1986
        %v3011 = vmul.f32 %v1987, %v1987
        %v3012 = vmul.f32 %v1988, %v1988
        %v3013 = vmul.f32 %v1989, %v1989
        %v3014 = vmul.f32 %v1990, %v1990
        %v3015 = vmul.f32 %v1991, %v1991
        %v3016 = vmul.f32 %v1992, %v1992
        %v3017 = vmul.f32 %v1993, %v1993
        %v3018 = vmul.f32 %v1994, %v1994
        %v3019 = vmul.f32 %v1995, %v1995
        %v3020 = vmul.f32 %v1996, %v1996
        %v3021 = vmul.f32 %v1997, %v1997
        %v3022 = vmul.f32 %v1998, %v1998
        %v3023 = vmul.f32 %v1999, %v1999
        %v3024 = vmul.f32 %v2000, %v2000
        %v3025 = vmul.f32 %v2001, %v2001
        %v3026 = vmul.f32 %v2002, %v2002
        %v3027 = vmul.f32 %v2003, %v2003
        %v3028 = vmul.f32 %v2004, %v2004
        %v3029 = vmul.f32 %v2005, %v2005
        %v3030 = vmul.f32 %v2006, %v2006
        %v3031 = vmul.f32 %v2007, %v2007
        %v3032 = vmul.f32 %v2008, %v2008
        %v3033 = vmul.f32 %v2009, %v2009
        %v3034 = vmul.f32 %v2010, %v2010
        %v3035 = vmul.f32 %v2011, %v2011
        %v3036 = vmul.f32 %v2012, %v2012
        %v3037 = vmul.f32 %v2013, %v2013
        %v3038 = vmul.f32 %v2014, %v2014
        %v3039 = vmul.f32 %v2015, %v2015
        %v3040 = vmul.f32 %v2016, %v2016
        %v3041 = vmul.f32 %v2017, %v2017
        %v3042 = vmul.f32 %v2018, %v2018
        %v3043 = vmul.f32 %v2019, %v2019
        %v3044 = vmul.f32 %v2020, %v2020
        %v3045 = vmul.f32 %v2021, %v2021
        %v3046 = vmul.f32 %v2022, %v2022
        %v3047 = vmul.f32 %v2023, %v2023
        %v3048 = vmul.f32 %v2024, %v2024
        %v3049 = vmul.f32 %v2025, %v2025
        %v3050 = vmul.f32 %v2026, %v2026
        %v3051 = vmul.f32 %v2027, %v2027
        %v3052 = vmul.f32 %v2028, %v2028
        %v3053 = vmul.f32 %v2029, %v2029
        %v3054 = vmul.f32 %v2030, %v2030
        %v3055 = vmul.f32 %v2031, %v2031
        %v3056 = vmul.f32 %v2032, %v2032
        %v3057 = vmul.f32 %v2033, %v2033
        %v3058 = vmul.f32 %v2034, %v2034
        %v3059 = vmul.f32 %v2035, %v2035
        %v3060 = vmul.f32 %v2036, %v2036
        %v3061 = vmul.f32 %v2037, %v2037
        %v3062 = vmul.f32 %v2038, %v2038
        %v3063 = vmul.f32 %v2039, %v2039
        %v3064 = vmul.f32 %v2040, %v2040
        %v3065 = vmul.f32 %v2041, %v2041
        %v3066 = vmul.f32 %v2042, %v2042
        %v3067 = vmul.f32 %v2043, %v2043
        %v3068 = vmul.f32 %v2044, %v2044
        %v3069 = vmul.f32 %v2045, %v2045
        %v3070 = vmul.f32 %v2046, %v2046
        %v3071 = vmul.f32 %v2047, %v2047
        %v3072 = vmul.f32 %v2048, %v2048
        %v3073 = vmul.f32 %v2049, %v2049
        %v3074 = vmul.f32 %v2050, %v2050
        %v3075 = vmul.f32 %v2051, %v2051
        %v3076 = vmul.f32 %v2052, %v2052
        %v3077 = vmul.f32 %v2053, %v2053
        %v3078 = vmul.f32 %v2054, %v2054
        %v3079 = vmul.f32 %v2055, %v2055
        %v3080 = vmul.f32 %v2056, %v2056
        %v3081 = vmul.f32 %v2057, %v2057
        %v3082 = vmul.f32 %v2058, %v2058
        %v3083 = vmul.f32 %v2059, %v2059
        %v3084 = vmul.f32 %v2060, %v2060
        %v3085 = vmul.f32 %v2061, %v2061
        %v3086 = vmul.f32 %v2062, %v2062
        %v3087 = vmul.f32 %v2063, %v2063
        %v3088 = vmul.f32 %v2064, %v2064
        %v3089 = vmul.f32 %v2065, %v2065
        %v3090 = vmul.f32 %v2066, %v2066
        %v3091 = vmul.f32 %v2067, %v2067
        %v3092 = vmul.f32 %v2068, %v2068
        %v3093 = vmul.f32 %v2069, %v2069
        %v3094 = vmul.f32 %v2070, %v2070
        %v3095 = vmul.f32 %v2071, %v2071
        %v3096 = vmul.f32 %v2072, %v2072
        %v3097 = vmul.f32 %v2073, %v2073
        %v3098 = vmul.f32 %v2074, %v2074
        %v3099 = vmul.f32 %v2075, %v2075
        %v3100 = vmul.f32 %v2076, %v2076
        %v3101 = vmul.f32 %v2077, %v2077
        %v3102 = vmul.f32 %v2078, %v2078
        %v3103 = vmul.f32 %v2079, %v2079
        %v3104 = vmul.f32 %v2080, %v2080
        %v3105 = vmul.f32 %v2081, %v2081
        %v3106 = vmul.f32 %v2082, %v2082
        %v3107 = vmul.f32 %v2083, %v2083
        %v3108 = vmul.f32 %v2084, %v2084
        %v3109 = vadd.f32 %v2342, %v2853
        %v3110 = vadd.f32 %v2344, %v2854
        %v3111 = vadd.f32 %v2346, %v2855
        %v3112 = vadd.f32 %v2348, %v2856
        %v3113 = vadd.f32 %v2350, %v2857
        %v3114 = vadd.f32 %v2352, %v2858
        %v3115 = vadd.f32 %v2354, %v2859
        %v3116 = vadd.f32 %v2356, %v2860
        %v3117 = vadd.f32 %v2358, %v2861
        %v3118 = vadd.f32 %v2360, %v2862
        %v3119 = vadd.f32 %v2362, %v2863
        %v3120 = vadd.f32 %v2364, %v2864
        %v3121 = vadd.f32 %v2366, %v2865
        %v3122 = vadd.f32 %v2368, %v2866
        %v3123 = vadd.f32 %v2370, %v2867
        %v3124 = vadd.f32 %v2372, %v2868
        %v3125 = vadd.f32 %v2374, %v2869
        %v3126 = vadd.f32 %v2376, %v2870
        %v3127 = vadd.f32 %v2378, %v2871
        %v3128 = vadd.f32 %v2380, %v2872
        %v3129 = vadd.f32 %v2382, %v2873
        %v3130 = vadd.f32 %v2384, %v2874
        %v3131 = vadd.f32 %v2386, %v2875
        %v3132 = vadd.f32 %v2388, %v2876
        %v3133 = vadd.f32 %v2390, %v2877
        %v3134 = vadd.f32 %v2392, %v2878
        %v3135 = vadd.f32 %v2394, %v2879
        %v3136 = vadd.f32 %v2396, %v2880
        %v3137 = vadd.f32 %v2398, %v2881
        %v3138 = vadd.f32 %v2400, %v2882
        %v3139 = vadd.f32 %v2402, %v2883
        %v3140 = vadd.f32 %v2404, %v2884
        %v3141 = vadd.f32 %v2406, %v2885
        %v3142 = vadd.f32 %v2408, %v2886
        %v3143 = vadd.f32 %v2410, %v2887
        %v3144 = vadd.f32 %v2412, %v2888
        %v3145 = vadd.f32 %v2414, %v2889
        %v3146 = vadd.f32 %v2416, %v2890
        %v3147 = vadd.f32 %v2418, %v2891
        %v3148 = vadd.f32 %v2420, %v2892
        %v3149 = vadd.f32 %v2422, %v2893
        %v3150 = vadd.f32 %v2424, %v2894
        %v3151 = vadd.f32 %v2426, %v2895
        %v3152 = vadd.f32 %v2428, %v2896
        %v3153 = vadd.f32 %v2430, %v2897
        %v3154 = vadd.f32 %v2432, %v2898
        %v3155 = vadd.f32 %v2434, %v2899
        %v3156 = vadd.f32 %v2436, %v2900
        %v3157 = vadd.f32 %v2438, %v2901
        %v3158 = vadd.f32 %v2440, %v2902
        %v3159 = vadd.f32 %v2442, %v2903
        %v3160 = vadd.f32 %v2444, %v2904
        %v3161 = vadd.f32 %v2446, %v2905
        %v3162 = vadd.f32 %v2448, %v2906
        %v3163 = vadd.f32 %v2450, %v2907
        %v3164 = vadd.f32 %v2452, %v2908
        %v3165 = vadd.f32 %v2454, %v2909
        %v3166 = vadd.f32 %v2456, %v2910
        %v3167 = vadd.f32 %v2458, %v2911
        %v3168 = vadd.f32 %v2460, %v2912
        %v3169 = vadd.f32 %v2462, %v2913
        %v3170 = vadd.f32 %v2464, %v2914
        %v3171 = vadd.f32 %v2466, %v2915
        %v3172 = vadd.f32 %v2468, %v2916
        %v3173 = vadd.f32 %v2470, %v2917
        %v3174 = vadd.f32 %v2472, %v2918
        %v3175 = vadd.f32 %v2474, %v2919
        %v3176 = vadd.f32 %v2476, %v2920
        %v3177 = vadd.f32 %v2478, %v2921
        %v3178 = vadd.f32 %v2480, %v2922
        %v3179 = vadd.f32 %v2482, %v2923
        %v3180 = vadd.f32 %v2484, %v2924
        %v3181 = vadd.f32 %v2486, %v2925
        %v3182 = vadd.f32 %v2488, %v2926
        %v3183 = vadd.f32 %v2490, %v2927
        %v3184 = vadd.f32 %v2492, %v2928
        %v3185 = vadd.f32 %v2494, %v2929
        %v3186 = vadd.f32 %v2496, %v2930
        %v3187 = vadd.f32 %v2498, %v2931
        %v3188 = vadd.f32 %v2500, %v2932
        %v3189 = vadd.f32 %v2502, %v2933
        %v3190 = vadd.f32 %v2504, %v2934
        %v3191 = vadd.f32 %v2506, %v2935
        %v3192 = vadd.f32 %v2508, %v2936
        %v3193 = vadd.f32 %v2510, %v2937
        %v3194 = vadd.f32 %v2512, %v2938
        %v3195 = vadd.f32 %v2514, %v2939
        %v3196 = vadd.f32 %v2516, %v2940
        %v3197 = vadd.f32 %v2518, %v2941
        %v3198 = vadd.f32 %v2520, %v2942
        %v3199 = vadd.f32 %v2522, %v2943
        %v3200 = vadd.f32 %v2524, %v2944
        %v3201 = vadd.f32 %v2526, %v2945
        %v3202 = vadd.f32 %v2528, %v2946
        %v3203 = vadd.f32 %v2530, %v2947
        %v3204 = vadd.f32 %v2532, %v2948
        %v3205 = vadd.f32 %v2534, %v2949
        %v3206 = vadd.f32 %v2536, %v2950
        %v3207 = vadd.f32 %v2538, %v2951
        %v3208 = vadd.f32 %v2540, %v2952
        %v3209 = vadd.f32 %v2542, %v2953
        %v3210 = vadd.f32 %v2544, %v2954
        %v3211 = vadd.f32 %v2546, %v2955
        %v3212 = vadd.f32 %v2548, %v2956
        %v3213 = vadd.f32 %v2550, %v2957
        %v3214 = vadd.f32 %v2552, %v2958
        %v3215 = vadd.f32 %v2554, %v2959
        %v3216 = vadd.f32 %v2556, %v2960
        %v3217 = vadd.f32 %v2558, %v2961
        %v3218 = vadd.f32 %v2560, %v2962
        %v3219 = vadd.f32 %v2562, %v2963
        %v3220 = vadd.f32 %v2564, %v2964
        %v3221 = vadd.f32 %v2566, %v2965
        %v3222 = vadd.f32 %v2568, %v2966
        %v3223 = vadd.f32 %v2570, %v2967
        %v3224 = vadd.f32 %v2572, %v2968
        %v3225 = vadd.f32 %v2574, %v2969
        %v3226 = vadd.f32 %v2576, %v2970
        %v3227 = vadd.f32 %v2578, %v2971
        %v3228 = vadd.f32 %v2580, %v2972
        %v3229 = vadd.f32 %v2582, %v2973
        %v3230 = vadd.f32 %v2584, %v2974
        %v3231 = vadd.f32 %v2586, %v2975
        %v3232 = vadd.f32 %v2588, %v2976
        %v3233 = vadd.f32 %v2590, %v2977
        %v3234 = vadd.f32 %v2592, %v2978
        %v3235 = vadd.f32 %v2594, %v2979
        %v3236 = vadd.f32 %v2596, %v2980
        %v3237 = vadd.f32 %v2598, %v2981
        %v3238 = vadd.f32 %v2600, %v2982
        %v3239 = vadd.f32 %v2602, %v2983
        %v3240 = vadd.f32 %v2604, %v2984
        %v3241 = vadd.f32 %v2606, %v2985
        %v3242 = vadd.f32 %v2608, %v2986
        %v3243 = vadd.f32 %v2610, %v2987
        %v3244 = vadd.f32 %v2612, %v2988
        %v3245 = vadd.f32 %v2614, %v2989
        %v3246 = vadd.f32 %v2616, %v2990
        %v3247 = vadd.f32 %v2618, %v2991
        %v3248 = vadd.f32 %v2620, %v2992
        %v3249 = vadd.f32 %v2622, %v2993
        %v3250 = vadd.f32 %v2624, %v2994
        %v3251 = vadd.f32 %v2626, %v2995
        %v3252 = vadd.f32 %v2628, %v2996
        %v3253 = vadd.f32 %v2630, %v2997
        %v3254 = vadd.f32 %v2632, %v2998
        %v3255 = vadd.f32 %v2634, %v2999
        %v3256 = vadd.f32 %v2636, %v3000
        %v3257 = vadd.f32 %v2638, %v3001
        %v3258 = vadd.f32 %v2640, %v3002
        %v3259 = vadd.f32 %v2642, %v3003
        %v3260 = vadd.f32 %v2644, %v3004
        %v3261 = vadd.f32 %v2646, %v3005
        %v3262 = vadd.f32 %v2648, %v3006
        %v3263 = vadd.f32 %v2650, %v3007
        %v3264 = vadd.f32 %v2652, %v3008
        %v3265 = vadd.f32 %v2654, %v3009
        %v3266 = vadd.f32 %v2656, %v3010
        %v3267 = vadd.f32 %v2658, %v3011
        %v3268 = vadd.f32 %v2660, %v3012
        %v3269 = vadd.f32 %v2662, %v3013
        %v3270 = vadd.f32 %v2664, %v3014
        %v3271 = vadd.f32 %v2666, %v3015
        %v3272 = vadd.f32 %v2668, %v3016
        %v3273 = vadd.f32 %v2670, %v3017
        %v3274 = vadd.f32 %v2672, %v3018
        %v3275 = vadd.f32 %v2674, %v3019
        %v3276 = vadd.f32 %v2676, %v3020
        %v3277 = vadd.f32 %v2678, %v3021
        %v3278 = vadd.f32 %v2680, %v3022
        %v3279 = vadd.f32 %v2682, %v3023
        %v3280 = vadd.f32 %v2684, %v3024
        %v3281 = vadd.f32 %v2686, %v3025
        %v3282 = vadd.f32 %v2688, %v3026
        %v3283 = vadd.f32 %v2690, %v3027
        %v3284 = vadd.f32 %v2692, %v3028
        %v3285 = vadd.f32 %v2694, %v3029
        %v3286 = vadd.f32 %v2696, %v3030
        %v3287 = vadd.f32 %v2698, %v3031
        %v3288 = vadd.f32 %v2700, %v3032
        %v3289 = vadd.f32 %v2702, %v3033
        %v3290 = vadd.f32 %v2704, %v3034
        %v3291 = vadd.f32 %v2706, %v3035
        %v3292 = vadd.f32 %v2708, %v3036
        %v3293 = vadd.f32 %v2710, %v3037
        %v3294 = vadd.f32 %v2712, %v3038
        %v3295 = vadd.f32 %v2714, %v3039
        %v3296 = vadd.f32 %v2716, %v3040
        %v3297 = vadd.f32 %v2718, %v3041
        %v3298 = vadd.f32 %v2720, %v3042
        %v3299 = vadd.f32 %v2722, %v3043
        %v3300 = vadd.f32 %v2724, %v3044
        %v3301 = vadd.f32 %v2726, %v3045
        %v3302 = vadd.f32 %v2728, %v3046
        %v3303 = vadd.f32 %v2730, %v3047
        %v3304 = vadd.f32 %v2732, %v3048
        %v3305 = vadd.f32 %v2734, %v3049
        %v3306 = vadd.f32 %v2736, %v3050
        %v3307 = vadd.f32 %v2738, %v3051
        %v3308 = vadd.f32 %v2740, %v3052
        %v3309 = vadd.f32 %v2742, %v3053
        %v3310 = vadd.f32 %v2744, %v3054
        %v3311 = vadd.f32 %v2746, %v3055
        %v3312 = vadd.f32 %v2748, %v3056
        %v3313 = vadd.f32 %v2750, %v3057
        %v3314 = vadd.f32 %v2752, %v3058
        %v3315 = vadd.f32 %v2754, %v3059
        %v3316 = vadd.f32 %v2756, %v3060
        %v3317 = vadd.f32 %v2758, %v3061
        %v3318 = vadd.f32 %v2760, %v3062
        %v3319 = vadd.f32 %v2762, %v3063
        %v3320 = vadd.f32 %v2764, %v3064
        %v3321 = vadd.f32 %v2766, %v3065
        %v3322 = vadd.f32 %v2768, %v3066
        %v3323 = vadd.f32 %v2770, %v3067
        %v3324 = vadd.f32 %v2772, %v3068
        %v3325 = vadd.f32 %v2774, %v3069
        %v3326 = vadd.f32 %v2776, %v3070
        %v3327 = vadd.f32 %v2778, %v3071
        %v3328 = vadd.f32 %v2780, %v3072
        %v3329 = vadd.f32 %v2782, %v3073
        %v3330 = vadd.f32 %v2784, %v3074
        %v3331 = vadd.f32 %v2786, %v3075
        %v3332 = vadd.f32 %v2788, %v3076
        %v3333 = vadd.f32 %v2790, %v3077
        %v3334 = vadd.f32 %v2792, %v3078
        %v3335 = vadd.f32 %v2794, %v3079
        %v3336 = vadd.f32 %v2796, %v3080
        %v3337 = vadd.f32 %v2798, %v3081
        %v3338 = vadd.f32 %v2800, %v3082
        %v3339 = vadd.f32 %v2802, %v3083
        %v3340 = vadd.f32 %v2804, %v3084
        %v3341 = vadd.f32 %v2806, %v3085
        %v3342 = vadd.f32 %v2808, %v3086
        %v3343 = vadd.f32 %v2810, %v3087
        %v3344 = vadd.f32 %v2812, %v3088
        %v3345 = vadd.f32 %v2814, %v3089
        %v3346 = vadd.f32 %v2816, %v3090
        %v3347 = vadd.f32 %v2818, %v3091
        %v3348 = vadd.f32 %v2820, %v3092
        %v3349 = vadd.f32 %v2822, %v3093
        %v3350 = vadd.f32 %v2824, %v3094
        %v3351 = vadd.f32 %v2826, %v3095
        %v3352 = vadd.f32 %v2828, %v3096
        %v3353 = vadd.f32 %v2830, %v3097
        %v3354 = vadd.f32 %v2832, %v3098
        %v3355 = vadd.f32 %v2834, %v3099
        %v3356 = vadd.f32 %v2836, %v3100
        %v3357 = vadd.f32 %v2838, %v3101
        %v3358 = vadd.f32 %v2840, %v3102
        %v3359 = vadd.f32 %v2842, %v3103
        %v3360 = vadd.f32 %v2844, %v3104
        %v3361 = vadd.f32 %v2846, %v3105
        %v3362 = vadd.f32 %v2848, %v3106
        %v3363 = vadd.f32 %v2850, %v3107
        %v3364 = vadd.f32 %v2852, %v3108
        %v3365 = vsub.f32 %v3109, %v2085
        %v3366 = vsub.f32 %v3110, %v2086
        %v3367 = vsub.f32 %v3111, %v2087
        %v3368 = vsub.f32 %v3112, %v2088
        %v3369 = vsub.f32 %v3113, %v2089
        %v3370 = vsub.f32 %v3114, %v2090
        %v3371 = vsub.f32 %v3115, %v2091
        %v3372 = vsub.f32 %v3116, %v2092
        %v3373 = vsub.f32 %v3117, %v2093
        %v3374 = vsub.f32 %v3118, %v2094
        %v3375 = vsub.f32 %v3119, %v2095
        %v3376 = vsub.f32 %v3120, %v2096
        %v3377 = vsub.f32 %v3121, %v2097
        %v3378 = vsub.f32 %v3122, %v2098
        %v3379 = vsub.f32 %v3123, %v2099
        %v3380 = vsub.f32 %v3124, %v2100
        %v3381 = vsub.f32 %v3125, %v2101
        %v3382 = vsub.f32 %v3126, %v2102
        %v3383 = vsub.f32 %v3127, %v2103
        %v3384 = vsub.f32 %v3128, %v2104
        %v3385 = vsub.f32 %v3129, %v2105
        %v3386 = vsub.f32 %v3130, %v2106
        %v3387 = vsub.f32 %v3131, %v2107
        %v3388 = vsub.f32 %v3132, %v2108
        %v3389 = vsub.f32 %v3133, %v2109
        %v3390 = vsub.f32 %v3134, %v2110
        %v3391 = vsub.f32 %v3135, %v2111
        %v3392 = vsub.f32 %v3136, %v2112
        %v3393 = vsub.f32 %v3137, %v2113
        %v3394 = vsub.f32 %v3138, %v2114
        %v3395 = vsub.f32 %v3139, %v2115
        %v3396 = vsub.f32 %v3140, %v2116
        %v3397 = vsub.f32 %v3141, %v2117
        %v3398 = vsub.f32 %v3142, %v2118
        %v3399 = vsub.f32 %v3143, %v2119
        %v3400 = vsub.f32 %v3144, %v2120
        %v3401 = vsub.f32 %v3145, %v2121
        %v3402 = vsub.f32 %v3146, %v2122
        %v3403 = vsub.f32 %v3147, %v2123
        %v3404 = vsub.f32 %v3148, %v2124
        %v3405 = vsub.f32 %v3149, %v2125
        %v3406 = vsub.f32 %v3150, %v2126
        %v3407 = vsub.f32 %v3151, %v2127
        %v3408 = vsub.f32 %v3152, %v2128
        %v3409 = vsub.f32 %v3153, %v2129
        %v3410 = vsub.f32 %v3154, %v2130
        %v3411 = vsub.f32 %v3155, %v2131
        %v3412 = vsub.f32 %v3156, %v2132
        %v3413 = vsub.f32 %v3157, %v2133
        %v3414 = vsub.f32 %v3158, %v2134
        %v3415 = vsub.f32 %v3159, %v2135
        %v3416 = vsub.f32 %v3160, %v2136
        %v3417 = vsub.f32 %v3161, %v2137
        %v3418 = vsub.f32 %v3162, %v2138
        %v3419 = vsub.f32 %v3163, %v2139
        %v3420 = vsub.f32 %v3164, %v2140
        %v3421 = vsub.f32 %v3165, %v2141
        %v3422 = vsub.f32 %v3166, %v2142
        %v3423 = vsub.f32 %v3167, %v2143
        %v3424 = vsub.f32 %v3168, %v2144
        %v3425 = vsub.f32 %v3169, %v2145
        %v3426 = vsub.f32 %v3170, %v2146
        %v3427 = vsub.f32 %v3171, %v2147
        %v3428 = vsub.f32 %v3172, %v2148
        %v3429 = vsub.f32 %v3173, %v2149
        %v3430 = vsub.f32 %v3174, %v2150
        %v3431 = vsub.f32 %v3175, %v2151
        %v3432 = vsub.f32 %v3176, %v2152
        %v3433 = vsub.f32 %v3177, %v2153
        %v3434 = vsub.f32 %v3178, %v2154
        %v3435 = vsub.f32 %v3179, %v2155
        %v3436 = vsub.f32 %v3180, %v2156
        %v3437 = vsub.f32 %v3181, %v2157
        %v3438 = vsub.f32 %v3182, %v2158
        %v3439 = vsub.f32 %v3183, %v2159
        %v3440 = vsub.f32 %v3184, %v2160
        %v3441 = vsub.f32 %v3185, %v2161
        %v3442 = vsub.f32 %v3186, %v2162
        %v3443 = vsub.f32 %v3187, %v2163
        %v3444 = vsub.f32 %v3188, %v2164
        %v3445 = vsub.f32 %v3189, %v2165
        %v3446 = vsub.f32 %v3190, %v2166
        %v3447 = vsub.f32 %v3191, %v2167
        %v3448 = vsub.f32 %v3192, %v2168
        %v3449 = vsub.f32 %v3193, %v2169
        %v3450 = vsub.f32 %v3194, %v2170
        %v3451 = vsub.f32 %v3195, %v2171
        %v3452 = vsub.f32 %v3196, %v2172
        %v3453 = vsub.f32 %v3197, %v2173
        %v3454 = vsub.f32 %v3198, %v2174
        %v3455 = vsub.f32 %v3199, %v2175
        %v3456 = vsub.f32 %v3200, %v2176
        %v3457 = vsub.f32 %v3201, %v2177
        %v3458 = vsub.f32 %v3202, %v2178
        %v3459 = vsub.f32 %v3203, %v2179
        %v3460 = vsub.f32 %v3204, %v2180
        %v3461 = vsub.f32 %v3205, %v2181
        %v3462 = vsub.f32 %v3206, %v2182
        %v3463 = vsub.f32 %v3207, %v2183
        %v3464 = vsub.f32 %v3208, %v2184
        %v3465 = vsub.f32 %v3209, %v2185
        %v3466 = vsub.f32 %v3210, %v2186
        %v3467 = vsub.f32 %v3211, %v2187
        %v3468 = vsub.f32 %v3212, %v2188
        %v3469 = vsub.f32 %v3213, %v2189
        %v3470 = vsub.f32 %v3214, %v2190
        %v3471 = vsub.f32 %v3215, %v2191
        %v3472 = vsub.f32 %v3216, %v2192
        %v3473 = vsub.f32 %v3217, %v2193
        %v3474 = vsub.f32 %v3218, %v2194
        %v3475 = vsub.f32 %v3219, %v2195
        %v3476 = vsub.f32 %v3220, %v2196
        %v3477 = vsub.f32 %v3221, %v2197
        %v3478 = vsub.f32 %v3222, %v2198
        %v3479 = vsub.f32 %v3223, %v2199
        %v3480 = vsub.f32 %v3224, %v2200
        %v3481 = vsub.f32 %v3225, %v2201
        %v3482 = vsub.f32 %v3226, %v2202
        %v3483 = vsub.f32 %v3227, %v2203
        %v3484 = vsub.f32 %v3228, %v2204
        %v3485 = vsub.f32 %v3229, %v2205
        %v3486 = vsub.f32 %v3230, %v2206
        %v3487 = vsub.f32 %v3231, %v2207
        %v3488 = vsub.f32 %v3232, %v2208
        %v3489 = vsub.f32 %v3233, %v2209
        %v3490 = vsub.f32 %v3234, %v2210
        %v3491 = vsub.f32 %v3235, %v2211
        %v3492 = vsub.f32 %v3236, %v2212
        %v3493 = vsub.f32 %v3237, %v2213
        %v3494 = vsub.f32 %v3238, %v2214
        %v3495 = vsub.f32 %v3239, %v2215
        %v3496 = vsub.f32 %v3240, %v2216
        %v3497 = vsub.f32 %v3241, %v2217
        %v3498 = vsub.f32 %v3242, %v2218
        %v3499 = vsub.f32 %v3243, %v2219
        %v3500 = vsub.f32 %v3244, %v2220
        %v3501 = vsub.f32 %v3245, %v2221
        %v3502 = vsub.f32 %v3246, %v2222
        %v3503 = vsub.f32 %v3247, %v2223
        %v3504 = vsub.f32 %v3248, %v2224
        %v3505 = vsub.f32 %v3249, %v2225
        %v3506 = vsub.f32 %v3250, %v2226
        %v3507 = vsub.f32 %v3251, %v2227
        %v3508 = vsub.f32 %v3252, %v2228
        %v3509 = vsub.f32 %v3253, %v2229
        %v3510 = vsub.f32 %v3254, %v2230
        %v3511 = vsub.f32 %v3255, %v2231
        %v3512 = vsub.f32 %v3256, %v2232
        %v3513 = vsub.f32 %v3257, %v2233
        %v3514 = vsub.f32 %v3258, %v2234
        %v3515 = vsub.f32 %v3259, %v2235
        %v3516 = vsub.f32 %v3260, %v2236
        %v3517 = vsub.f32 %v3261, %v2237
        %v3518 = vsub.f32 %v3262, %v2238
        %v3519 = vsub.f32 %v3263, %v2239
        %v3520 = vsub.f32 %v3264, %v2240
        %v3521 = vsub.f32 %v3265, %v2241
        %v3522 = vsub.f32 %v3266, %v2242
        %v3523 = vsub.f32 %v3267, %v2243
        %v3524 = vsub.f32 %v3268, %v2244
        %v3525 = vsub.f32 %v3269, %v2245
        %v3526 = vsub.f32 %v3270, %v2246
        %v3527 = vsub.f32 %v3271, %v2247
        %v3528 = vsub.f32 %v3272, %v2248
        %v3529 = vsub.f32 %v3273, %v2249
        %v3530 = vsub.f32 %v3274, %v2250
        %v3531 = vsub.f32 %v3275, %v2251
        %v3532 = vsub.f32 %v3276, %v2252
        %v3533 = vsub.f32 %v3277, %v2253
        %v3534 = vsub.f32 %v3278, %v2254
        %v3535 = vsub.f32 %v3279, %v2255
        %v3536 = vsub.f32 %v3280, %v2256
        %v3537 = vsub.f32 %v3281, %v2257
        %v3538 = vsub.f32 %v3282, %v2258
        %v3539 = vsub.f32 %v3283, %v2259
        %v3540 = vsub.f32 %v3284, %v2260
        %v3541 = vsub.f32 %v3285, %v2261
        %v3542 = vsub.f32 %v3286, %v2262
        %v3543 = vsub.f32 %v3287, %v2263
        %v3544 = vsub.f32 %v3288, %v2264
        %v3545 = vsub.f32 %v3289, %v2265
        %v3546 = vsub.f32 %v3290, %v2266
        %v3547 = vsub.f32 %v3291, %v2267
        %v3548 = vsub.f32 %v3292, %v2268
        %v3549 = vsub.f32 %v3293, %v2269
        %v3550 = vsub.f32 %v3294, %v2270
        %v3551 = vsub.f32 %v3295, %v2271
        %v3552 = vsub.f32 %v3296, %v2272
        %v3553 = vsub.f32 %v3297, %v2273
        %v3554 = vsub.f32 %v3298, %v2274
        %v3555 = vsub.f32 %v3299, %v2275
        %v3556 = vsub.f32 %v3300, %v2276
        %v3557 = vsub.f32 %v3301, %v2277
        %v3558 = vsub.f32 %v3302, %v2278
        %v3559 = vsub.f32 %v3303, %v2279
        %v3560 = vsub.f32 %v3304, %v2280
        %v3561 = vsub.f32 %v3305, %v2281
        %v3562 = vsub.f32 %v3306, %v2282
        %v3563 = vsub.f32 %v3307, %v2283
        %v3564 = vsub.f32 %v3308, %v2284
        %v3565 = vsub.f32 %v3309, %v2285
        %v3566 = vsub.f32 %v3310, %v2286
        %v3567 = vsub.f32 %v3311, %v2287
        %v3568 = vsub.f32 %v3312, %v2288
        %v3569 = vsub.f32 %v3313, %v2289
        %v3570 = vsub.f32 %v3314, %v2290
        %v3571 = vsub.f32 %v3315, %v2291
        %v3572 = vsub.f32 %v3316, %v2292
        %v3573 = vsub.f32 %v3317, %v2293
        %v3574 = vsub.f32 %v3318, %v2294
        %v3575 = vsub.f32 %v3319, %v2295
        %v3576 = vsub.f32 %v3320, %v2296
        %v3577 = vsub.f32 %v3321, %v2297
        %v3578 = vsub.f32 %v3322, %v2298
        %v3579 = vsub.f32 %v3323, %v2299
        %v3580 = vsub.f32 %v3324, %v2300
        %v3581 = vsub.f32 %v3325, %v2301
        %v3582 = vsub.f32 %v3326, %v2302
        %v3583 = vsub.f32 %v3327, %v2303
        %v3584 = vsub.f32 %v3328, %v2304
        %v3585 = vsub.f32 %v3329, %v2305
        %v3586 = vsub.f32 %v3330, %v2306
        %v3587 = vsub.f32 %v3331, %v2307
        %v3588 = vsub.f32 %v3332, %v2308
        %v3589 = vsub.f32 %v3333, %v2309
        %v3590 = vsub.f32 %v3334, %v2310
        %v3591 = vsub.f32 %v3335, %v2311
        %v3592 = vsub.f32 %v3336, %v2312
        %v3593 = vsub.f32 %v3337, %v2313
        %v3594 = vsub.f32 %v3338, %v2314
        %v3595 = vsub.f32 %v3339, %v2315
        %v3596 = vsub.f32 %v3340, %v2316
        %v3597 = vsub.f32 %v3341, %v2317
        %v3598 = vsub.f32 %v3342, %v2318
        %v3599 = vsub.f32 %v3343, %v2319
        %v3600 = vsub.f32 %v3344, %v2320
        %v3601 = vsub.f32 %v3345, %v2321
        %v3602 = vsub.f32 %v3346, %v2322
        %v3603 = vsub.f32 %v3347, %v2323
        %v3604 = vsub.f32 %v3348, %v2324
        %v3605 = vsub.f32 %v3349, %v2325
        %v3606 = vsub.f32 %v3350, %v2326
        %v3607 = vsub.f32 %v3351, %v2327
        %v3608 = vsub.f32 %v3352, %v2328
        %v3609 = vsub.f32 %v3353, %v2329
        %v3610 = vsub.f32 %v3354, %v2330
        %v3611 = vsub.f32 %v3355, %v2331
        %v3612 = vsub.f32 %v3356, %v2332
        %v3613 = vsub.f32 %v3357, %v2333
        %v3614 = vsub.f32 %v3358, %v2334
        %v3615 = vsub.f32 %v3359, %v2335
        %v3616 = vsub.f32 %v3360, %v2336
        %v3617 = vsub.f32 %v3361, %v2337
        %v3618 = vsub.f32 %v3362, %v2338
        %v3619 = vsub.f32 %v3363, %v2339
        %v3620 = vsub.f32 %v3364, %v2340
        %v3621 = vsub.f32 %v3365, 1.0
        %v3622 = vsub.f32 %v3366, 1.0
        %v3623 = vsub.f32 %v3367, 1.0
        %v3624 = vsub.f32 %v3368, 1.0
        %v3625 = vsub.f32 %v3369, 1.0
        %v3626 = vsub.f32 %v3370, 1.0
        %v3627 = vsub.f32 %v3371, 1.0
        %v3628 = vsub.f32 %v3372, 1.0
        %v3629 = vsub.f32 %v3373, 1.0
        %v3630 = vsub.f32 %v3374, 1.0
        %v3631 = vsub.f32 %v3375, 1.0
        %v3632 = vsub.f32 %v3376, 1.0
        %v3633 = vsub.f32 %v3377, 1.0
        %v3634 = vsub.f32 %v3378, 1.0
        %v3635 = vsub.f32 %v3379, 1.0
        %v3636 = vsub.f32 %v3380, 1.0
        %v3637 = vsub.f32 %v3381, 1.0
        %v3638 = vsub.f32 %v3382, 1.0
        %v3639 = vsub.f32 %v3383, 1.0
        %v3640 = vsub.f32 %v3384, 1.0
        %v3641 = vsub.f32 %v3385, 1.0
        %v3642 = vsub.f32 %v3386, 1.0
        %v3643 = vsub.f32 %v3387, 1.0
        %v3644 = vsub.f32 %v3388, 1.0
        %v3645 = vsub.f32 %v3389, 1.0
        %v3646 = vsub.f32 %v3390, 1.0
        %v3647 = vsub.f32 %v3391, 1.0
        %v3648 = vsub.f32 %v3392, 1.0
        %v3649 = vsub.f32 %v3393, 1.0
        %v3650 = vsub.f32 %v3394, 1.0
        %v3651 = vsub.f32 %v3395, 1.0
        %v3652 = vsub.f32 %v3396, 1.0
        %v3653 = vsub.f32 %v3397, 1.0
        %v3654 = vsub.f32 %v3398, 1.0
        %v3655 = vsub.f32 %v3399, 1.0
        %v3656 = vsub.f32 %v3400, 1.0
        %v3657 = vsub.f32 %v3401, 1.0
        %v3658 = vsub.f32 %v3402, 1.0
        %v3659 = vsub.f32 %v3403, 1.0
        %v3660 = vsub.f32 %v3404, 1.0
        %v3661 = vsub.f32 %v3405, 1.0
        %v3662 = vsub.f32 %v3406, 1.0
        %v3663 = vsub.f32 %v3407, 1.0
        %v3664 = vsub.f32 %v3408, 1.0
        %v3665 = vsub.f32 %v3409, 1.0
        %v3666 = vsub.f32 %v3410, 1.0
        %v3667 = vsub.f32 %v3411, 1.0
        %v3668 = vsub.f32 %v3412, 1.0
        %v3669 = vsub.f32 %v3413, 1.0
        %v3670 = vsub.f32 %v3414, 1.0
        %v3671 = vsub.f32 %v3415, 1.0
        %v3672 = vsub.f32 %v3416, 1.0
        %v3673 = vsub.f32 %v3417, 1.0
        %v3674 = vsub.f32 %v3418, 1.0
        %v3675 = vsub.f32 %v3419, 1.0
        %v3676 = vsub.f32 %v3420, 1.0
        %v3677 = vsub.f32 %v3421, 1.0
        %v3678 = vsub.f32 %v3422, 1.0
        %v3679 = vsub.f32 %v3423, 1.0
        %v3680 = vsub.f32 %v3424, 1.0
        %v3681 = vsub.f32 %v3425, 1.0
        %v3682 = vsub.f32 %v3426, 1.0
        %v3683 = vsub.f32 %v3427, 1.0
        %v3684 = vsub.f32 %v3428, 1.0
        %v3685 = vsub.f32 %v3429, 1.0
        %v3686 = vsub.f32 %v3430, 1.0
        %v3687 = vsub.f32 %v3431, 1.0
        %v3688 = vsub.f32 %v3432, 1.0
        %v3689 = vsub.f32 %v3433, 1.0
        %v3690 = vsub.f32 %v3434, 1.0
        %v3691 = vsub.f32 %v3435, 1.0
        %v3692 = vsub.f32 %v3436, 1.0
        %v3693 = vsub.f32 %v3437, 1.0
        %v3694 = vsub.f32 %v3438, 1.0
        %v3695 = vsub.f32 %v3439, 1.0
        %v3696 = vsub.f32 %v3440, 1.0
        %v3697 = vsub.f32 %v3441, 1.0
        %v3698 = vsub.f32 %v3442, 1.0
        %v3699 = vsub.f32 %v3443, 1.0
        %v3700 = vsub.f32 %v3444, 1.0
        %v3701 = vsub.f32 %v3445, 1.0
        %v3702 = vsub.f32 %v3446, 1.0
        %v3703 = vsub.f32 %v3447, 1.0
        %v3704 = vsub.f32 %v3448, 1.0
        %v3705 = vsub.f32 %v3449, 1.0
        %v3706 = vsub.f32 %v3450, 1.0
        %v3707 = vsub.f32 %v3451, 1.0
        %v3708 = vsub.f32 %v3452, 1.0
        %v3709 = vsub.f32 %v3453, 1.0
        %v3710 = vsub.f32 %v3454, 1.0
        %v3711 = vsub.f32 %v3455, 1.0
        %v3712 = vsub.f32 %v3456, 1.0
        %v3713 = vsub.f32 %v3457, 1.0
        %v3714 = vsub.f32 %v3458, 1.0
        %v3715 = vsub.f32 %v3459, 1.0
        %v3716 = vsub.f32 %v3460, 1.0
        %v3717 = vsub.f32 %v3461, 1.0
        %v3718 = vsub.f32 %v3462, 1.0
        %v3719 = vsub.f32 %v3463, 1.0
        %v3720 = vsub.f32 %v3464, 1.0
        %v3721 = vsub.f32 %v3465, 1.0
        %v3722 = vsub.f32 %v3466, 1.0
        %v3723 = vsub.f32 %v3467, 1.0
        %v3724 = vsub.f32 %v3468, 1.0
        %v3725 = vsub.f32 %v3469, 1.0
        %v3726 = vsub.f32 %v3470, 1.0
        %v3727 = vsub.f32 %v3471, 1.0
        %v3728 = vsub.f32 %v3472, 1.0
        %v3729 = vsub.f32 %v3473, 1.0
        %v3730 = vsub.f32 %v3474, 1.0
        %v3731 = vsub.f32 %v3475, 1.0
        %v3732 = vsub.f32 %v3476, 1.0
        %v3733 = vsub.f32 %v3477, 1.0
        %v3734 = vsub.f32 %v3478, 1.0
        %v3735 = vsub.f32 %v3479, 1.0
        %v3736 = vsub.f32 %v3480, 1.0
        %v3737 = vsub.f32 %v3481, 1.0
        %v3738 = vsub.f32 %v3482, 1.0
        %v3739 = vsub.f32 %v3483, 1.0
        %v3740 = vsub.f32 %v3484, 1.0
        %v3741 = vsub.f32 %v3485, 1.0
        %v3742 = vsub.f32 %v3486, 1.0
        %v3743 = vsub.f32 %v3487, 1.0
        %v3744 = vsub.f32 %v3488, 1.0
        %v3745 = vsub.f32 %v3489, 1.0
        %v3746 = vsub.f32 %v3490, 1.0
        %v3747 = vsub.f32 %v3491, 1.0
        %v3748 = vsub.f32 %v3492, 1.0
        %v3749 = vsub.f32 %v3493, 1.0
        %v3750 = vsub.f32 %v3494, 1.0
        %v3751 = vsub.f32 %v3495, 1.0
        %v3752 = vsub.f32 %v3496, 1.0
        %v3753 = vsub.f32 %v3497, 1.0
        %v3754 = vsub.f32 %v3498, 1.0
        %v3755 = vsub.f32 %v3499, 1.0
        %v3756 = vsub.f32 %v3500, 1.0
        %v3757 = vsub.f32 %v3501, 1.0
        %v3758 = vsub.f32 %v3502, 1.0
        %v3759 = vsub.f32 %v3503, 1.0
        %v3760 = vsub.f32 %v3504, 1.0
        %v3761 = vsub.f32 %v3505, 1.0
        %v3762 = vsub.f32 %v3506, 1.0
        %v3763 = vsub.f32 %v3507, 1.0
        %v3764 = vsub.f32 %v3508, 1.0
        %v3765 = vsub.f32 %v3509, 1.0
        %v3766 = vsub.f32 %v3510, 1.0
        %v3767 = vsub.f32 %v3511, 1.0
        %v3768 = vsub.f32 %v3512, 1.0
        %v3769 = vsub.f32 %v3513, 1.0
        %v3770 = vsub.f32 %v3514, 1.0
        %v3771 = vsub.f32 %v3515, 1.0
        %v3772 = vsub.f32 %v3516, 1.0
        %v3773 = vsub.f32 %v3517, 1.0
        %v3774 = vsub.f32 %v3518, 1.0
        %v3775 = vsub.f32 %v3519, 1.0
        %v3776 = vsub.f32 %v3520, 1.0
        %v3777 = vsub.f32 %v3521, 1.0
        %v3778 = vsub.f32 %v3522, 1.0
        %v3779 = vsub.f32 %v3523, 1.0
        %v3780 = vsub.f32 %v3524, 1.0
        %v3781 = vsub.f32 %v3525, 1.0
        %v3782 = vsub.f32 %v3526, 1.0
        %v3783 = vsub.f32 %v3527, 1.0
        %v3784 = vsub.f32 %v3528, 1.0
        %v3785 = vsub.f32 %v3529, 1.0
        %v3786 = vsub.f32 %v3530, 1.0
        %v3787 = vsub.f32 %v3531, 1.0
        %v3788 = vsub.f32 %v3532, 1.0
        %v3789 = vsub.f32 %v3533, 1.0
        %v3790 = vsub.f32 %v3534, 1.0
        %v3791 = vsub.f32 %v3535, 1.0
        %v3792 = vsub.f32 %v3536, 1.0
        %v3793 = vsub.f32 %v3537, 1.0
        %v3794 = vsub.f32 %v3538, 1.0
        %v3795 = vsub.f32 %v3539, 1.0
        %v3796 = vsub.f32 %v3540, 1.0
        %v3797 = vsub.f32 %v3541, 1.0
        %v3798 = vsub.f32 %v3542, 1.0
        %v3799 = vsub.f32 %v3543, 1.0
        %v3800 = vsub.f32 %v3544, 1.0
        %v3801 = vsub.f32 %v3545, 1.0
        %v3802 = vsub.f32 %v3546, 1.0
        %v3803 = vsub.f32 %v3547, 1.0
        %v3804 = vsub.f32 %v3548, 1.0
        %v3805 = vsub.f32 %v3549, 1.0
        %v3806 = vsub.f32 %v3550, 1.0
        %v3807 = vsub.f32 %v3551, 1.0
        %v3808 = vsub.f32 %v3552, 1.0
        %v3809 = vsub.f32 %v3553, 1.0
        %v3810 = vsub.f32 %v3554, 1.0
        %v3811 = vsub.f32 %v3555, 1.0
        %v3812 = vsub.f32 %v3556, 1.0
        %v3813 = vsub.f32 %v3557, 1.0
        %v3814 = vsub.f32 %v3558, 1.0
        %v3815 = vsub.f32 %v3559, 1.0
        %v3816 = vsub.f32 %v3560, 1.0
        %v3817 = vsub.f32 %v3561, 1.0
        %v3818 = vsub.f32 %v3562, 1.0
        %v3819 = vsub.f32 %v3563, 1.0
        %v3820 = vsub.f32 %v3564, 1.0
        %v3821 = vsub.f32 %v3565, 1.0
        %v3822 = vsub.f32 %v3566, 1.0
        %v3823 = vsub.f32 %v3567, 1.0
        %v3824 = vsub.f32 %v3568, 1.0
        %v3825 = vsub.f32 %v3569, 1.0
        %v3826 = vsub.f32 %v3570, 1.0
        %v3827 = vsub.f32 %v3571, 1.0
        %v3828 = vsub.f32 %v3572, 1.0
        %v3829 = vsub.f32 %v3573, 1.0
        %v3830 = vsub.f32 %v3574, 1.0
        %v3831 = vsub.f32 %v3575, 1.0
        %v3832 = vsub.f32 %v3576, 1.0
        %v3833 = vsub.f32 %v3577, 1.0
        %v3834 = vsub.f32 %v3578, 1.0
        %v3835 = vsub.f32 %v3579, 1.0
        %v3836 = vsub.f32 %v3580, 1.0
        %v3837 = vsub.f32 %v3581, 1.0
        %v3838 = vsub.f32 %v3582, 1.0
        %v3839 = vsub.f32 %v3583, 1.0
        %v3840 = vsub.f32 %v3584, 1.0
        %v3841 = vsub.f32 %v3585, 1.0
        %v3842 = vsub.f32 %v3586, 1.0
        %v3843 = vsub.f32 %v3587, 1.0
        %v3844 = vsub.f32 %v3588, 1.0
        %v3845 = vsub.f32 %v3589, 1.0
        %v3846 = vsub.f32 %v3590, 1.0
        %v3847 = vsub.f32 %v3591, 1.0
        %v3848 = vsub.f32 %v3592, 1.0
        %v3849 = vsub.f32 %v3593, 1.0
        %v3850 = vsub.f32 %v3594, 1.0
        %v3851 = vsub.f32 %v3595, 1.0
        %v3852 = vsub.f32 %v3596, 1.0
        %v3853 = vsub.f32 %v3597, 1.0
        %v3854 = vsub.f32 %v3598, 1.0
        %v3855 = vsub.f32 %v3599, 1.0
        %v3856 = vsub.f32 %v3600, 1.0
        %v3857 = vsub.f32 %v3601, 1.0
        %v3858 = vsub.f32 %v3602, 1.0
        %v3859 = vsub.f32 %v3603, 1.0
        %v3860 = vsub.f32 %v3604, 1.0
        %v3861 = vsub.f32 %v3605, 1.0
        %v3862 = vsub.f32 %v3606, 1.0
        %v3863 = vsub.f32 %v3607, 1.0
        %v3864 = vsub.f32 %v3608, 1.0
        %v3865 = vsub.f32 %v3609, 1.0
        %v3866 = vsub.f32 %v3610, 1.0
        %v3867 = vsub.f32 %v3611, 1.0
        %v3868 = vsub.f32 %v3612, 1.0
        %v3869 = vsub.f32 %v3613, 1.0
        %v3870 = vsub.f32 %v3614, 1.0
        %v3871 = vsub.f32 %v3615, 1.0
        %v3872 = vsub.f32 %v3616, 1.0
        %v3873 = vsub.f32 %v3617, 1.0
        %v3874 = vsub.f32 %v3618, 1.0
        %v3875 = vsub.f32 %v3619, 1.0
        %v3876 = vsub.f32 %v3620, 1.0
        %v3877 = vmul.f32 %v3621, 0.5
        %v3878 = vmul.f32 %v3622, 0.5
        %v3879 = vmul.f32 %v3623, 0.5
        %v3880 = vmul.f32 %v3624, 0.5
        %v3881 = vmul.f32 %v3625, 0.5
        %v3882 = vmul.f32 %v3626, 0.5
        %v3883 = vmul.f32 %v3627, 0.5
        %v3884 = vmul.f32 %v3628, 0.5
        %v3885 = vmul.f32 %v3629, 0.5
        %v3886 = vmul.f32 %v3630, 0.5
        %v3887 = vmul.f32 %v3631, 0.5
        %v3888 = vmul.f32 %v3632, 0.5
        %v3889 = vmul.f32 %v3633, 0.5
        %v3890 = vmul.f32 %v3634, 0.5
        %v3891 = vmul.f32 %v3635, 0.5
        %v3892 = vmul.f32 %v3636, 0.5
        %v3893 = vmul.f32 %v3637, 0.5
        %v3894 = vmul.f32 %v3638, 0.5
        %v3895 = vmul.f32 %v3639, 0.5
        %v3896 = vmul.f32 %v3640, 0.5
        %v3897 = vmul.f32 %v3641, 0.5
        %v3898 = vmul.f32 %v3642, 0.5
        %v3899 = vmul.f32 %v3643, 0.5
        %v3900 = vmul.f32 %v3644, 0.5
        %v3901 = vmul.f32 %v3645, 0.5
        %v3902 = vmul.f32 %v3646, 0.5
        %v3903 = vmul.f32 %v3647, 0.5
        %v3904 = vmul.f32 %v3648, 0.5
        %v3905 = vmul.f32 %v3649, 0.5
        %v3906 = vmul.f32 %v3650, 0.5
        %v3907 = vmul.f32 %v3651, 0.5
        %v3908 = vmul.f32 %v3652, 0.5
        %v3909 = vmul.f32 %v3653, 0.5
        %v3910 = vmul.f32 %v3654, 0.5
        %v3911 = vmul.f32 %v3655, 0.5
        %v3912 = vmul.f32 %v3656, 0.5
        %v3913 = vmul.f32 %v3657, 0.5
        %v3914 = vmul.f32 %v3658, 0.5
        %v3915 = vmul.f32 %v3659, 0.5
        %v3916 = vmul.f32 %v3660, 0.5
        %v3917 = vmul.f32 %v3661, 0.5
        %v3918 = vmul.f32 %v3662, 0.5
        %v3919 = vmul.f32 %v3663, 0.5
        %v3920 = vmul.f32 %v3664, 0.5
        %v3921 = vmul.f32 %v3665, 0.5
        %v3922 = vmul.f32 %v3666, 0.5
        %v3923 = vmul.f32 %v3667, 0.5
        %v3924 = vmul.f32 %v3668, 0.5
        %v3925 = vmul.f32 %v3669, 0.5
        %v3926 = vmul.f32 %v3670, 0.5
        %v3927 = vmul.f32 %v3671, 0.5
        %v3928 = vmul.f32 %v3672, 0.5
        %v3929 = vmul.f32 %v3673, 0.5
        %v3930 = vmul.f32 %v3674, 0.5
        %v3931 = vmul.f32 %v3675, 0.5
        %v3932 = vmul.f32 %v3676, 0.5
        %v3933 = vmul.f32 %v3677, 0.5
        %v3934 = vmul.f32 %v3678, 0.5
        %v3935 = vmul.f32 %v3679, 0.5
        %v3936 = vmul.f32 %v3680, 0.5
        %v3937 = vmul.f32 %v3681, 0.5
        %v3938 = vmul.f32 %v3682, 0.5
        %v3939 = vmul.f32 %v3683, 0.5
        %v3940 = vmul.f32 %v3684, 0.5
        %v3941 = vmul.f32 %v3685, 0.5
        %v3942 = vmul.f32 %v3686, 0.5
        %v3943 = vmul.f32 %v3687, 0.5
        %v3944 = vmul.f32 %v3688, 0.5
        %v3945 = vmul.f32 %v3689, 0.5
        %v3946 = vmul.f32 %v3690, 0.5
        %v3947 = vmul.f32 %v3691, 0.5
        %v3948 = vmul.f32 %v3692, 0.5
        %v3949 = vmul.f32 %v3693, 0.5
        %v3950 = vmul.f32 %v3694, 0.5
        %v3951 = vmul.f32 %v3695, 0.5
        %v3952 = vmul.f32 %v3696, 0.5
        %v3953 = vmul.f32 %v3697, 0.5
        %v3954 = vmul.f32 %v3698, 0.5
        %v3955 = vmul.f32 %v3699, 0.5
        %v3956 = vmul.f32 %v3700, 0.5
        %v3957 = vmul.f32 %v3701, 0.5
        %v3958 = vmul.f32 %v3702, 0.5
        %v3959 = vmul.f32 %v3703, 0.5
        %v3960 = vmul.f32 %v3704, 0.5
        %v3961 = vmul.f32 %v3705, 0.5
        %v3962 = vmul.f32 %v3706, 0.5
        %v3963 = vmul.f32 %v3707, 0.5
        %v3964 = vmul.f32 %v3708, 0.5
        %v3965 = vmul.f32 %v3709, 0.5
        %v3966 = vmul.f32 %v3710, 0.5
        %v3967 = vmul.f32 %v3711, 0.5
        %v3968 = vmul.f32 %v3712, 0.5
        %v3969 = vmul.f32 %v3713, 0.5
        %v3970 = vmul.f32 %v3714, 0.5
        %v3971 = vmul.f32 %v3715, 0.5
        %v3972 = vmul.f32 %v3716, 0.5
        %v3973 = vmul.f32 %v3717, 0.5
        %v3974 = vmul.f32 %v3718, 0.5
        %v3975 = vmul.f32 %v3719, 0.5
        %v3976 = vmul.f32 %v3720, 0.5
        %v3977 = vmul.f32 %v3721, 0.5
        %v3978 = vmul.f32 %v3722, 0.5
        %v3979 = vmul.f32 %v3723, 0.5
        %v3980 = vmul.f32 %v3724, 0.5
        %v3981 = vmul.f32 %v3725, 0.5
        %v3982 = vmul.f32 %v3726, 0.5
        %v3983 = vmul.f32 %v3727, 0.5
        %v3984 = vmul.f32 %v3728, 0.5
        %v3985 = vmul.f32 %v3729, 0.5
        %v3986 = vmul.f32 %v3730, 0.5
        %v3987 = vmul.f32 %v3731, 0.5
        %v3988 = vmul.f32 %v3732, 0.5
        %v3989 = vmul.f32 %v3733, 0.5
        %v3990 = vmul.f32 %v3734, 0.5
        %v3991 = vmul.f32 %v3735, 0.5
        %v3992 = vmul.f32 %v3736, 0.5
        %v3993 = vmul.f32 %v3737, 0.5
        %v3994 = vmul.f32 %v3738, 0.5
        %v3995 = vmul.f32 %v3739, 0.5
        %v3996 = vmul.f32 %v3740, 0.5
        %v3997 = vmul.f32 %v3741, 0.5
        %v3998 = vmul.f32 %v3742, 0.5
        %v3999 = vmul.f32 %v3743, 0.5
        %v4000 = vmul.f32 %v3744, 0.5
        %v4001 = vmul.f32 %v3745, 0.5
        %v4002 = vmul.f32 %v3746, 0.5
        %v4003 = vmul.f32 %v3747, 0.5
        %v4004 = vmul.f32 %v3748, 0.5
        %v4005 = vmul.f32 %v3749, 0.5
        %v4006 = vmul.f32 %v3750, 0.5
        %v4007 = vmul.f32 %v3751, 0.5
        %v4008 = vmul.f32 %v3752, 0.5
        %v4009 = vmul.f32 %v3753, 0.5
        %v4010 = vmul.f32 %v3754, 0.5
        %v4011 = vmul.f32 %v3755, 0.5
        %v4012 = vmul.f32 %v3756, 0.5
        %v4013 = vmul.f32 %v3757, 0.5
        %v4014 = vmul.f32 %v3758, 0.5
        %v4015 = vmul.f32 %v3759, 0.5
        %v4016 = vmul.f32 %v3760, 0.5
        %v4017 = vmul.f32 %v3761, 0.5
        %v4018 = vmul.f32 %v3762, 0.5
        %v4019 = vmul.f32 %v3763, 0.5
        %v4020 = vmul.f32 %v3764, 0.5
        %v4021 = vmul.f32 %v3765, 0.5
        %v4022 = vmul.f32 %v3766, 0.5
        %v4023 = vmul.f32 %v3767, 0.5
        %v4024 = vmul.f32 %v3768, 0.5
        %v4025 = vmul.f32 %v3769, 0.5
        %v4026 = vmul.f32 %v3770, 0.5
        %v4027 = vmul.f32 %v3771, 0.5
        %v4028 = vmul.f32 %v3772, 0.5
        %v4029 = vmul.f32 %v3773, 0.5
        %v4030 = vmul.f32 %v3774, 0.5
        %v4031 = vmul.f32 %v3775, 0.5
        %v4032 = vmul.f32 %v3776, 0.5
        %v4033 = vmul.f32 %v3777, 0.5
        %v4034 = vmul.f32 %v3778, 0.5
        %v4035 = vmul.f32 %v3779, 0.5
        %v4036 = vmul.f32 %v3780, 0.5
        %v4037 = vmul.f32 %v3781, 0.5
        %v4038 = vmul.f32 %v3782, 0.5
        %v4039 = vmul.f32 %v3783, 0.5
        %v4040 = vmul.f32 %v3784, 0.5
        %v4041 = vmul.f32 %v3785, 0.5
        %v4042 = vmul.f32 %v3786, 0.5
        %v4043 = vmul.f32 %v3787, 0.5
        %v4044 = vmul.f32 %v3788, 0.5
        %v4045 = vmul.f32 %v3789, 0.5
        %v4046 = vmul.f32 %v3790, 0.5
        %v4047 = vmul.f32 %v3791, 0.5
        %v4048 = vmul.f32 %v3792, 0.5
        %v4049 = vmul.f32 %v3793, 0.5
        %v4050 = vmul.f32 %v3794, 0.5
        %v4051 = vmul.f32 %v3795, 0.5
        %v4052 = vmul.f32 %v3796, 0.5
        %v4053 = vmul.f32 %v3797, 0.5
        %v4054 = vmul.f32 %v3798, 0.5
        %v4055 = vmul.f32 %v3799, 0.5
        %v4056 = vmul.f32 %v3800, 0.5
        %v4057 = vmul.f32 %v3801, 0.5
        %v4058 = vmul.f32 %v3802, 0.5
        %v4059 = vmul.f32 %v3803, 0.5
        %v4060 = vmul.f32 %v3804, 0.5
        %v4061 = vmul.f32 %v3805, 0.5
        %v4062 = vmul.f32 %v3806, 0.5
        %v4063 = vmul.f32 %v3807, 0.5
        %v4064 = vmul.f32 %v3808, 0.5
        %v4065 = vmul.f32 %v3809, 0.5
        %v4066 = vmul.f32 %v3810, 0.5
        %v4067 = vmul.f32 %v3811, 0.5
        %v4068 = vmul.f32 %v3812, 0.5
        %v4069 = vmul.f32 %v3813, 0.5
        %v4070 = vmul.f32 %v3814, 0.5
        %v4071 = vmul.f32 %v3815, 0.5
        %v4072 = vmul.f32 %v3816, 0.5
        %v4073 = vmul.f32 %v3817, 0.5
        %v4074 = vmul.f32 %v3818, 0.5
        %v4075 = vmul.f32 %v3819, 0.5
        %v4076 = vmul.f32 %v3820, 0.5
        %v4077 = vmul.f32 %v3821, 0.5
        %v4078 = vmul.f32 %v3822, 0.5
        %v4079 = vmul.f32 %v3823, 0.5
        %v4080 = vmul.f32 %v3824, 0.5
        %v4081 = vmul.f32 %v3825, 0.5
        %v4082 = vmul.f32 %v3826, 0.5
        %v4083 = vmul.f32 %v3827, 0.5
        %v4084 = vmul.f32 %v3828, 0.5
        %v4085 = vmul.f32 %v3829, 0.5
        %v4086 = vmul.f32 %v3830, 0.5
        %v4087 = vmul.f32 %v3831, 0.5
        %v4088 = vmul.f32 %v3832, 0.5
        %v4089 = vmul.f32 %v3833, 0.5
        %v4090 = vmul.f32 %v3834, 0.5
        %v4091 = vmul.f32 %v3835, 0.5
        %v4092 = vmul.f32 %v3836, 0.5
        %v4093 = vmul.f32 %v3837, 0.5
        %v4094 = vmul.f32 %v3838, 0.5
        %v4095 = vmul.f32 %v3839, 0.5
        %v4096 = vmul.f32 %v3840, 0.5
        %v4097 = vmul.f32 %v3841, 0.5
        %v4098 = vmul.f32 %v3842, 0.5
        %v4099 = vmul.f32 %v3843, 0.5
        %v4100 = vmul.f32 %v3844, 0.5
        %v4101 = vmul.f32 %v3845, 0.5
        %v4102 = vmul.f32 %v3846, 0.5
        %v4103 = vmul.f32 %v3847, 0.5
        %v4104 = vmul.f32 %v3848, 0.5
        %v4105 = vmul.f32 %v3849, 0.5
        %v4106 = vmul.f32 %v3850, 0.5
        %v4107 = vmul.f32 %v3851, 0.5
        %v4108 = vmul.f32 %v3852, 0.5
        %v4109 = vmul.f32 %v3853, 0.5
        %v4110 = vmul.f32 %v3854, 0.5
        %v4111 = vmul.f32 %v3855, 0.5
        %v4112 = vmul.f32 %v3856, 0.5
        %v4113 = vmul.f32 %v3857, 0.5
        %v4114 = vmul.f32 %v3858, 0.5
        %v4115 = vmul.f32 %v3859, 0.5
        %v4116 = vmul.f32 %v3860, 0.5
        %v4117 = vmul.f32 %v3861, 0.5
        %v4118 = vmul.f32 %v3862, 0.5
        %v4119 = vmul.f32 %v3863, 0.5
        %v4120 = vmul.f32 %v3864, 0.5
        %v4121 = vmul.f32 %v3865, 0.5
        %v4122 = vmul.f32 %v3866, 0.5
        %v4123 = vmul.f32 %v3867, 0.5
        %v4124 = vmul.f32 %v3868, 0.5
        %v4125 = vmul.f32 %v3869, 0.5
        %v4126 = vmul.f32 %v3870, 0.5
        %v4127 = vmul.f32 %v3871, 0.5
        %v4128 = vmul.f32 %v3872, 0.5
        %v4129 = vmul.f32 %v3873, 0.5
        %v4130 = vmul.f32 %v3874, 0.5
        %v4131 = vmul.f32 %v3875, 0.5
        %v4132 = vmul.f32 %v3876, 0.5
        %v4133 = vld [vmem:[#allocation2] sm:$0xff]
        %v4134 = vadd.f32 %v3877, %v3878
        %v4135 = vadd.f32 %v4134, %v3879
        %v4136 = vadd.f32 %v4135, %v3880
        %v4137 = vadd.f32 %v4136, %v3881
        %v4138 = vadd.f32 %v4137, %v3882
        %v4139 = vadd.f32 %v4138, %v3883
        %v4140 = vadd.f32 %v4139, %v3884
        %v4141 = vadd.f32 %v4140, %v3885
        %v4142 = vadd.f32 %v4141, %v3886
        %v4143 = vadd.f32 %v4142, %v3887
        %v4144 = vadd.f32 %v4143, %v3888
        %v4145 = vadd.f32 %v4144, %v3889
        %v4146 = vadd.f32 %v4145, %v3890
        %v4147 = vadd.f32 %v4146, %v3891
        %v4148 = vadd.f32 %v4147, %v3892
        %v4149 = vadd.f32 %v4148, %v3893
        %v4150 = vadd.f32 %v4149, %v3894
        %v4151 = vadd.f32 %v4150, %v3895
        %v4152 = vadd.f32 %v4151, %v3896
        %v4153 = vadd.f32 %v4152, %v3897
        %v4154 = vadd.f32 %v4153, %v3898
        %v4155 = vadd.f32 %v4154, %v3899
        %v4156 = vadd.f32 %v4155, %v3900
        %v4157 = vadd.f32 %v4156, %v3901
        %v4158 = vadd.f32 %v4157, %v3902
        %v4159 = vadd.f32 %v4158, %v3903
        %v4160 = vadd.f32 %v4159, %v3904
        %v4161 = vadd.f32 %v4160, %v3905
        %v4162 = vadd.f32 %v4161, %v3906
        %v4163 = vadd.f32 %v4162, %v3907
        %v4164 = vadd.f32 %v4163, %v3908
        %v4165 = vadd.f32 %v4164, %v3909
        %v4166 = vadd.f32 %v4165, %v3910
        %v4167 = vadd.f32 %v4166, %v3911
        %v4168 = vadd.f32 %v4167, %v3912
        %v4169 = vadd.f32 %v4168, %v3913
        %v4170 = vadd.f32 %v4169, %v3914
        %v4171 = vadd.f32 %v4170, %v3915
        %v4172 = vadd.f32 %v4171, %v3916
        %v4173 = vadd.f32 %v4172, %v3917
        %v4174 = vadd.f32 %v4173, %v3918
        %v4175 = vadd.f32 %v4174, %v3919
        %v4176 = vadd.f32 %v4175, %v3920
        %v4177 = vadd.f32 %v4176, %v3921
        %v4178 = vadd.f32 %v4177, %v3922
        %v4179 = vadd.f32 %v4178, %v3923
        %v4180 = vadd.f32 %v4179, %v3924
        %v4181 = vadd.f32 %v4180, %v3925
        %v4182 = vadd.f32 %v4181, %v3926
        %v4183 = vadd.f32 %v4182, %v3927
        %v4184 = vadd.f32 %v4183, %v3928
        %v4185 = vadd.f32 %v4184, %v3929
        %v4186 = vadd.f32 %v4185, %v3930
        %v4187 = vadd.f32 %v4186, %v3931
        %v4188 = vadd.f32 %v4187, %v3932
        %v4189 = vadd.f32 %v4188, %v3933
        %v4190 = vadd.f32 %v4189, %v3934
        %v4191 = vadd.f32 %v4190, %v3935
        %v4192 = vadd.f32 %v4191, %v3936
        %v4193 = vadd.f32 %v4192, %v3937
        %v4194 = vadd.f32 %v4193, %v3938
        %v4195 = vadd.f32 %v4194, %v3939
        %v4196 = vadd.f32 %v4195, %v3940
        %v4197 = vadd.f32 %v4196, %v3941
        %v4198 = vadd.f32 %v4197, %v3942
        %v4199 = vadd.f32 %v4198, %v3943
        %v4200 = vadd.f32 %v4199, %v3944
        %v4201 = vadd.f32 %v4200, %v3945
        %v4202 = vadd.f32 %v4201, %v3946
        %v4203 = vadd.f32 %v4202, %v3947
        %v4204 = vadd.f32 %v4203, %v3948
        %v4205 = vadd.f32 %v4204, %v3949
        %v4206 = vadd.f32 %v4205, %v3950
        %v4207 = vadd.f32 %v4206, %v3951
        %v4208 = vadd.f32 %v4207, %v3952
        %v4209 = vadd.f32 %v4208, %v3953
        %v4210 = vadd.f32 %v4209, %v3954
        %v4211 = vadd.f32 %v4210, %v3955
        %v4212 = vadd.f32 %v4211, %v3956
        %v4213 = vadd.f32 %v4212, %v3957
        %v4214 = vadd.f32 %v4213, %v3958
        %v4215 = vadd.f32 %v4214, %v3959
        %v4216 = vadd.f32 %v4215, %v3960
        %v4217 = vadd.f32 %v4216, %v3961
        %v4218 = vadd.f32 %v4217, %v3962
        %v4219 = vadd.f32 %v4218, %v3963
        %v4220 = vadd.f32 %v4219, %v3964
        %v4221 = vadd.f32 %v4220, %v3965
        %v4222 = vadd.f32 %v4221, %v3966
        %v4223 = vadd.f32 %v4222, %v3967
        %v4224 = vadd.f32 %v4223, %v3968
        %v4225 = vadd.f32 %v4224, %v3969
        %v4226 = vadd.f32 %v4225, %v3970
        %v4227 = vadd.f32 %v4226, %v3971
        %v4228 = vadd.f32 %v4227, %v3972
        %v4229 = vadd.f32 %v4228, %v3973
        %v4230 = vadd.f32 %v4229, %v3974
        %v4231 = vadd.f32 %v4230, %v3975
        %v4232 = vadd.f32 %v4231, %v3976
        %v4233 = vadd.f32 %v4232, %v3977
        %v4234 = vadd.f32 %v4233, %v3978
        %v4235 = vadd.f32 %v4234, %v3979
        %v4236 = vadd.f32 %v4235, %v3980
        %v4237 = vadd.f32 %v4236, %v3981
        %v4238 = vadd.f32 %v4237, %v3982
        %v4239 = vadd.f32 %v4238, %v3983
        %v4240 = vadd.f32 %v4239, %v3984
        %v4241 = vadd.f32 %v4240, %v3985
        %v4242 = vadd.f32 %v4241, %v3986
        %v4243 = vadd.f32 %v4242, %v3987
        %v4244 = vadd.f32 %v4243, %v3988
        %v4245 = vadd.f32 %v4244, %v3989
        %v4246 = vadd.f32 %v4245, %v3990
        %v4247 = vadd.f32 %v4246, %v3991
        %v4248 = vadd.f32 %v4247, %v3992
        %v4249 = vadd.f32 %v4248, %v3993
        %v4250 = vadd.f32 %v4249, %v3994
        %v4251 = vadd.f32 %v4250, %v3995
        %v4252 = vadd.f32 %v4251, %v3996
        %v4253 = vadd.f32 %v4252, %v3997
        %v4254 = vadd.f32 %v4253, %v3998
        %v4255 = vadd.f32 %v4254, %v3999
        %v4256 = vadd.f32 %v4255, %v4000
        %v4257 = vadd.f32 %v4256, %v4001
        %v4258 = vadd.f32 %v4257, %v4002
        %v4259 = vadd.f32 %v4258, %v4003
        %v4260 = vadd.f32 %v4259, %v4004
        %v4261 = vadd.f32 %v4260, %v4005
        %v4262 = vadd.f32 %v4261, %v4006
        %v4263 = vadd.f32 %v4262, %v4007
        %v4264 = vadd.f32 %v4263, %v4008
        %v4265 = vadd.f32 %v4264, %v4009
        %v4266 = vadd.f32 %v4265, %v4010
        %v4267 = vadd.f32 %v4266, %v4011
        %v4268 = vadd.f32 %v4267, %v4012
        %v4269 = vadd.f32 %v4268, %v4013
        %v4270 = vadd.f32 %v4269, %v4014
        %v4271 = vadd.f32 %v4270, %v4015
        %v4272 = vadd.f32 %v4271, %v4016
        %v4273 = vadd.f32 %v4272, %v4017
        %v4274 = vadd.f32 %v4273, %v4018
        %v4275 = vadd.f32 %v4274, %v4019
        %v4276 = vadd.f32 %v4275, %v4020
        %v4277 = vadd.f32 %v4276, %v4021
        %v4278 = vadd.f32 %v4277, %v4022
        %v4279 = vadd.f32 %v4278, %v4023
        %v4280 = vadd.f32 %v4279, %v4024
        %v4281 = vadd.f32 %v4280, %v4025
        %v4282 = vadd.f32 %v4281, %v4026
        %v4283 = vadd.f32 %v4282, %v4027
        %v4284 = vadd.f32 %v4283, %v4028
        %v4285 = vadd.f32 %v4284, %v4029
        %v4286 = vadd.f32 %v4285, %v4030
        %v4287 = vadd.f32 %v4286, %v4031
        %v4288 = vadd.f32 %v4287, %v4032
        %v4289 = vadd.f32 %v4288, %v4033
        %v4290 = vadd.f32 %v4289, %v4034
        %v4291 = vadd.f32 %v4290, %v4035
        %v4292 = vadd.f32 %v4291, %v4036
        %v4293 = vadd.f32 %v4292, %v4037
        %v4294 = vadd.f32 %v4293, %v4038
        %v4295 = vadd.f32 %v4294, %v4039
        %v4296 = vadd.f32 %v4295, %v4040
        %v4297 = vadd.f32 %v4296, %v4041
        %v4298 = vadd.f32 %v4297, %v4042
        %v4299 = vadd.f32 %v4298, %v4043
        %v4300 = vadd.f32 %v4299, %v4044
        %v4301 = vadd.f32 %v4300, %v4045
        %v4302 = vadd.f32 %v4301, %v4046
        %v4303 = vadd.f32 %v4302, %v4047
        %v4304 = vadd.f32 %v4303, %v4048
        %v4305 = vadd.f32 %v4304, %v4049
        %v4306 = vadd.f32 %v4305, %v4050
        %v4307 = vadd.f32 %v4306, %v4051
        %v4308 = vadd.f32 %v4307, %v4052
        %v4309 = vadd.f32 %v4308, %v4053
        %v4310 = vadd.f32 %v4309, %v4054
        %v4311 = vadd.f32 %v4310, %v4055
        %v4312 = vadd.f32 %v4311, %v4056
        %v4313 = vadd.f32 %v4312, %v4057
        %v4314 = vadd.f32 %v4313, %v4058
        %v4315 = vadd.f32 %v4314, %v4059
        %v4316 = vadd.f32 %v4315, %v4060
        %v4317 = vadd.f32 %v4316, %v4061
        %v4318 = vadd.f32 %v4317, %v4062
        %v4319 = vadd.f32 %v4318, %v4063
        %v4320 = vadd.f32 %v4319, %v4064
        %v4321 = vadd.f32 %v4320, %v4065
        %v4322 = vadd.f32 %v4321, %v4066
        %v4323 = vadd.f32 %v4322, %v4067
        %v4324 = vadd.f32 %v4323, %v4068
        %v4325 = vadd.f32 %v4324, %v4069
        %v4326 = vadd.f32 %v4325, %v4070
        %v4327 = vadd.f32 %v4326, %v4071
        %v4328 = vadd.f32 %v4327, %v4072
        %v4329 = vadd.f32 %v4328, %v4073
        %v4330 = vadd.f32 %v4329, %v4074
        %v4331 = vadd.f32 %v4330, %v4075
        %v4332 = vadd.f32 %v4331, %v4076
        %v4333 = vadd.f32 %v4332, %v4077
        %v4334 = vadd.f32 %v4333, %v4078
        %v4335 = vadd.f32 %v4334, %v4079
        %v4336 = vadd.f32 %v4335, %v4080
        %v4337 = vadd.f32 %v4336, %v4081
        %v4338 = vadd.f32 %v4337, %v4082
        %v4339 = vadd.f32 %v4338, %v4083
        %v4340 = vadd.f32 %v4339, %v4084
        %v4341 = vadd.f32 %v4340, %v4085
        %v4342 = vadd.f32 %v4341, %v4086
        %v4343 = vadd.f32 %v4342, %v4087
        %v4344 = vadd.f32 %v4343, %v4088
        %v4345 = vadd.f32 %v4344, %v4089
        %v4346 = vadd.f32 %v4345, %v4090
        %v4347 = vadd.f32 %v4346, %v4091
        %v4348 = vadd.f32 %v4347, %v4092
        %v4349 = vadd.f32 %v4348, %v4093
        %v4350 = vadd.f32 %v4349, %v4094
        %v4351 = vadd.f32 %v4350, %v4095
        %v4352 = vadd.f32 %v4351, %v4096
        %v4353 = vadd.f32 %v4352, %v4097
        %v4354 = vadd.f32 %v4353, %v4098
        %v4355 = vadd.f32 %v4354, %v4099
        %v4356 = vadd.f32 %v4355, %v4100
        %v4357 = vadd.f32 %v4356, %v4101
        %v4358 = vadd.f32 %v4357, %v4102
        %v4359 = vadd.f32 %v4358, %v4103
        %v4360 = vadd.f32 %v4359, %v4104
        %v4361 = vadd.f32 %v4360, %v4105
        %v4362 = vadd.f32 %v4361, %v4106
        %v4363 = vadd.f32 %v4362, %v4107
        %v4364 = vadd.f32 %v4363, %v4108
        %v4365 = vadd.f32 %v4364, %v4109
        %v4366 = vadd.f32 %v4365, %v4110
        %v4367 = vadd.f32 %v4366, %v4111
        %v4368 = vadd.f32 %v4367, %v4112
        %v4369 = vadd.f32 %v4368, %v4113
        %v4370 = vadd.f32 %v4369, %v4114
        %v4371 = vadd.f32 %v4370, %v4115
        %v4372 = vadd.f32 %v4371, %v4116
        %v4373 = vadd.f32 %v4372, %v4117
        %v4374 = vadd.f32 %v4373, %v4118
        %v4375 = vadd.f32 %v4374, %v4119
        %v4376 = vadd.f32 %v4375, %v4120
        %v4377 = vadd.f32 %v4376, %v4121
        %v4378 = vadd.f32 %v4377, %v4122
        %v4379 = vadd.f32 %v4378, %v4123
        %v4380 = vadd.f32 %v4379, %v4124
        %v4381 = vadd.f32 %v4380, %v4125
        %v4382 = vadd.f32 %v4381, %v4126
        %v4383 = vadd.f32 %v4382, %v4127
        %v4384 = vadd.f32 %v4383, %v4128
        %v4385 = vadd.f32 %v4384, %v4129
        %v4386 = vadd.f32 %v4385, %v4130
        %v4387 = vadd.f32 %v4386, %v4131
        %v4388 = vadd.f32 %v4387, %v4132
        %v4389 = vadd.f32 %v4133, %v4388
        %4390 = vst [vmem:[#allocation2] sm:$0xff] %v4389
        // Predicated region
        $region45: #{_loss_core.1} parent=39 // pred_check
          %p4391 = pneg %p1313
        $region46: #{_loss_core.1} parent=39 // pred_check_branch
          %4393 = sbr.rel (%p4391) target = $region48
        $region47: #{_loss_core.1} parent=39 // pred_region
          %v4394 = vld [vmem:[#allocation2] sm:$0xff]
          %4395 = vadd.xlane.f32.xlu0 %v4394
          %v4396 = vpop.xlane.xlu0 %4395
          %v4397 = vrot.slane %v4396, 4
          %v4398 = vadd.f32 %v4396, %v4397
          %v4399 = vrot.slane %v4398, 2
          %v4400 = vadd.f32 %v4398, %v4399
          %v4401 = vrot.slane %v4400, 1
          %v4402 = vadd.f32 %v4400, %v4401
          %s4403 = vtos %v4402
          %s4404 = scalar_lea.smem [#allocation3], 1
          %4405 = sst [smem:[%s4404]] %s4403
        $region48: #{_loss_core.1} parent=39 // pred_fallthru
          _
        // Predicated region
        $region49: #{_loss_core.1} parent=39 // pred_check
          %p4406 = pneg %p145
        $region50: #{_loss_core.1} parent=39 // pred_check_branch
          %4408 = sbr.rel (%p4406) target = $region52
        $region51: #{_loss_core.1} parent=39 // pred_region
          %s4410 = ssub.s32 16, 16
          %4411 = vsyncadd [#allocation4], %s4410
          %s4413 = sshll.u32 %s5, 4
          %s4414 = int_to_ptr.vmem [resolvable:$true] %s4413
          %4416 = dma.smem_to_vmem [#allocation3], 16, %s4414, [#allocation4]
        $region52: #{_loss_core.1} parent=39 // pred_fallthru
          _
        // Predicated region
        $region53: #{_loss_core.1} parent=39 // pred_check
          %p4417 = pneg %p145
        $region54: #{_loss_core.1} parent=39 // pred_check_branch
          %4419 = sbr.rel (%p4417) target = $region56
        $region55: #{_loss_core.1} parent=39 // pred_region
          %4420 = dma.done [#allocation4], 16
        $region56: #{_loss_core.1} parent=39 // pred_fallthru
          _
        %4421 = sfence
      $region40: #{_loss_core.1} parent=5 // pred_fallthru
        _
      %p4422 = scmp.le.s32.totalorder 2, %s12
      // Predicated region
      $region57: #{_loss_core.1} parent=5 // pred_check
        %p4423 = pneg %p4422
      $region58: #{_loss_core.1} parent=5 // pred_check_branch
        %4425 = sbr.rel (%p4423) target = $region60
      $region59: #{_loss_core.1} parent=5 // pred_region
        %s4426 = ssub.s32 %s12, 2
      $region60: #{_loss_core.1} parent=5 // pred_fallthru
        _
    $region6: #{_loss_core.1} parent=1 // loop_footer
      %s16 = sadd.s32 1, %s12
    $region7: #{_loss_core.1} parent=1 // loop_footer_branch
      %11 = sbr.rel target = $region3
    $region8: #{_loss_core.1} parent=1 // loop_exit
      _
    %4427 = vsyncpa [#allocation4], 1
    %s4428 = scalar_lea.sflag [#allocation4], 1
    %4429 = vsyncpa %s4428, 1

</llo_original>
